<compile_context>
chip_gen: v5e
topology: v5e:2x2
jax: 0.10.0
libtpu: 0.0.40
codegen_flags: <defaults>
</compile_context>

<pallas_src>
import numpy as np

import jax
import jax.numpy as jnp
from jax.experimental import pallas as pl
from jax.experimental.pallas import tpu as pltpu

F32 = jnp.float32
BF16 = jnp.bfloat16

# ----------------------------- configuration (small) -----------------------------
B = 2            # batch
IMG = 16         # input image H = W
C_IN = 3         # RGB
C0 = 16          # stem / MBConv block channels      (real: EfficientNet-b3 widths)
EXPAND = 2       # MBConv expansion ratio            (real: 6)
NUM_BLOCKS = 2   # MBConv blocks, each followed by FiLM (real: 26 blocks)
C_HEAD = 48      # conv_head channels                (real: 1536)
D_MODEL = 32     # Linear_1b1_conv output / token dim (real: 512)
CTX_IN = 16      # raw context feature size (stand-in for sentence embedding)
CTX_DIM = 8      # USEncoder hidden size
S_TOKENS = 8     # token_learner_layers
DEPTH = 2        # transformer decoder depth         (real: 8)
HEADS = 2        # attention heads                   (real: 8)
DIM_HEAD = 16    # per-head dim                      (real: 64)
MLP_DIM = 64     # decoder FFN dim                   (real: 512)
NUM_ACTIONS = 3  # (real: 11)
VOCAB = 16       # (real: 256)
BN_EPS = 1e-3
LN_EPS = 1e-5
OUT_PAD = 128    # lane-padded width of the action head output


# =============================== in-kernel helpers ===============================

def _mm(a, b):
    """MXU matmul: bf16 operands, f32 accumulation (fast on v5e/v6e/v7x MXUs)."""
    return jnp.dot(a.astype(BF16), b.astype(BF16), preferred_element_type=jnp.float32)


def _ln(x, g, b):
    """LayerNorm over the last (lane) dim, f32."""
    mu = jnp.mean(x, axis=-1, keepdims=True)
    xc = x - mu
    var = jnp.mean(xc * xc, axis=-1, keepdims=True)
    return xc * jax.lax.rsqrt(var + LN_EPS) * g + b


# =============================== Pallas kernels ===============================

def _stem_ctx_kernel(p_ref, cr_ref, sw_ref, sb_ref, uw_ref, ub_ref, h_ref, c_ref):
    """Fused: swish(bn0(conv_stem(x)))  (3x3 s2 conv as im2col GEMM, BN folded)
    and the USEncoder projection of the context embedding."""
    h = _mm(p_ref[...], sw_ref[...]) + sb_ref[...]
    h_ref[...] = (h * jax.nn.sigmoid(h)).astype(h_ref.dtype)
    # TODO(synk): real USEncoder is a pretrained sentence encoder over strings;
    # here a pre-embedded vector goes through the encoder projection (+gelu).
    c = _mm(cr_ref[...], uw_ref[...]) + ub_ref[...]
    c_ref[...] = jax.nn.gelu(c, approximate=True).astype(c_ref.dtype)


def _mbconv_film_kernel(x_ref, ctx_ref, s_ref, ew_ref, eb_ref, dww_ref, dwb_ref,
                        pw_ref, pb_ref, fgw_ref, fgb_ref, fbw_ref, fbb_ref, o_ref):
    """One MBConv block + FiLM, fully VMEM-resident, one image per grid step.
    x:(P,C0) rows = H*W spatial positions; s:(9,P,P) constant 0/1 spatial-shift
    matrices so the depthwise 3x3 'same' conv is 9 MXU matmuls (no im2col)."""
    x = x_ref[...]
    # expand 1x1 conv + folded BN + swish
    h = _mm(x, ew_ref[...]) + eb_ref[...]
    h = h * jax.nn.sigmoid(h)
    # depthwise 3x3 'same' conv + folded BN + swish
    acc = _mm(s_ref[0], h) * dww_ref[0]
    for k in range(1, 9):
        acc = acc + _mm(s_ref[k], h) * dww_ref[k]
    h = acc + dwb_ref[...]
    h = h * jax.nn.sigmoid(h)
    # TODO(synk): EfficientNet's squeeze-and-excite sub-block omitted in this synthetic backbone.
    # project 1x1 conv + folded BN, identity skip (drop_connect disabled, dropout=0)
    y = x + _mm(h, pw_ref[...]) + pb_ref[...]
    # FiLM conditioning:  y * (1 + gamma(ctx)) + beta(ctx)
    c = ctx_ref[0]                                     # (1, CTX_DIM)
    gamma = _mm(c, fgw_ref[...]) + fgb_ref[...]        # (1, C0)
    beta = _mm(c, fbw_ref[...]) + fbb_ref[...]         # (1, C0)
    o_ref[...] = (y * (1.0 + gamma) + beta).astype(o_ref.dtype)


def _head_tl_kernel(x_ref, hw_ref, hb_ref, lw_ref, lb_ref, tw_ref, o_ref):
    """Fused conv_head(+BN,swish) -> Linear_1b1_conv -> TokenLearner, one image
    per grid step.  (x.permute(0,2,3,1) is a no-op: we already carry NHWC rows.)"""
    h = _mm(x_ref[...], hw_ref[...]) + hb_ref[...]     # conv_head 1x1 + folded BN
    h = h * jax.nn.sigmoid(h)                          # swish
    z = _mm(h, lw_ref[...]) + lb_ref[...]              # Linear_1b1_conv -> (P, D_MODEL)
    logits = _mm(z, tw_ref[...])                       # (P, S_TOKENS) attention maps
    logits = logits - jnp.max(logits, axis=0, keepdims=True)   # softmax over space
    e = jnp.exp(logits)
    attn = e * pl.reciprocal(jnp.sum(e, axis=0, keepdims=True), approx=True)
    # tokens[s, d] = sum_p attn[p, s] * z[p, d]   (contract spatial axis, no .T)
    tok = jax.lax.dot_general(attn.astype(BF16), z.astype(BF16),
                              dimension_numbers=(((0,), (0,)), ((), ())),
                              preferred_element_type=jnp.float32)
    o_ref[0] = tok.astype(o_ref.dtype)


def _tlayer_kernel(t_ref, g1_ref, b1_ref, wq_ref, bq_ref, wk_ref, bk_ref, wv_ref, bv_ref,
                   wo_ref, bo_ref, g2_ref, b2_ref, w1_ref, c1_ref, w2_ref, c2_ref, o_ref):
    """One fused pre-LN transformer decoder layer, one sequence per grid step.
    Heads are processed with stacked per-head weights (no lane slicing / concat);
    each head's output is folded straight into the output projection."""
    x = t_ref[0].astype(jnp.float32)                   # (S, D)
    # --- self-attention ---
    # TODO(synk): real Transformers_Decoder applies an attention mask across
    # frames/token groups; omitted in this single-frame toy setup.
    h = _ln(x, g1_ref[...], b1_ref[...])
    scale = DIM_HEAD ** -0.5
    att = jnp.zeros_like(x)
    for hh in range(HEADS):
        q = _mm(h, wq_ref[hh]) + bq_ref[hh]
        k = _mm(h, wk_ref[hh]) + bk_ref[hh]
        v = _mm(h, wv_ref[hh]) + bv_ref[hh]
        s = jax.lax.dot_general(q.astype(BF16), k.astype(BF16),
                                dimension_numbers=(((1,), (1,)), ((), ())),
                                preferred_element_type=jnp.float32) * scale
        s = s - jnp.max(s, axis=-1, keepdims=True)
        e = jnp.exp(s)
        p = e * pl.reciprocal(jnp.sum(e, axis=-1, keepdims=True), approx=True)
        att = att + _mm(_mm(p, v), wo_ref[hh])
    x = x + att + bo_ref[...]
    # --- FFN ---
    h = _ln(x, g2_ref[...], b2_ref[...])
    # TODO(synk): PyTorch nn.GELU defaults to exact erf; tanh approximation used here.
    h = jax.nn.gelu(_mm(h, w1_ref[...]) + c1_ref[...], approximate=True)
    x = x + _mm(h, w2_ref[...]) + c2_ref[...]
    o_ref[0] = x.astype(o_ref.dtype)


def _final_kernel(t_ref, g_ref, b_ref, w_ref, wb_ref, o_ref):
    """Final LayerNorm + action head (weights pre-padded to 128 lanes)."""
    h = _ln(t_ref[...], g_ref[...], b_ref[...])
    o_ref[...] = (_mm(h, w_ref[...]) + wb_ref[...]).astype(o_ref.dtype)


# =============================== pallas_call wrappers ===============================

def _const_spec(a):
    """Full-array block that is the same for every grid step (weights/constants)."""
    zeros = (0,) * a.ndim
    return pl.BlockSpec(a.shape, lambda *_: zeros)


_PARALLEL = pltpu.CompilerParams(dimension_semantics=("parallel",))


def fused_stem_ctx(pat, ctx_raw, prep):
    M = pat.shape[0]
    Bb = ctx_raw.shape[0]
    args = (pat, ctx_raw, prep["stem_w"], prep["stem_b"], prep["us_w"], prep["us_b"])
    return pl.pallas_call(
        _stem_ctx_kernel,
        out_shape=(jax.ShapeDtypeStruct((M, C0), F32),
                   jax.ShapeDtypeStruct((Bb, CTX_DIM), F32)),
        grid=(1,),
        in_specs=[_const_spec(a) for a in args],
        out_specs=(pl.BlockSpec((M, C0), lambda i: (0, 0)),
                   pl.BlockSpec((Bb, CTX_DIM), lambda i: (0, 0))),
    )(*args)


def fused_mbconv_film(h, ctx3, shift, bp, Bb, P):
    C = h.shape[1]
    weights = (bp["exp_w"], bp["exp_b"], bp["dw_w"], bp["dw_b"],
               bp["proj_w"], bp["proj_b"],
               bp["film_wg"], bp["film_bg"], bp["film_wb"], bp["film_bb"])
    return pl.pallas_call(
        _mbconv_film_kernel,
        out_shape=jax.ShapeDtypeStruct((Bb * P, C), F32),
        grid=(Bb,),
        in_specs=[pl.BlockSpec((P, C), lambda b: (b, 0)),
                  pl.BlockSpec((1, 1, CTX_DIM), lambda b: (b, 0, 0)),
                  _const_spec(shift)] + [_const_spec(a) for a in weights],
        out_specs=pl.BlockSpec((P, C), lambda b: (b, 0)),
        compiler_params=_PARALLEL,
    )(h, ctx3, shift, *weights)


def fused_head_tokenlearner(h, prep, Bb, P):
    C = h.shape[1]
    weights = (prep["head_w"], prep["head_b"], prep["l1b1_w"], prep["l1b1_b"], prep["tl_w"])
    return pl.pallas_call(
        _head_tl_kernel,
        out_shape=jax.ShapeDtypeStruct((Bb, S_TOKENS, D_MODEL), F32),
        grid=(Bb,),
        in_specs=[pl.BlockSpec((P, C), lambda b: (b, 0))] + [_const_spec(a) for a in weights],
        out_specs=pl.BlockSpec((1, S_TOKENS, D_MODEL), lambda b: (b, 0, 0)),
        compiler_params=_PARALLEL,
    )(h, *weights)


def fused_transformer_layer(t, lp, Bb):
    weights = (lp["ln1_g"], lp["ln1_b"],
               lp["w_q"], lp["b_q"], lp["w_k"], lp["b_k"], lp["w_v"], lp["b_v"],
               lp["w_o"], lp["b_o"], lp["ln2_g"], lp["ln2_b"],
               lp["w_ff1"], lp["b_ff1"], lp["w_ff2"], lp["b_ff2"])
    blk = pl.BlockSpec((1, S_TOKENS, D_MODEL), lambda b: (b, 0, 0))
    return pl.pallas_call(
        _tlayer_kernel,
        out_shape=jax.ShapeDtypeStruct((Bb, S_TOKENS, D_MODEL), F32),
        grid=(Bb,),
        in_specs=[blk] + [_const_spec(a) for a in weights],
        out_specs=blk,
        compiler_params=_PARALLEL,
    )(t, *weights)


def fused_final(t_flat, prep):
    M = t_flat.shape[0]
    args = (t_flat, prep["lnf_g"], prep["lnf_b"], prep["out_w"], prep["out_b"])
    return pl.pallas_call(
        _final_kernel,
        out_shape=jax.ShapeDtypeStruct((M, OUT_PAD), F32),
        grid=(1,),
        in_specs=[_const_spec(a) for a in args],
        out_specs=pl.BlockSpec((M, OUT_PAD), lambda i: (0, 0)),
    )(*args)


# ============================== one-time preprocessing ==============================

def fold_bn(w, bn):
    """Fold inference-mode BatchNorm into a (K,N) conv/matmul weight."""
    scale = bn["g"] * jax.lax.rsqrt(bn["var"] + BN_EPS)
    return w * scale[None, :], bn["beta"] - bn["mean"] * scale


def fold_bn_dw(w, bn):
    """Fold BN into depthwise (9, C) tap weights -> (9,1,C) weight, (1,C) bias."""
    scale = bn["g"] * jax.lax.rsqrt(bn["var"] + BN_EPS)
    return (w * scale[None, :])[:, None, :], (bn["beta"] - bn["mean"] * scale)[None, :]


def make_shift_mats(H, W):
    """Constant (9, H*W, H*W) 0/1 matrices: S[k] @ x_flat == zero-padded 3x3 spatial
    shift of x for tap k, so the depthwise conv becomes 9 in-VMEM MXU matmuls."""
    S = np.zeros((9, H * W, H * W), dtype=np.float32)
    for kh in range(3):
        for kw in range(3):
            k = kh * 3 + kw
            for i in range(H):
                ii = i + kh - 1
                if not (0 <= ii < H):
                    continue
                for j in range(W):
                    jj = j + kw - 1
                    if 0 <= jj < W:
                        S[k, i * W + j, ii * W + jj] = 1.0
    return jnp.asarray(S)


def preprocess_params(params):
    """Done once, outside the jitted step: fold BN, reshape biases to (1,N),
    split qkv / out-proj per head, lane-pad the action head to 128 lanes and
    build the depthwise spatial-shift constants."""
    def row(b):
        return b.reshape(1, -1)

    prep = dict(
        us_w=params["us_w"], us_b=row(params["us_b"]),
        l1b1_w=params["l1b1_w"], l1b1_b=row(params["l1b1_b"]),
        tl_w=params["tl_w"],
        lnf_g=params["lnf_g"], lnf_b=params["lnf_b"],
    )
    w, b = fold_bn(params["stem_w"], params["stem_bn"])
    prep["stem_w"], prep["stem_b"] = w, row(b)
    w, b = fold_bn(params["head_w"], params["head_bn"])
    prep["head_w"], prep["head_b"] = w, row(b)

    blocks = []
    for bp in params["blocks"]:
        ew, eb = fold_bn(bp["exp_w"], bp["exp_bn"])
        dww, dwb = fold_bn_dw(bp["dw_w"], bp["dw_bn"])
        pw, pb = fold_bn(bp["proj_w"], bp["proj_bn"])
        C = pw.shape[1]
        blocks.append(dict(
            exp_w=ew, exp_b=row(eb), dw_w=dww, dw_b=dwb,
            proj_w=pw, proj_b=row(pb),
            film_wg=bp["film_w"][:, :C], film_bg=row(bp["film_b"][:C]),
            film_wb=bp["film_w"][:, C:], film_bb=row(bp["film_b"][C:]),
        ))
    prep["blocks"] = blocks

    layers = []
    for lp in params["layers"]:
        wqkv = lp["w_qkv"].reshape(D_MODEL, 3, HEADS, DIM_HEAD).transpose(1, 2, 0, 3)
        bqkv = lp["b_qkv"].reshape(3, HEADS, 1, DIM_HEAD)
        layers.append(dict(
            ln1_g=lp["ln1_g"], ln1_b=lp["ln1_b"],
            w_q=wqkv[0], b_q=bqkv[0], w_k=wqkv[1], b_k=bqkv[1], w_v=wqkv[2], b_v=bqkv[2],
            w_o=lp["w_o"].reshape(HEADS, DIM_HEAD, D_MODEL), b_o=row(lp["b_o"]),
            ln2_g=lp["ln2_g"], ln2_b=lp["ln2_b"],
            w_ff1=lp["w_ff1"], b_ff1=row(lp["b_ff1"]),
            w_ff2=lp["w_ff2"], b_ff2=row(lp["b_ff2"]),
        ))
    prep["layers"] = layers

    nout = NUM_ACTIONS * VOCAB
    prep["out_w"] = jnp.zeros((D_MODEL, OUT_PAD), F32).at[:, :nout].set(params["out_w"])
    prep["out_b"] = jnp.zeros((1, OUT_PAD), F32).at[:, :nout].set(row(params["out_b"]))

    h1 = -(-IMG // 2)  # spatial size after the stride-2 'same' stem
    prep["shift"] = make_shift_mats(h1, h1)
    return prep


# ============================== XLA-side layout glue ==============================

def _same_pad(in_size, k, stride):
    out = -(-in_size // stride)
    total = max((out - 1) * stride + k - in_size, 0)
    return total // 2, total - total // 2


def conv_patches(x, k, stride, pad):
    """im2col for the dense stem conv only.  x:(B,H,W,C) -> (B,Ho,Wo,k*k,C)."""
    Bb, H, W, C = x.shape
    xp = jnp.pad(x, ((0, 0), (pad[0], pad[1]), (pad[0], pad[1]), (0, 0)))
    Hp, Wp = xp.shape[1], xp.shape[2]
    Ho = (Hp - k) // stride + 1
    Wo = (Wp - k) // stride + 1
    taps = []
    for kh in range(k):
        for kw in range(k):
            taps.append(
                xp[:, kh:kh + (Ho - 1) * stride + 1:stride,
                      kw:kw + (Wo - 1) * stride + 1:stride, :]
            )
    return jnp.stack(taps, axis=3)


# ================================ full forward ================================

def rt1_forward(prep, x_nchw, context_raw):
    Bb = x_nchw.shape[0]
    x = jnp.transpose(x_nchw, (0, 2, 3, 1)).astype(F32)          # NCHW -> NHWC

    # stem im2col on the raw image only; everything downstream stays fused.
    pat = conv_patches(x, k=3, stride=2, pad=_same_pad(IMG, 3, 2))  # (B,H,W,9,C_IN)
    H, W = pat.shape[1], pat.shape[2]
    P = H * W
    pat = pat.reshape(Bb * P, 9 * x.shape[-1])

    # swish(bn0(conv_stem(x)))  +  USEncoder(context)
    h, context = fused_stem_ctx(pat, context_raw, prep)
    ctx3 = context.reshape(Bb, 1, CTX_DIM)

    # backbone_with_film: MBConvBlock then FiLM(context), fused per block
    for bp in prep["blocks"]:
        h = fused_mbconv_film(h, ctx3, prep["shift"], bp, Bb, P)

    # swish(bn1(conv_head)) + Linear_1b1_conv + permute(0,2,3,1)[no-op] + TokenLearner
    tokens = fused_head_tokenlearner(h, prep, Bb, P)

    # Transformers_Decoder
    t = tokens
    for lp in prep["layers"]:
        t = fused_transformer_layer(t, lp, Bb)

    logits = fused_final(t.reshape(Bb * S_TOKENS, D_MODEL), prep)
    logits = logits[:, : NUM_ACTIONS * VOCAB]                     # strip lane padding
    return logits.reshape(Bb, S_TOKENS, NUM_ACTIONS, VOCAB)


# ============================ deterministic parameters ============================

def init_params(key):
    it = iter(jax.random.split(key, 256))

    def nrm(shape, scale=0.1):
        return scale * jax.random.normal(next(it), shape, dtype=F32)

    def bn(n):
        return dict(
            g=1.0 + 0.1 * jax.random.normal(next(it), (n,), dtype=F32),
            beta=0.1 * jax.random.normal(next(it), (n,), dtype=F32),
            mean=0.1 * jax.random.normal(next(it), (n,), dtype=F32),
            var=1.0 + 0.1 * jnp.abs(jax.random.normal(next(it), (n,), dtype=F32)),
        )

    inner = HEADS * DIM_HEAD
    blocks = []
    for _ in range(NUM_BLOCKS):
        blocks.append(dict(
            exp_w=nrm((C0, C0 * EXPAND)), exp_bn=bn(C0 * EXPAND),
            dw_w=nrm((9, C0 * EXPAND)), dw_bn=bn(C0 * EXPAND),
            proj_w=nrm((C0 * EXPAND, C0)), proj_bn=bn(C0),
            film_w=nrm((CTX_DIM, 2 * C0)), film_b=nrm((2 * C0,)),
        ))
    layers = []
    for _ in range(DEPTH):
        layers.append(dict(
            ln1_g=1.0 + nrm((1, D_MODEL), 0.02), ln1_b=nrm((1, D_MODEL), 0.02),
            w_qkv=nrm((D_MODEL, 3 * inner)), b_qkv=nrm((3 * inner,)),
            w_o=nrm((inner, D_MODEL)), b_o=nrm((D_MODEL,)),
            ln2_g=1.0 + nrm((1, D_MODEL), 0.02), ln2_b=nrm((1, D_MODEL), 0.02),
            w_ff1=nrm((D_MODEL, MLP_DIM)), b_ff1=nrm((MLP_DIM,)),
            w_ff2=nrm((MLP_DIM, D_MODEL)), b_ff2=nrm((D_MODEL,)),
        ))
    return dict(
        us_w=nrm((CTX_IN, CTX_DIM)), us_b=nrm((CTX_DIM,)),
        stem_w=nrm((9 * C_IN, C0)), stem_bn=bn(C0),
        blocks=blocks,
        head_w=nrm((C0, C_HEAD)), head_bn=bn(C_HEAD),
        l1b1_w=nrm((C_HEAD, D_MODEL)), l1b1_b=nrm((D_MODEL,)),
        tl_w=nrm((D_MODEL, S_TOKENS)),
        layers=layers,
        lnf_g=1.0 + nrm((1, D_MODEL), 0.02), lnf_b=nrm((1, D_MODEL), 0.02),
        out_w=nrm((D_MODEL, NUM_ACTIONS * VOCAB)), out_b=nrm((NUM_ACTIONS * VOCAB,)),
    )


# ==================================== main ====================================

if __name__ == "__main__":
    key = jax.random.PRNGKey(0)
    kp, kx, kc = jax.random.split(key, 3)
    params = init_params(kp)
    prep = preprocess_params(params)      # BN folding etc. done once, outside the jitted step

    x = jax.random.normal(kx, (B, C_IN, IMG, IMG), dtype=F32)     # NCHW, like torch
    context_raw = jax.random.normal(kc, (B, CTX_IN), dtype=F32)   # stand-in sentence embedding

    out = jax.jit(rt1_forward)(prep, x, context_raw)
    out = jax.block_until_ready(out)
    assert out.shape == (B, S_TOKENS, NUM_ACTIONS, VOCAB)
    assert bool(jnp.all(jnp.isfinite(out)))
    print("KERNEL_OK")
</pallas_src>

<mosaic_0001>
module attributes {stable_mosaic.version = 11 : i64} {
  func.func @_stem_ctx_kernel(%arg0: i32, %arg1: memref<128x27xf32, #tpu.memory_space<vmem>>, %arg2: memref<2x16xf32, #tpu.memory_space<vmem>>, %arg3: memref<27x16xf32, #tpu.memory_space<vmem>>, %arg4: memref<1x16xf32, #tpu.memory_space<vmem>>, %arg5: memref<16x8xf32, #tpu.memory_space<vmem>>, %arg6: memref<1x8xf32, #tpu.memory_space<vmem>>, %arg7: memref<128x16xf32, #tpu.memory_space<vmem>>, %arg8: memref<2x8xf32, #tpu.memory_space<vmem>>) attributes {dimension_semantics = [#tpu.dimension_semantics<arbitrary>], iteration_bounds = array<i64: 1>, scalar_prefetch = 0 : i64, scratch_operands = 0 : i64, tpu.core_type = #tpu.core_type<tc>, window_params = [{pipeline_mode = #tpu.pipeline_mode<synchronous>, transform_indices = @transform_0, window_bounds = array<i64: 128, 27>}, {pipeline_mode = #tpu.pipeline_mode<synchronous>, transform_indices = @transform_1, window_bounds = array<i64: 2, 16>}, {pipeline_mode = #tpu.pipeline_mode<synchronous>, transform_indices = @transform_2, window_bounds = array<i64: 27, 16>}, {pipeline_mode = #tpu.pipeline_mode<synchronous>, transform_indices = @transform_3, window_bounds = array<i64: 1, 16>}, {pipeline_mode = #tpu.pipeline_mode<synchronous>, transform_indices = @transform_4, window_bounds = array<i64: 16, 8>}, {pipeline_mode = #tpu.pipeline_mode<synchronous>, transform_indices = @transform_5, window_bounds = array<i64: 1, 8>}, {pipeline_mode = #tpu.pipeline_mode<synchronous>, transform_indices = @transform_6, window_bounds = array<i64: 128, 16>}, {pipeline_mode = #tpu.pipeline_mode<synchronous>, transform_indices = @transform_7, window_bounds = array<i64: 2, 8>}]} {
    %c0 = arith.constant 0 : index
    %c0_0 = arith.constant 0 : index
    %0 = vector.load %arg1[%c0, %c0_0] : memref<128x27xf32, #tpu.memory_space<vmem>>, vector<128x27xf32>
    %c0_1 = arith.constant 0 : index
    %c0_2 = arith.constant 0 : index
    %1 = vector.load %arg3[%c0_1, %c0_2] : memref<27x16xf32, #tpu.memory_space<vmem>>, vector<27x16xf32>
    %2 = arith.truncf %0 : vector<128x27xf32> to vector<128x27xbf16>
    %3 = arith.truncf %1 : vector<27x16xf32> to vector<27x16xbf16>
    %cst = arith.constant dense<0.000000e+00> : vector<128x16xf32>
    %4 = tpu.matmul %2, %3, %cst {dimension_numbers = #tpu.dot_dimension_numbers<[1], [0], [0], [1], [0, 0, 1, 1], [], []>} : vector<128x27xbf16>, vector<27x16xbf16>, vector<128x16xf32> -> vector<128x16xf32>
    %c0_3 = arith.constant 0 : index
    %c0_4 = arith.constant 0 : index
    %5 = vector.load %arg4[%c0_3, %c0_4] : memref<1x16xf32, #tpu.memory_space<vmem>>, vector<1x16xf32>
    %6 = vector.broadcast %5 : vector<1x16xf32> to vector<128x16xf32>
    %7 = arith.addf %4, %6 : vector<128x16xf32>
    %8 = arith.negf %7 : vector<128x16xf32>
    %9 = math.exp %8 : vector<128x16xf32>
    %cst_5 = arith.constant 1.000000e+00 : f32
    %10 = vector.broadcast %cst_5 : f32 to vector<128x16xf32>
    %11 = arith.addf %10, %9 : vector<128x16xf32>
    %12 = arith.divf %10, %11 : vector<128x16xf32>
    %13 = arith.mulf %7, %12 : vector<128x16xf32>
    %c0_6 = arith.constant 0 : index
    %c0_7 = arith.constant 0 : index
    %14 = vector.load %arg7[%c0_6, %c0_7] : memref<128x16xf32, #tpu.memory_space<vmem>>, vector<128x16xf32>
    tpu.vector_store %arg7[%c0_6, %c0_7], %13 {strides = array<i32>} : memref<128x16xf32, #tpu.memory_space<vmem>>, vector<128x16xf32>,
    %c0_8 = arith.constant 0 : index
    %c0_9 = arith.constant 0 : index
    %15 = vector.load %arg2[%c0_8, %c0_9] : memref<2x16xf32, #tpu.memory_space<vmem>>, vector<2x16xf32>
    %c0_10 = arith.constant 0 : index
    %c0_11 = arith.constant 0 : index
    %16 = vector.load %arg5[%c0_10, %c0_11] : memref<16x8xf32, #tpu.memory_space<vmem>>, vector<16x8xf32>
    %17 = arith.truncf %15 : vector<2x16xf32> to vector<2x16xbf16>
    %18 = arith.truncf %16 : vector<16x8xf32> to vector<16x8xbf16>
    %cst_12 = arith.constant dense<0.000000e+00> : vector<2x8xf32>
    %19 = tpu.matmul %17, %18, %cst_12 {dimension_numbers = #tpu.dot_dimension_numbers<[1], [0], [0], [1], [0, 0, 1, 1], [], []>} : vector<2x16xbf16>, vector<16x8xbf16>, vector<2x8xf32> -> vector<2x8xf32>
    %c0_13 = arith.constant 0 : index
    %c0_14 = arith.constant 0 : index
    %20 = vector.load %arg6[%c0_13, %c0_14] : memref<1x8xf32, #tpu.memory_space<vmem>>, vector<1x8xf32>
    %21 = vector.broadcast %20 : vector<1x8xf32> to vector<2x8xf32>
    %22 = arith.addf %19, %21 : vector<2x8xf32>
    %23 = arith.mulf %22, %22 : vector<2x8xf32>
    %24 = arith.mulf %22, %23 : vector<2x8xf32>
    %cst_15 = arith.constant 4.471500e-02 : f32
    %25 = vector.broadcast %cst_15 : f32 to vector<2x8xf32>
    %26 = arith.mulf %25, %24 : vector<2x8xf32>
    %27 = arith.addf %22, %26 : vector<2x8xf32>
    %cst_16 = arith.constant 0.797884583 : f32
    %28 = vector.broadcast %cst_16 : f32 to vector<2x8xf32>
    %29 = arith.mulf %28, %27 : vector<2x8xf32>
    %30 = math.tanh %29 : vector<2x8xf32>
    %cst_17 = arith.constant 1.000000e+00 : f32
    %31 = vector.broadcast %cst_17 : f32 to vector<2x8xf32>
    %32 = arith.addf %31, %30 : vector<2x8xf32>
    %cst_18 = arith.constant 5.000000e-01 : f32
    %33 = vector.broadcast %cst_18 : f32 to vector<2x8xf32>
    %34 = arith.mulf %33, %32 : vector<2x8xf32>
    %35 = arith.mulf %22, %34 : vector<2x8xf32>
    %c0_19 = arith.constant 0 : index
    %c0_20 = arith.constant 0 : index
    %36 = vector.load %arg8[%c0_19, %c0_20] : memref<2x8xf32, #tpu.memory_space<vmem>>, vector<2x8xf32>
    tpu.vector_store %arg8[%c0_19, %c0_20], %35 {strides = array<i32>} : memref<2x8xf32, #tpu.memory_space<vmem>>, vector<2x8xf32>,
    return
  }
  func.func @transform_0(%arg0: i32) -> (i32, i32) {
    %c0_i32 = arith.constant 0 : i32
    %c0_i32_0 = arith.constant 0 : i32
    %c0_i32_1 = arith.constant 0 : i32
    return %c0_i32, %c0_i32_0 : i32, i32
  }
  func.func @transform_1(%arg0: i32) -> (i32, i32) {
    %c0_i32 = arith.constant 0 : i32
    %c0_i32_0 = arith.constant 0 : i32
    %c0_i32_1 = arith.constant 0 : i32
    return %c0_i32, %c0_i32_0 : i32, i32
  }
  func.func @transform_2(%arg0: i32) -> (i32, i32) {
    %c0_i32 = arith.constant 0 : i32
    %c0_i32_0 = arith.constant 0 : i32
    %c0_i32_1 = arith.constant 0 : i32
    return %c0_i32, %c0_i32_0 : i32, i32
  }
  func.func @transform_3(%arg0: i32) -> (i32, i32) {
    %c0_i32 = arith.constant 0 : i32
    %c0_i32_0 = arith.constant 0 : i32
    %c0_i32_1 = arith.constant 0 : i32
    return %c0_i32, %c0_i32_0 : i32, i32
  }
  func.func @transform_4(%arg0: i32) -> (i32, i32) {
    %c0_i32 = arith.constant 0 : i32
    %c0_i32_0 = arith.constant 0 : i32
    %c0_i32_1 = arith.constant 0 : i32
    return %c0_i32, %c0_i32_0 : i32, i32
  }
  func.func @transform_5(%arg0: i32) -> (i32, i32) {
    %c0_i32 = arith.constant 0 : i32
    %c0_i32_0 = arith.constant 0 : i32
    %c0_i32_1 = arith.constant 0 : i32
    return %c0_i32, %c0_i32_0 : i32, i32
  }
  func.func @transform_6(%arg0: i32) -> (i32, i32) {
    %c0_i32 = arith.constant 0 : i32
    %c0_i32_0 = arith.constant 0 : i32
    %c0_i32_1 = arith.constant 0 : i32
    return %c0_i32, %c0_i32_0 : i32, i32
  }
  func.func @transform_7(%arg0: i32) -> (i32, i32) {
    %c0_i32 = arith.constant 0 : i32
    %c0_i32_0 = arith.constant 0 : i32
    %c0_i32_1 = arith.constant 0 : i32
    return %c0_i32, %c0_i32_0 : i32, i32
  }
}

module attributes {stable_mosaic.version = 11 : i64} {
  func.func @_mbconv_film_kernel(%arg0: i32, %arg1: memref<64x16xf32, #tpu.memory_space<vmem>>, %arg2: memref<1x1x8xf32, #tpu.memory_space<vmem>>, %arg3: memref<9x64x64xf32, #tpu.memory_space<vmem>>, %arg4: memref<16x32xf32, #tpu.memory_space<vmem>>, %arg5: memref<1x32xf32, #tpu.memory_space<vmem>>, %arg6: memref<9x1x32xf32, #tpu.memory_space<vmem>>, %arg7: memref<1x32xf32, #tpu.memory_space<vmem>>, %arg8: memref<32x16xf32, #tpu.memory_space<vmem>>, %arg9: memref<1x16xf32, #tpu.memory_space<vmem>>, %arg10: memref<8x16xf32, #tpu.memory_space<vmem>>, %arg11: memref<1x16xf32, #tpu.memory_space<vmem>>, %arg12: memref<8x16xf32, #tpu.memory_space<vmem>>, %arg13: memref<1x16xf32, #tpu.memory_space<vmem>>, %arg14: memref<64x16xf32, #tpu.memory_space<vmem>>) attributes {dimension_semantics = [#tpu.dimension_semantics<parallel>], iteration_bounds = array<i64: 2>, scalar_prefetch = 0 : i64, scratch_operands = 0 : i64, tpu.core_type = #tpu.core_type<tc>, window_params = [{transform_indices = @transform_0, window_bounds = array<i64: 64, 16>}, {transform_indices = @transform_1, window_bounds = array<i64: 1, 1, 8>}, {pipeline_mode = #tpu.pipeline_mode<synchronous>, transform_indices = @transform_2, window_bounds = array<i64: 9, 64, 64>}, {pipeline_mode = #tpu.pipeline_mode<synchronous>, transform_indices = @transform_3, window_bounds = array<i64: 16, 32>}, {pipeline_mode = #tpu.pipeline_mode<synchronous>, transform_indices = @transform_4, window_bounds = array<i64: 1, 32>}, {pipeline_mode = #tpu.pipeline_mode<synchronous>, transform_indices = @transform_5, window_bounds = array<i64: 9, 1, 32>}, {pipeline_mode = #tpu.pipeline_mode<synchronous>, transform_indices = @transform_6, window_bounds = array<i64: 1, 32>}, {pipeline_mode = #tpu.pipeline_mode<synchronous>, transform_indices = @transform_7, window_bounds = array<i64: 32, 16>}, {pipeline_mode = #tpu.pipeline_mode<synchronous>, transform_indices = @transform_8, window_bounds = array<i64: 1, 16>}, {pipeline_mode = #tpu.pipeline_mode<synchronous>, transform_indices = @transform_9, window_bounds = array<i64: 8, 16>}, {pipeline_mode = #tpu.pipeline_mode<synchronous>, transform_indices = @transform_10, window_bounds = array<i64: 1, 16>}, {pipeline_mode = #tpu.pipeline_mode<synchronous>, transform_indices = @transform_11, window_bounds = array<i64: 8, 16>}, {pipeline_mode = #tpu.pipeline_mode<synchronous>, transform_indices = @transform_12, window_bounds = array<i64: 1, 16>}, {transform_indices = @transform_13, window_bounds = array<i64: 64, 16>}]} {
    %c0 = arith.constant 0 : index
    %c0_0 = arith.constant 0 : index
    %0 = vector.load %arg1[%c0, %c0_0] : memref<64x16xf32, #tpu.memory_space<vmem>>, vector<64x16xf32>
    %c0_1 = arith.constant 0 : index
    %c0_2 = arith.constant 0 : index
    %1 = vector.load %arg4[%c0_1, %c0_2] : memref<16x32xf32, #tpu.memory_space<vmem>>, vector<16x32xf32>
    %2 = arith.truncf %0 : vector<64x16xf32> to vector<64x16xbf16>
    %3 = arith.truncf %1 : vector<16x32xf32> to vector<16x32xbf16>
    %cst = arith.constant dense<0.000000e+00> : vector<64x32xf32>
    %4 = tpu.matmul %2, %3, %cst {dimension_numbers = #tpu.dot_dimension_numbers<[1], [0], [0], [1], [0, 0, 1, 1], [], []>} : vector<64x16xbf16>, vector<16x32xbf16>, vector<64x32xf32> -> vector<64x32xf32>
    %c0_3 = arith.constant 0 : index
    %c0_4 = arith.constant 0 : index
    %5 = vector.load %arg5[%c0_3, %c0_4] : memref<1x32xf32, #tpu.memory_space<vmem>>, vector<1x32xf32>
    %6 = vector.broadcast %5 : vector<1x32xf32> to vector<64x32xf32>
    %7 = arith.addf %4, %6 : vector<64x32xf32>
    %8 = arith.negf %7 : vector<64x32xf32>
    %9 = math.exp %8 : vector<64x32xf32>
    %cst_5 = arith.constant 1.000000e+00 : f32
    %10 = vector.broadcast %cst_5 : f32 to vector<64x32xf32>
    %11 = arith.addf %10, %9 : vector<64x32xf32>
    %12 = arith.divf %10, %11 : vector<64x32xf32>
    %13 = arith.mulf %7, %12 : vector<64x32xf32>
    %c0_6 = arith.constant 0 : index
    %c0_7 = arith.constant 0 : index
    %c0_8 = arith.constant 0 : index
    %14 = vector.load %arg3[%c0_6, %c0_7, %c0_8] : memref<9x64x64xf32, #tpu.memory_space<vmem>>, vector<1x64x64xf32>
    %15 = vector.shape_cast %14 : vector<1x64x64xf32> to vector<64x64xf32>
    %16 = arith.truncf %15 : vector<64x64xf32> to vector<64x64xbf16>
    %17 = arith.truncf %13 : vector<64x32xf32> to vector<64x32xbf16>
    %cst_9 = arith.constant dense<0.000000e+00> : vector<64x32xf32>
    %18 = tpu.matmul %16, %17, %cst_9 {dimension_numbers = #tpu.dot_dimension_numbers<[1], [0], [0], [1], [0, 0, 1, 1], [], []>} : vector<64x64xbf16>, vector<64x32xbf16>, vector<64x32xf32> -> vector<64x32xf32>
    %c0_10 = arith.constant 0 : index
    %c0_11 = arith.constant 0 : index
    %c0_12 = arith.constant 0 : index
    %19 = vector.load %arg6[%c0_10, %c0_11, %c0_12] : memref<9x1x32xf32, #tpu.memory_space<vmem>>, vector<1x1x32xf32>
    %20 = vector.shape_cast %19 : vector<1x1x32xf32> to vector<1x32xf32>
    %21 = vector.broadcast %20 : vector<1x32xf32> to vector<64x32xf32>
    %22 = arith.mulf %18, %21 : vector<64x32xf32>
    %c1 = arith.constant 1 : index
    %c0_13 = arith.constant 0 : index
    %c0_14 = arith.constant 0 : index
    %23 = vector.load %arg3[%c1, %c0_13, %c0_14] : memref<9x64x64xf32, #tpu.memory_space<vmem>>, vector<1x64x64xf32>
    %24 = vector.shape_cast %23 : vector<1x64x64xf32> to vector<64x64xf32>
    %25 = arith.truncf %24 : vector<64x64xf32> to vector<64x64xbf16>
    %26 = arith.truncf %13 : vector<64x32xf32> to vector<64x32xbf16>
    %cst_15 = arith.constant dense<0.000000e+00> : vector<64x32xf32>
    %27 = tpu.matmul %25, %26, %cst_15 {dimension_numbers = #tpu.dot_dimension_numbers<[1], [0], [0], [1], [0, 0, 1, 1], [], []>} : vector<64x64xbf16>, vector<64x32xbf16>, vector<64x32xf32> -> vector<64x32xf32>
    %c1_16 = arith.constant 1 : index
    %c0_17 = arith.constant 0 : index
    %c0_18 = arith.constant 0 : index
    %28 = vector.load %arg6[%c1_16, %c0_17, %c0_18] : memref<9x1x32xf32, #tpu.memory_space<vmem>>, vector<1x1x32xf32>
    %29 = vector.shape_cast %28 : vector<1x1x32xf32> to vector<1x32xf32>
    %30 = vector.broadcast %29 : vector<1x32xf32> to vector<64x32xf32>
    %31 = arith.mulf %27, %30 : vector<64x32xf32>
    %32 = arith.addf %22, %31 : vector<64x32xf32>
    %c2 = arith.constant 2 : index
    %c0_19 = arith.constant 0 : index
    %c0_20 = arith.constant 0 : index
    %33 = vector.load %arg3[%c2, %c0_19, %c0_20] : memref<9x64x64xf32, #tpu.memory_space<vmem>>, vector<1x64x64xf32>
    %34 = vector.shape_cast %33 : vector<1x64x64xf32> to vector<64x64xf32>
    %35 = arith.truncf %34 : vector<64x64xf32> to vector<64x64xbf16>
    %36 = arith.truncf %13 : vector<64x32xf32> to vector<64x32xbf16>
    %cst_21 = arith.constant dense<0.000000e+00> : vector<64x32xf32>
    %37 = tpu.matmul %35, %36, %cst_21 {dimension_numbers = #tpu.dot_dimension_numbers<[1], [0], [0], [1], [0, 0, 1, 1], [], []>} : vector<64x64xbf16>, vector<64x32xbf16>, vector<64x32xf32> -> vector<64x32xf32>
    %c2_22 = arith.constant 2 : index
    %c0_23 = arith.constant 0 : index
    %c0_24 = arith.constant 0 : index
    %38 = vector.load %arg6[%c2_22, %c0_23, %c0_24] : memref<9x1x32xf32, #tpu.memory_space<vmem>>, vector<1x1x32xf32>
    %39 = vector.shape_cast %38 : vector<1x1x32xf32> to vector<1x32xf32>
    %40 = vector.broadcast %39 : vector<1x32xf32> to vector<64x32xf32>
    %41 = arith.mulf %37, %40 : vector<64x32xf32>
    %42 = arith.addf %32, %41 : vector<64x32xf32>
    %c3 = arith.constant 3 : index
    %c0_25 = arith.constant 0 : index
    %c0_26 = arith.constant 0 : index
    %43 = vector.load %arg3[%c3, %c0_25, %c0_26] : memref<9x64x64xf32, #tpu.memory_space<vmem>>, vector<1x64x64xf32>
    %44 = vector.shape_cast %43 : vector<1x64x64xf32> to vector<64x64xf32>
    %45 = arith.truncf %44 : vector<64x64xf32> to vector<64x64xbf16>
    %46 = arith.truncf %13 : vector<64x32xf32> to vector<64x32xbf16>
    %cst_27 = arith.constant dense<0.000000e+00> : vector<64x32xf32>
    %47 = tpu.matmul %45, %46, %cst_27 {dimension_numbers = #tpu.dot_dimension_numbers<[1], [0], [0], [1], [0, 0, 1, 1], [], []>} : vector<64x64xbf16>, vector<64x32xbf16>, vector<64x32xf32> -> vector<64x32xf32>
    %c3_28 = arith.constant 3 : index
    %c0_29 = arith.constant 0 : index
    %c0_30 = arith.constant 0 : index
    %48 = vector.load %arg6[%c3_28, %c0_29, %c0_30] : memref<9x1x32xf32, #tpu.memory_space<vmem>>, vector<1x1x32xf32>
    %49 = vector.shape_cast %48 : vector<1x1x32xf32> to vector<1x32xf32>
    %50 = vector.broadcast %49 : vector<1x32xf32> to vector<64x32xf32>
    %51 = arith.mulf %47, %50 : vector<64x32xf32>
    %52 = arith.addf %42, %51 : vector<64x32xf32>
    %c4 = arith.constant 4 : index
    %c0_31 = arith.constant 0 : index
    %c0_32 = arith.constant 0 : index
    %53 = vector.load %arg3[%c4, %c0_31, %c0_32] : memref<9x64x64xf32, #tpu.memory_space<vmem>>, vector<1x64x64xf32>
    %54 = vector.shape_cast %53 : vector<1x64x64xf32> to vector<64x64xf32>
    %55 = arith.truncf %54 : vector<64x64xf32> to vector<64x64xbf16>
    %56 = arith.truncf %13 : vector<64x32xf32> to vector<64x32xbf16>
    %cst_33 = arith.constant dense<0.000000e+00> : vector<64x32xf32>
    %57 = tpu.matmul %55, %56, %cst_33 {dimension_numbers = #tpu.dot_dimension_numbers<[1], [0], [0], [1], [0, 0, 1, 1], [], []>} : vector<64x64xbf16>, vector<64x32xbf16>, vector<64x32xf32> -> vector<64x32xf32>
    %c4_34 = arith.constant 4 : index
    %c0_35 = arith.constant 0 : index
    %c0_36 = arith.constant 0 : index
    %58 = vector.load %arg6[%c4_34, %c0_35, %c0_36] : memref<9x1x32xf32, #tpu.memory_space<vmem>>, vector<1x1x32xf32>
    %59 = vector.shape_cast %58 : vector<1x1x32xf32> to vector<1x32xf32>
    %60 = vector.broadcast %59 : vector<1x32xf32> to vector<64x32xf32>
    %61 = arith.mulf %57, %60 : vector<64x32xf32>
    %62 = arith.addf %52, %61 : vector<64x32xf32>
    %c5 = arith.constant 5 : index
    %c0_37 = arith.constant 0 : index
    %c0_38 = arith.constant 0 : index
    %63 = vector.load %arg3[%c5, %c0_37, %c0_38] : memref<9x64x64xf32, #tpu.memory_space<vmem>>, vector<1x64x64xf32>
    %64 = vector.shape_cast %63 : vector<1x64x64xf32> to vector<64x64xf32>
    %65 = arith.truncf %64 : vector<64x64xf32> to vector<64x64xbf16>
    %66 = arith.truncf %13 : vector<64x32xf32> to vector<64x32xbf16>
    %cst_39 = arith.constant dense<0.000000e+00> : vector<64x32xf32>
    %67 = tpu.matmul %65, %66, %cst_39 {dimension_numbers = #tpu.dot_dimension_numbers<[1], [0], [0], [1], [0, 0, 1, 1], [], []>} : vector<64x64xbf16>, vector<64x32xbf16>, vector<64x32xf32> -> vector<64x32xf32>
    %c5_40 = arith.constant 5 : index
    %c0_41 = arith.constant 0 : index
    %c0_42 = arith.constant 0 : index
    %68 = vector.load %arg6[%c5_40, %c0_41, %c0_42] : memref<9x1x32xf32, #tpu.memory_space<vmem>>, vector<1x1x32xf32>
    %69 = vector.shape_cast %68 : vector<1x1x32xf32> to vector<1x32xf32>
    %70 = vector.broadcast %69 : vector<1x32xf32> to vector<64x32xf32>
    %71 = arith.mulf %67, %70 : vector<64x32xf32>
    %72 = arith.addf %62, %71 : vector<64x32xf32>
    %c6 = arith.constant 6 : index
    %c0_43 = arith.constant 0 : index
    %c0_44 = arith.constant 0 : index
    %73 = vector.load %arg3[%c6, %c0_43, %c0_44] : memref<9x64x64xf32, #tpu.memory_space<vmem>>, vector<1x64x64xf32>
    %74 = vector.shape_cast %73 : vector<1x64x64xf32> to vector<64x64xf32>
    %75 = arith.truncf %74 : vector<64x64xf32> to vector<64x64xbf16>
    %76 = arith.truncf %13 : vector<64x32xf32> to vector<64x32xbf16>
    %cst_45 = arith.constant dense<0.000000e+00> : vector<64x32xf32>
    %77 = tpu.matmul %75, %76, %cst_45 {dimension_numbers = #tpu.dot_dimension_numbers<[1], [0], [0], [1], [0, 0, 1, 1], [], []>} : vector<64x64xbf16>, vector<64x32xbf16>, vector<64x32xf32> -> vector<64x32xf32>
    %c6_46 = arith.constant 6 : index
    %c0_47 = arith.constant 0 : index
    %c0_48 = arith.constant 0 : index
    %78 = vector.load %arg6[%c6_46, %c0_47, %c0_48] : memref<9x1x32xf32, #tpu.memory_space<vmem>>, vector<1x1x32xf32>
    %79 = vector.shape_cast %78 : vector<1x1x32xf32> to vector<1x32xf32>
    %80 = vector.broadcast %79 : vector<1x32xf32> to vector<64x32xf32>
    %81 = arith.mulf %77, %80 : vector<64x32xf32>
    %82 = arith.addf %72, %81 : vector<64x32xf32>
    %c7 = arith.constant 7 : index
    %c0_49 = arith.constant 0 : index
    %c0_50 = arith.constant 0 : index
    %83 = vector.load %arg3[%c7, %c0_49, %c0_50] : memref<9x64x64xf32, #tpu.memory_space<vmem>>, vector<1x64x64xf32>
    %84 = vector.shape_cast %83 : vector<1x64x64xf32> to vector<64x64xf32>
    %85 = arith.truncf %84 : vector<64x64xf32> to vector<64x64xbf16>
    %86 = arith.truncf %13 : vector<64x32xf32> to vector<64x32xbf16>
    %cst_51 = arith.constant dense<0.000000e+00> : vector<64x32xf32>
    %87 = tpu.matmul %85, %86, %cst_51 {dimension_numbers = #tpu.dot_dimension_numbers<[1], [0], [0], [1], [0, 0, 1, 1], [], []>} : vector<64x64xbf16>, vector<64x32xbf16>, vector<64x32xf32> -> vector<64x32xf32>
    %c7_52 = arith.constant 7 : index
    %c0_53 = arith.constant 0 : index
    %c0_54 = arith.constant 0 : index
    %88 = vector.load %arg6[%c7_52, %c0_53, %c0_54] : memref<9x1x32xf32, #tpu.memory_space<vmem>>, vector<1x1x32xf32>
    %89 = vector.shape_cast %88 : vector<1x1x32xf32> to vector<1x32xf32>
    %90 = vector.broadcast %89 : vector<1x32xf32> to vector<64x32xf32>
    %91 = arith.mulf %87, %90 : vector<64x32xf32>
    %92 = arith.addf %82, %91 : vector<64x32xf32>
    %c8 = arith.constant 8 : index
    %c0_55 = arith.constant 0 : index
    %c0_56 = arith.constant 0 : index
    %93 = vector.load %arg3[%c8, %c0_55, %c0_56] : memref<9x64x64xf32, #tpu.memory_space<vmem>>, vector<1x64x64xf32>
    %94 = vector.shape_cast %93 : vector<1x64x64xf32> to vector<64x64xf32>
    %95 = arith.truncf %94 : vector<64x64xf32> to vector<64x64xbf16>
    %96 = arith.truncf %13 : vector<64x32xf32> to vector<64x32xbf16>
    %cst_57 = arith.constant dense<0.000000e+00> : vector<64x32xf32>
    %97 = tpu.matmul %95, %96, %cst_57 {dimension_numbers = #tpu.dot_dimension_numbers<[1], [0], [0], [1], [0, 0, 1, 1], [], []>} : vector<64x64xbf16>, vector<64x32xbf16>, vector<64x32xf32> -> vector<64x32xf32>
    %c8_58 = arith.constant 8 : index
    %c0_59 = arith.constant 0 : index
    %c0_60 = arith.constant 0 : index
    %98 = vector.load %arg6[%c8_58, %c0_59, %c0_60] : memref<9x1x32xf32, #tpu.memory_space<vmem>>, vector<1x1x32xf32>
    %99 = vector.shape_cast %98 : vector<1x1x32xf32> to vector<1x32xf32>
    %100 = vector.broadcast %99 : vector<1x32xf32> to vector<64x32xf32>
    %101 = arith.mulf %97, %100 : vector<64x32xf32>
    %102 = arith.addf %92, %101 : vector<64x32xf32>
    %c0_61 = arith.constant 0 : index
    %c0_62 = arith.constant 0 : index
    %103 = vector.load %arg7[%c0_61, %c0_62] : memref<1x32xf32, #tpu.memory_space<vmem>>, vector<1x32xf32>
    %104 = vector.broadcast %103 : vector<1x32xf32> to vector<64x32xf32>
    %105 = arith.addf %102, %104 : vector<64x32xf32>
    %106 = arith.negf %105 : vector<64x32xf32>
    %107 = math.exp %106 : vector<64x32xf32>
    %cst_63 = arith.constant 1.000000e+00 : f32
    %108 = vector.broadcast %cst_63 : f32 to vector<64x32xf32>
    %109 = arith.addf %108, %107 : vector<64x32xf32>
    %110 = arith.divf %108, %109 : vector<64x32xf32>
    %111 = arith.mulf %105, %110 : vector<64x32xf32>
    %c0_64 = arith.constant 0 : index
    %c0_65 = arith.constant 0 : index
    %112 = vector.load %arg8[%c0_64, %c0_65] : memref<32x16xf32, #tpu.memory_space<vmem>>, vector<32x16xf32>
    %113 = arith.truncf %111 : vector<64x32xf32> to vector<64x32xbf16>
    %114 = arith.truncf %112 : vector<32x16xf32> to vector<32x16xbf16>
    %cst_66 = arith.constant dense<0.000000e+00> : vector<64x16xf32>
    %115 = tpu.matmul %113, %114, %cst_66 {dimension_numbers = #tpu.dot_dimension_numbers<[1], [0], [0], [1], [0, 0, 1, 1], [], []>} : vector<64x32xbf16>, vector<32x16xbf16>, vector<64x16xf32> -> vector<64x16xf32>
    %116 = arith.addf %0, %115 : vector<64x16xf32>
    %c0_67 = arith.constant 0 : index
    %c0_68 = arith.constant 0 : index
    %117 = vector.load %arg9[%c0_67, %c0_68] : memref<1x16xf32, #tpu.memory_space<vmem>>, vector<1x16xf32>
    %118 = vector.broadcast %117 : vector<1x16xf32> to vector<64x16xf32>
    %119 = arith.addf %116, %118 : vector<64x16xf32>
    %c0_69 = arith.constant 0 : index
    %c0_70 = arith.constant 0 : index
    %c0_71 = arith.constant 0 : index
    %120 = vector.load %arg2[%c0_69, %c0_70, %c0_71] : memref<1x1x8xf32, #tpu.memory_space<vmem>>, vector<1x1x8xf32>
    %121 = vector.shape_cast %120 : vector<1x1x8xf32> to vector<1x8xf32>
    %c0_72 = arith.constant 0 : index
    %c0_73 = arith.constant 0 : index
    %122 = vector.load %arg10[%c0_72, %c0_73] : memref<8x16xf32, #tpu.memory_space<vmem>>, vector<8x16xf32>
    %123 = arith.truncf %121 : vector<1x8xf32> to vector<1x8xbf16>
    %124 = arith.truncf %122 : vector<8x16xf32> to vector<8x16xbf16>
    %cst_74 = arith.constant dense<0.000000e+00> : vector<1x16xf32>
    %125 = tpu.matmul %123, %124, %cst_74 {dimension_numbers = #tpu.dot_dimension_numbers<[1], [0], [0], [1], [0, 0, 1, 1], [], []>} : vector<1x8xbf16>, vector<8x16xbf16>, vector<1x16xf32> -> vector<1x16xf32>
    %c0_75 = arith.constant 0 : index
    %c0_76 = arith.constant 0 : index
    %126 = vector.load %arg11[%c0_75, %c0_76] : memref<1x16xf32, #tpu.memory_space<vmem>>, vector<1x16xf32>
    %127 = arith.addf %125, %126 : vector<1x16xf32>
    %c0_77 = arith.constant 0 : index
    %c0_78 = arith.constant 0 : index
    %128 = vector.load %arg12[%c0_77, %c0_78] : memref<8x16xf32, #tpu.memory_space<vmem>>, vector<8x16xf32>
    %129 = arith.truncf %121 : vector<1x8xf32> to vector<1x8xbf16>
    %130 = arith.truncf %128 : vector<8x16xf32> to vector<8x16xbf16>
    %cst_79 = arith.constant dense<0.000000e+00> : vector<1x16xf32>
    %131 = tpu.matmul %129, %130, %cst_79 {dimension_numbers = #tpu.dot_dimension_numbers<[1], [0], [0], [1], [0, 0, 1, 1], [], []>} : vector<1x8xbf16>, vector<8x16xbf16>, vector<1x16xf32> -> vector<1x16xf32>
    %c0_80 = arith.constant 0 : index
    %c0_81 = arith.constant 0 : index
    %132 = vector.load %arg13[%c0_80, %c0_81] : memref<1x16xf32, #tpu.memory_space<vmem>>, vector<1x16xf32>
    %133 = arith.addf %131, %132 : vector<1x16xf32>
    %cst_82 = arith.constant 1.000000e+00 : f32
    %134 = vector.broadcast %cst_82 : f32 to vector<1x16xf32>
    %135 = arith.addf %134, %127 : vector<1x16xf32>
    %136 = vector.broadcast %135 : vector<1x16xf32> to vector<64x16xf32>
    %137 = arith.mulf %119, %136 : vector<64x16xf32>
    %138 = vector.broadcast %133 : vector<1x16xf32> to vector<64x16xf32>
    %139 = arith.addf %137, %138 : vector<64x16xf32>
    %c0_83 = arith.constant 0 : index
    %c0_84 = arith.constant 0 : index
    %140 = vector.load %arg14[%c0_83, %c0_84] : memref<64x16xf32, #tpu.memory_space<vmem>>, vector<64x16xf32>
    tpu.vector_store %arg14[%c0_83, %c0_84], %139 {strides = array<i32>} : memref<64x16xf32, #tpu.memory_space<vmem>>, vector<64x16xf32>,
    return
  }
  func.func @transform_0(%arg0: i32) -> (i32, i32) {
    %c0_i32 = arith.constant 0 : i32
    %c0_i32_0 = arith.constant 0 : i32
    return %arg0, %c0_i32 : i32, i32
  }
  func.func @transform_1(%arg0: i32) -> (i32, i32, i32) {
    %c0_i32 = arith.constant 0 : i32
    %c0_i32_0 = arith.constant 0 : i32
    %c0_i32_1 = arith.constant 0 : i32
    return %arg0, %c0_i32, %c0_i32_0 : i32, i32, i32
  }
  func.func @transform_2(%arg0: i32) -> (i32, i32, i32) {
    %c0_i32 = arith.constant 0 : i32
    %c0_i32_0 = arith.constant 0 : i32
    %c0_i32_1 = arith.constant 0 : i32
    %c0_i32_2 = arith.constant 0 : i32
    return %c0_i32, %c0_i32_0, %c0_i32_1 : i32, i32, i32
  }
  func.func @transform_3(%arg0: i32) -> (i32, i32) {
    %c0_i32 = arith.constant 0 : i32
    %c0_i32_0 = arith.constant 0 : i32
    %c0_i32_1 = arith.constant 0 : i32
    return %c0_i32, %c0_i32_0 : i32, i32
  }
  func.func @transform_4(%arg0: i32) -> (i32, i32) {
    %c0_i32 = arith.constant 0 : i32
    %c0_i32_0 = arith.constant 0 : i32
    %c0_i32_1 = arith.constant 0 : i32
    return %c0_i32, %c0_i32_0 : i32, i32
  }
  func.func @transform_5(%arg0: i32) -> (i32, i32, i32) {
    %c0_i32 = arith.constant 0 : i32
    %c0_i32_0 = arith.constant 0 : i32
    %c0_i32_1 = arith.constant 0 : i32
    %c0_i32_2 = arith.constant 0 : i32
    return %c0_i32, %c0_i32_0, %c0_i32_1 : i32, i32, i32
  }
  func.func @transform_6(%arg0: i32) -> (i32, i32) {
    %c0_i32 = arith.constant 0 : i32
    %c0_i32_0 = arith.constant 0 : i32
    %c0_i32_1 = arith.constant 0 : i32
    return %c0_i32, %c0_i32_0 : i32, i32
  }
  func.func @transform_7(%arg0: i32) -> (i32, i32) {
    %c0_i32 = arith.constant 0 : i32
    %c0_i32_0 = arith.constant 0 : i32
    %c0_i32_1 = arith.constant 0 : i32
    return %c0_i32, %c0_i32_0 : i32, i32
  }
  func.func @transform_8(%arg0: i32) -> (i32, i32) {
    %c0_i32 = arith.constant 0 : i32
    %c0_i32_0 = arith.constant 0 : i32
    %c0_i32_1 = arith.constant 0 : i32
    return %c0_i32, %c0_i32_0 : i32, i32
  }
  func.func @transform_9(%arg0: i32) -> (i32, i32) {
    %c0_i32 = arith.constant 0 : i32
    %c0_i32_0 = arith.constant 0 : i32
    %c0_i32_1 = arith.constant 0 : i32
    return %c0_i32, %c0_i32_0 : i32, i32
  }
  func.func @transform_10(%arg0: i32) -> (i32, i32) {
    %c0_i32 = arith.constant 0 : i32
    %c0_i32_0 = arith.constant 0 : i32
    %c0_i32_1 = arith.constant 0 : i32
    return %c0_i32, %c0_i32_0 : i32, i32
  }
  func.func @transform_11(%arg0: i32) -> (i32, i32) {
    %c0_i32 = arith.constant 0 : i32
    %c0_i32_0 = arith.constant 0 : i32
    %c0_i32_1 = arith.constant 0 : i32
    return %c0_i32, %c0_i32_0 : i32, i32
  }
  func.func @transform_12(%arg0: i32) -> (i32, i32) {
    %c0_i32 = arith.constant 0 : i32
    %c0_i32_0 = arith.constant 0 : i32
    %c0_i32_1 = arith.constant 0 : i32
    return %c0_i32, %c0_i32_0 : i32, i32
  }
  func.func @transform_13(%arg0: i32) -> (i32, i32) {
    %c0_i32 = arith.constant 0 : i32
    %c0_i32_0 = arith.constant 0 : i32
    return %arg0, %c0_i32 : i32, i32
  }
}

module attributes {stable_mosaic.version = 11 : i64} {
  func.func @_head_tl_kernel(%arg0: i32, %arg1: memref<64x16xf32, #tpu.memory_space<vmem>>, %arg2: memref<16x48xf32, #tpu.memory_space<vmem>>, %arg3: memref<1x48xf32, #tpu.memory_space<vmem>>, %arg4: memref<48x32xf32, #tpu.memory_space<vmem>>, %arg5: memref<1x32xf32, #tpu.memory_space<vmem>>, %arg6: memref<32x8xf32, #tpu.memory_space<vmem>>, %arg7: memref<1x8x32xf32, #tpu.memory_space<vmem>>) attributes {dimension_semantics = [#tpu.dimension_semantics<parallel>], iteration_bounds = array<i64: 2>, scalar_prefetch = 0 : i64, scratch_operands = 0 : i64, tpu.core_type = #tpu.core_type<tc>, window_params = [{transform_indices = @transform_0, window_bounds = array<i64: 64, 16>}, {pipeline_mode = #tpu.pipeline_mode<synchronous>, transform_indices = @transform_1, window_bounds = array<i64: 16, 48>}, {pipeline_mode = #tpu.pipeline_mode<synchronous>, transform_indices = @transform_2, window_bounds = array<i64: 1, 48>}, {pipeline_mode = #tpu.pipeline_mode<synchronous>, transform_indices = @transform_3, window_bounds = array<i64: 48, 32>}, {pipeline_mode = #tpu.pipeline_mode<synchronous>, transform_indices = @transform_4, window_bounds = array<i64: 1, 32>}, {pipeline_mode = #tpu.pipeline_mode<synchronous>, transform_indices = @transform_5, window_bounds = array<i64: 32, 8>}, {transform_indices = @transform_6, window_bounds = array<i64: 1, 8, 32>}]} {
    %c0 = arith.constant 0 : index
    %c0_0 = arith.constant 0 : index
    %0 = vector.load %arg1[%c0, %c0_0] : memref<64x16xf32, #tpu.memory_space<vmem>>, vector<64x16xf32>
    %c0_1 = arith.constant 0 : index
    %c0_2 = arith.constant 0 : index
    %1 = vector.load %arg2[%c0_1, %c0_2] : memref<16x48xf32, #tpu.memory_space<vmem>>, vector<16x48xf32>
    %2 = arith.truncf %0 : vector<64x16xf32> to vector<64x16xbf16>
    %3 = arith.truncf %1 : vector<16x48xf32> to vector<16x48xbf16>
    %cst = arith.constant dense<0.000000e+00> : vector<64x48xf32>
    %4 = tpu.matmul %2, %3, %cst {dimension_numbers = #tpu.dot_dimension_numbers<[1], [0], [0], [1], [0, 0, 1, 1], [], []>} : vector<64x16xbf16>, vector<16x48xbf16>, vector<64x48xf32> -> vector<64x48xf32>
    %c0_3 = arith.constant 0 : index
    %c0_4 = arith.constant 0 : index
    %5 = vector.load %arg3[%c0_3, %c0_4] : memref<1x48xf32, #tpu.memory_space<vmem>>, vector<1x48xf32>
    %6 = vector.broadcast %5 : vector<1x48xf32> to vector<64x48xf32>
    %7 = arith.addf %4, %6 : vector<64x48xf32>
    %8 = arith.negf %7 : vector<64x48xf32>
    %9 = math.exp %8 : vector<64x48xf32>
    %cst_5 = arith.constant 1.000000e+00 : f32
    %10 = vector.broadcast %cst_5 : f32 to vector<64x48xf32>
    %11 = arith.addf %10, %9 : vector<64x48xf32>
    %12 = arith.divf %10, %11 : vector<64x48xf32>
    %13 = arith.mulf %7, %12 : vector<64x48xf32>
    %c0_6 = arith.constant 0 : index
    %c0_7 = arith.constant 0 : index
    %14 = vector.load %arg4[%c0_6, %c0_7] : memref<48x32xf32, #tpu.memory_space<vmem>>, vector<48x32xf32>
    %15 = arith.truncf %13 : vector<64x48xf32> to vector<64x48xbf16>
    %16 = arith.truncf %14 : vector<48x32xf32> to vector<48x32xbf16>
    %cst_8 = arith.constant dense<0.000000e+00> : vector<64x32xf32>
    %17 = tpu.matmul %15, %16, %cst_8 {dimension_numbers = #tpu.dot_dimension_numbers<[1], [0], [0], [1], [0, 0, 1, 1], [], []>} : vector<64x48xbf16>, vector<48x32xbf16>, vector<64x32xf32> -> vector<64x32xf32>
    %c0_9 = arith.constant 0 : index
    %c0_10 = arith.constant 0 : index
    %18 = vector.load %arg5[%c0_9, %c0_10] : memref<1x32xf32, #tpu.memory_space<vmem>>, vector<1x32xf32>
    %19 = vector.broadcast %18 : vector<1x32xf32> to vector<64x32xf32>
    %20 = arith.addf %17, %19 : vector<64x32xf32>
    %c0_11 = arith.constant 0 : index
    %c0_12 = arith.constant 0 : index
    %21 = vector.load %arg6[%c0_11, %c0_12] : memref<32x8xf32, #tpu.memory_space<vmem>>, vector<32x8xf32>
    %22 = arith.truncf %20 : vector<64x32xf32> to vector<64x32xbf16>
    %23 = arith.truncf %21 : vector<32x8xf32> to vector<32x8xbf16>
    %cst_13 = arith.constant dense<0.000000e+00> : vector<64x8xf32>
    %24 = tpu.matmul %22, %23, %cst_13 {dimension_numbers = #tpu.dot_dimension_numbers<[1], [0], [0], [1], [0, 0, 1, 1], [], []>} : vector<64x32xbf16>, vector<32x8xbf16>, vector<64x8xf32> -> vector<64x8xf32>
    %cst_14 = arith.constant dense<0xFF800000> : vector<8xf32>
    %25 = vector.multi_reduction <maximumf>, %24, %cst_14 [0] : vector<64x8xf32> to vector<8xf32>
    %26 = vector.shape_cast %25 : vector<8xf32> to vector<1x8xf32>
    %27 = vector.broadcast %26 : vector<1x8xf32> to vector<64x8xf32>
    %28 = arith.subf %24, %27 : vector<64x8xf32>
    %29 = math.exp %28 : vector<64x8xf32>
    %cst_15 = arith.constant dense<0.000000e+00> : vector<8xf32>
    %30 = vector.multi_reduction <add>, %29, %cst_15 [0] : vector<64x8xf32> to vector<8xf32>
    %31 = vector.shape_cast %30 : vector<8xf32> to vector<1x8xf32>
    %32 = tpu.reciprocal %31 {approx = true} : vector<1x8xf32> -> vector<1x8xf32>
    %33 = vector.broadcast %32 : vector<1x8xf32> to vector<64x8xf32>
    %34 = arith.mulf %29, %33 : vector<64x8xf32>
    %35 = arith.truncf %34 : vector<64x8xf32> to vector<64x8xbf16>
    %36 = arith.truncf %20 : vector<64x32xf32> to vector<64x32xbf16>
    %cst_16 = arith.constant dense<0.000000e+00> : vector<8x32xf32>
    %37 = tpu.matmul %35, %36, %cst_16 {dimension_numbers = #tpu.dot_dimension_numbers<[0], [0], [1], [1], [0, 1, 1, 1], [], []>} : vector<64x8xbf16>, vector<64x32xbf16>, vector<8x32xf32> -> vector<8x32xf32>
    %c0_17 = arith.constant 0 : index
    %c0_18 = arith.constant 0 : index
    %c0_19 = arith.constant 0 : index
    %38 = vector.load %arg7[%c0_17, %c0_18, %c0_19] : memref<1x8x32xf32, #tpu.memory_space<vmem>>, vector<1x8x32xf32>
    %39 = vector.shape_cast %38 : vector<1x8x32xf32> to vector<8x32xf32>
    %40 = vector.shape_cast %37 : vector<8x32xf32> to vector<1x8x32xf32>
    tpu.vector_store %arg7[%c0_17, %c0_18, %c0_19], %40 {strides = array<i32>} : memref<1x8x32xf32, #tpu.memory_space<vmem>>, vector<1x8x32xf32>,
    return
  }
  func.func @transform_0(%arg0: i32) -> (i32, i32) {
    %c0_i32 = arith.constant 0 : i32
    %c0_i32_0 = arith.constant 0 : i32
    return %arg0, %c0_i32 : i32, i32
  }
  func.func @transform_1(%arg0: i32) -> (i32, i32) {
    %c0_i32 = arith.constant 0 : i32
    %c0_i32_0 = arith.constant 0 : i32
    %c0_i32_1 = arith.constant 0 : i32
    return %c0_i32, %c0_i32_0 : i32, i32
  }
  func.func @transform_2(%arg0: i32) -> (i32, i32) {
    %c0_i32 = arith.constant 0 : i32
    %c0_i32_0 = arith.constant 0 : i32
    %c0_i32_1 = arith.constant 0 : i32
    return %c0_i32, %c0_i32_0 : i32, i32
  }
  func.func @transform_3(%arg0: i32) -> (i32, i32) {
    %c0_i32 = arith.constant 0 : i32
    %c0_i32_0 = arith.constant 0 : i32
    %c0_i32_1 = arith.constant 0 : i32
    return %c0_i32, %c0_i32_0 : i32, i32
  }
  func.func @transform_4(%arg0: i32) -> (i32, i32) {
    %c0_i32 = arith.constant 0 : i32
    %c0_i32_0 = arith.constant 0 : i32
    %c0_i32_1 = arith.constant 0 : i32
    return %c0_i32, %c0_i32_0 : i32, i32
  }
  func.func @transform_5(%arg0: i32) -> (i32, i32) {
    %c0_i32 = arith.constant 0 : i32
    %c0_i32_0 = arith.constant 0 : i32
    %c0_i32_1 = arith.constant 0 : i32
    return %c0_i32, %c0_i32_0 : i32, i32
  }
  func.func @transform_6(%arg0: i32) -> (i32, i32, i32) {
    %c0_i32 = arith.constant 0 : i32
    %c0_i32_0 = arith.constant 0 : i32
    %c0_i32_1 = arith.constant 0 : i32
    return %arg0, %c0_i32, %c0_i32_0 : i32, i32, i32
  }
}

module attributes {stable_mosaic.version = 11 : i64} {
  func.func @_tlayer_kernel(%arg0: i32, %arg1: memref<1x8x32xf32, #tpu.memory_space<vmem>>, %arg2: memref<1x32xf32, #tpu.memory_space<vmem>>, %arg3: memref<1x32xf32, #tpu.memory_space<vmem>>, %arg4: memref<2x32x16xf32, #tpu.memory_space<vmem>>, %arg5: memref<2x1x16xf32, #tpu.memory_space<vmem>>, %arg6: memref<2x32x16xf32, #tpu.memory_space<vmem>>, %arg7: memref<2x1x16xf32, #tpu.memory_space<vmem>>, %arg8: memref<2x32x16xf32, #tpu.memory_space<vmem>>, %arg9: memref<2x1x16xf32, #tpu.memory_space<vmem>>, %arg10: memref<2x16x32xf32, #tpu.memory_space<vmem>>, %arg11: memref<1x32xf32, #tpu.memory_space<vmem>>, %arg12: memref<1x32xf32, #tpu.memory_space<vmem>>, %arg13: memref<1x32xf32, #tpu.memory_space<vmem>>, %arg14: memref<32x64xf32, #tpu.memory_space<vmem>>, %arg15: memref<1x64xf32, #tpu.memory_space<vmem>>, %arg16: memref<64x32xf32, #tpu.memory_space<vmem>>, %arg17: memref<1x32xf32, #tpu.memory_space<vmem>>, %arg18: memref<1x8x32xf32, #tpu.memory_space<vmem>>) attributes {dimension_semantics = [#tpu.dimension_semantics<parallel>], iteration_bounds = array<i64: 2>, scalar_prefetch = 0 : i64, scratch_operands = 0 : i64, tpu.core_type = #tpu.core_type<tc>, window_params = [{transform_indices = @transform_0, window_bounds = array<i64: 1, 8, 32>}, {pipeline_mode = #tpu.pipeline_mode<synchronous>, transform_indices = @transform_1, window_bounds = array<i64: 1, 32>}, {pipeline_mode = #tpu.pipeline_mode<synchronous>, transform_indices = @transform_2, window_bounds = array<i64: 1, 32>}, {pipeline_mode = #tpu.pipeline_mode<synchronous>, transform_indices = @transform_3, window_bounds = array<i64: 2, 32, 16>}, {pipeline_mode = #tpu.pipeline_mode<synchronous>, transform_indices = @transform_4, window_bounds = array<i64: 2, 1, 16>}, {pipeline_mode = #tpu.pipeline_mode<synchronous>, transform_indices = @transform_5, window_bounds = array<i64: 2, 32, 16>}, {pipeline_mode = #tpu.pipeline_mode<synchronous>, transform_indices = @transform_6, window_bounds = array<i64: 2, 1, 16>}, {pipeline_mode = #tpu.pipeline_mode<synchronous>, transform_indices = @transform_7, window_bounds = array<i64: 2, 32, 16>}, {pipeline_mode = #tpu.pipeline_mode<synchronous>, transform_indices = @transform_8, window_bounds = array<i64: 2, 1, 16>}, {pipeline_mode = #tpu.pipeline_mode<synchronous>, transform_indices = @transform_9, window_bounds = array<i64: 2, 16, 32>}, {pipeline_mode = #tpu.pipeline_mode<synchronous>, transform_indices = @transform_10, window_bounds = array<i64: 1, 32>}, {pipeline_mode = #tpu.pipeline_mode<synchronous>, transform_indices = @transform_11, window_bounds = array<i64: 1, 32>}, {pipeline_mode = #tpu.pipeline_mode<synchronous>, transform_indices = @transform_12, window_bounds = array<i64: 1, 32>}, {pipeline_mode = #tpu.pipeline_mode<synchronous>, transform_indices = @transform_13, window_bounds = array<i64: 32, 64>}, {pipeline_mode = #tpu.pipeline_mode<synchronous>, transform_indices = @transform_14, window_bounds = array<i64: 1, 64>}, {pipeline_mode = #tpu.pipeline_mode<synchronous>, transform_indices = @transform_15, window_bounds = array<i64: 64, 32>}, {pipeline_mode = #tpu.pipeline_mode<synchronous>, transform_indices = @transform_16, window_bounds = array<i64: 1, 32>}, {transform_indices = @transform_17, window_bounds = array<i64: 1, 8, 32>}]} {
    %c0 = arith.constant 0 : index
    %c0_0 = arith.constant 0 : index
    %c0_1 = arith.constant 0 : index
    %0 = vector.load %arg1[%c0, %c0_0, %c0_1] : memref<1x8x32xf32, #tpu.memory_space<vmem>>, vector<1x8x32xf32>
    %1 = vector.shape_cast %0 : vector<1x8x32xf32> to vector<8x32xf32>
    %c0_2 = arith.constant 0 : index
    %c0_3 = arith.constant 0 : index
    %2 = vector.load %arg2[%c0_2, %c0_3] : memref<1x32xf32, #tpu.memory_space<vmem>>, vector<1x32xf32>
    %c0_4 = arith.constant 0 : index
    %c0_5 = arith.constant 0 : index
    %3 = vector.load %arg3[%c0_4, %c0_5] : memref<1x32xf32, #tpu.memory_space<vmem>>, vector<1x32xf32>
    %cst = arith.constant dense<0.000000e+00> : vector<8xf32>
    %4 = vector.multi_reduction <add>, %1, %cst [1] : vector<8x32xf32> to vector<8xf32>
    %5 = vector.shape_cast %4 : vector<8xf32> to vector<8x1xf32>
    %cst_6 = arith.constant 3.200000e+01 : f32
    %6 = vector.broadcast %cst_6 : f32 to vector<8x1xf32>
    %7 = arith.divf %5, %6 : vector<8x1xf32>
    %8 = vector.broadcast %7 : vector<8x1xf32> to vector<8x32xf32>
    %9 = arith.subf %1, %8 : vector<8x32xf32>
    %10 = arith.mulf %9, %9 : vector<8x32xf32>
    %cst_7 = arith.constant dense<0.000000e+00> : vector<8xf32>
    %11 = vector.multi_reduction <add>, %10, %cst_7 [1] : vector<8x32xf32> to vector<8xf32>
    %12 = vector.shape_cast %11 : vector<8xf32> to vector<8x1xf32>
    %cst_8 = arith.constant 3.200000e+01 : f32
    %13 = vector.broadcast %cst_8 : f32 to vector<8x1xf32>
    %14 = arith.divf %12, %13 : vector<8x1xf32>
    %cst_9 = arith.constant 9.99999974E-6 : f32
    %15 = vector.broadcast %cst_9 : f32 to vector<8x1xf32>
    %16 = arith.addf %14, %15 : vector<8x1xf32>
    %17 = math.rsqrt %16 : vector<8x1xf32>
    %18 = vector.broadcast %17 : vector<8x1xf32> to vector<8x32xf32>
    %19 = arith.mulf %9, %18 : vector<8x32xf32>
    %20 = vector.broadcast %2 : vector<1x32xf32> to vector<8x32xf32>
    %21 = arith.mulf %19, %20 : vector<8x32xf32>
    %22 = vector.broadcast %3 : vector<1x32xf32> to vector<8x32xf32>
    %23 = arith.addf %21, %22 : vector<8x32xf32>
    %cst_10 = arith.constant 0.000000e+00 : f32
    %24 = vector.broadcast %cst_10 : f32 to vector<8x32xf32>
    %c0_11 = arith.constant 0 : index
    %c0_12 = arith.constant 0 : index
    %c0_13 = arith.constant 0 : index
    %25 = vector.load %arg4[%c0_11, %c0_12, %c0_13] : memref<2x32x16xf32, #tpu.memory_space<vmem>>, vector<1x32x16xf32>
    %26 = vector.shape_cast %25 : vector<1x32x16xf32> to vector<32x16xf32>
    %27 = arith.truncf %23 : vector<8x32xf32> to vector<8x32xbf16>
    %28 = arith.truncf %26 : vector<32x16xf32> to vector<32x16xbf16>
    %cst_14 = arith.constant dense<0.000000e+00> : vector<8x16xf32>
    %29 = tpu.matmul %27, %28, %cst_14 {dimension_numbers = #tpu.dot_dimension_numbers<[1], [0], [0], [1], [0, 0, 1, 1], [], []>} : vector<8x32xbf16>, vector<32x16xbf16>, vector<8x16xf32> -> vector<8x16xf32>
    %c0_15 = arith.constant 0 : index
    %c0_16 = arith.constant 0 : index
    %c0_17 = arith.constant 0 : index
    %30 = vector.load %arg5[%c0_15, %c0_16, %c0_17] : memref<2x1x16xf32, #tpu.memory_space<vmem>>, vector<1x1x16xf32>
    %31 = vector.shape_cast %30 : vector<1x1x16xf32> to vector<1x16xf32>
    %32 = vector.broadcast %31 : vector<1x16xf32> to vector<8x16xf32>
    %33 = arith.addf %29, %32 : vector<8x16xf32>
    %c0_18 = arith.constant 0 : index
    %c0_19 = arith.constant 0 : index
    %c0_20 = arith.constant 0 : index
    %34 = vector.load %arg6[%c0_18, %c0_19, %c0_20] : memref<2x32x16xf32, #tpu.memory_space<vmem>>, vector<1x32x16xf32>
    %35 = vector.shape_cast %34 : vector<1x32x16xf32> to vector<32x16xf32>
    %36 = arith.truncf %23 : vector<8x32xf32> to vector<8x32xbf16>
    %37 = arith.truncf %35 : vector<32x16xf32> to vector<32x16xbf16>
    %cst_21 = arith.constant dense<0.000000e+00> : vector<8x16xf32>
    %38 = tpu.matmul %36, %37, %cst_21 {dimension_numbers = #tpu.dot_dimension_numbers<[1], [0], [0], [1], [0, 0, 1, 1], [], []>} : vector<8x32xbf16>, vector<32x16xbf16>, vector<8x16xf32> -> vector<8x16xf32>
    %c0_22 = arith.constant 0 : index
    %c0_23 = arith.constant 0 : index
    %c0_24 = arith.constant 0 : index
    %39 = vector.load %arg7[%c0_22, %c0_23, %c0_24] : memref<2x1x16xf32, #tpu.memory_space<vmem>>, vector<1x1x16xf32>
    %40 = vector.shape_cast %39 : vector<1x1x16xf32> to vector<1x16xf32>
    %41 = vector.broadcast %40 : vector<1x16xf32> to vector<8x16xf32>
    %42 = arith.addf %38, %41 : vector<8x16xf32>
    %c0_25 = arith.constant 0 : index
    %c0_26 = arith.constant 0 : index
    %c0_27 = arith.constant 0 : index
    %43 = vector.load %arg8[%c0_25, %c0_26, %c0_27] : memref<2x32x16xf32, #tpu.memory_space<vmem>>, vector<1x32x16xf32>
    %44 = vector.shape_cast %43 : vector<1x32x16xf32> to vector<32x16xf32>
    %45 = arith.truncf %23 : vector<8x32xf32> to vector<8x32xbf16>
    %46 = arith.truncf %44 : vector<32x16xf32> to vector<32x16xbf16>
    %cst_28 = arith.constant dense<0.000000e+00> : vector<8x16xf32>
    %47 = tpu.matmul %45, %46, %cst_28 {dimension_numbers = #tpu.dot_dimension_numbers<[1], [0], [0], [1], [0, 0, 1, 1], [], []>} : vector<8x32xbf16>, vector<32x16xbf16>, vector<8x16xf32> -> vector<8x16xf32>
    %c0_29 = arith.constant 0 : index
    %c0_30 = arith.constant 0 : index
    %c0_31 = arith.constant 0 : index
    %48 = vector.load %arg9[%c0_29, %c0_30, %c0_31] : memref<2x1x16xf32, #tpu.memory_space<vmem>>, vector<1x1x16xf32>
    %49 = vector.shape_cast %48 : vector<1x1x16xf32> to vector<1x16xf32>
    %50 = vector.broadcast %49 : vector<1x16xf32> to vector<8x16xf32>
    %51 = arith.addf %47, %50 : vector<8x16xf32>
    %52 = arith.truncf %33 : vector<8x16xf32> to vector<8x16xbf16>
    %53 = arith.truncf %42 : vector<8x16xf32> to vector<8x16xbf16>
    %cst_32 = arith.constant dense<0.000000e+00> : vector<8x8xf32>
    %54 = tpu.matmul %52, %53, %cst_32 {dimension_numbers = #tpu.dot_dimension_numbers<[1], [1], [0], [0], [0, 0, 1, 0], [], []>} : vector<8x16xbf16>, vector<8x16xbf16>, vector<8x8xf32> -> vector<8x8xf32>
    %cst_33 = arith.constant 2.500000e-01 : f32
    %55 = vector.broadcast %cst_33 : f32 to vector<8x8xf32>
    %56 = arith.mulf %54, %55 : vector<8x8xf32>
    %cst_34 = arith.constant dense<0xFF800000> : vector<8xf32>
    %57 = vector.multi_reduction <maximumf>, %56, %cst_34 [1] : vector<8x8xf32> to vector<8xf32>
    %58 = vector.shape_cast %57 : vector<8xf32> to vector<8x1xf32>
    %59 = vector.broadcast %58 : vector<8x1xf32> to vector<8x8xf32>
    %60 = arith.subf %56, %59 : vector<8x8xf32>
    %61 = math.exp %60 : vector<8x8xf32>
    %cst_35 = arith.constant dense<0.000000e+00> : vector<8xf32>
    %62 = vector.multi_reduction <add>, %61, %cst_35 [1] : vector<8x8xf32> to vector<8xf32>
    %63 = vector.shape_cast %62 : vector<8xf32> to vector<8x1xf32>
    %64 = tpu.reciprocal %63 {approx = true} : vector<8x1xf32> -> vector<8x1xf32>
    %65 = vector.broadcast %64 : vector<8x1xf32> to vector<8x8xf32>
    %66 = arith.mulf %61, %65 : vector<8x8xf32>
    %67 = arith.truncf %66 : vector<8x8xf32> to vector<8x8xbf16>
    %68 = arith.truncf %51 : vector<8x16xf32> to vector<8x16xbf16>
    %cst_36 = arith.constant dense<0.000000e+00> : vector<8x16xf32>
    %69 = tpu.matmul %67, %68, %cst_36 {dimension_numbers = #tpu.dot_dimension_numbers<[1], [0], [0], [1], [0, 0, 1, 1], [], []>} : vector<8x8xbf16>, vector<8x16xbf16>, vector<8x16xf32> -> vector<8x16xf32>
    %c0_37 = arith.constant 0 : index
    %c0_38 = arith.constant 0 : index
    %c0_39 = arith.constant 0 : index
    %70 = vector.load %arg10[%c0_37, %c0_38, %c0_39] : memref<2x16x32xf32, #tpu.memory_space<vmem>>, vector<1x16x32xf32>
    %71 = vector.shape_cast %70 : vector<1x16x32xf32> to vector<16x32xf32>
    %72 = arith.truncf %69 : vector<8x16xf32> to vector<8x16xbf16>
    %73 = arith.truncf %71 : vector<16x32xf32> to vector<16x32xbf16>
    %cst_40 = arith.constant dense<0.000000e+00> : vector<8x32xf32>
    %74 = tpu.matmul %72, %73, %cst_40 {dimension_numbers = #tpu.dot_dimension_numbers<[1], [0], [0], [1], [0, 0, 1, 1], [], []>} : vector<8x16xbf16>, vector<16x32xbf16>, vector<8x32xf32> -> vector<8x32xf32>
    %75 = arith.addf %24, %74 : vector<8x32xf32>
    %c1 = arith.constant 1 : index
    %c0_41 = arith.constant 0 : index
    %c0_42 = arith.constant 0 : index
    %76 = vector.load %arg4[%c1, %c0_41, %c0_42] : memref<2x32x16xf32, #tpu.memory_space<vmem>>, vector<1x32x16xf32>
    %77 = vector.shape_cast %76 : vector<1x32x16xf32> to vector<32x16xf32>
    %78 = arith.truncf %23 : vector<8x32xf32> to vector<8x32xbf16>
    %79 = arith.truncf %77 : vector<32x16xf32> to vector<32x16xbf16>
    %cst_43 = arith.constant dense<0.000000e+00> : vector<8x16xf32>
    %80 = tpu.matmul %78, %79, %cst_43 {dimension_numbers = #tpu.dot_dimension_numbers<[1], [0], [0], [1], [0, 0, 1, 1], [], []>} : vector<8x32xbf16>, vector<32x16xbf16>, vector<8x16xf32> -> vector<8x16xf32>
    %c1_44 = arith.constant 1 : index
    %c0_45 = arith.constant 0 : index
    %c0_46 = arith.constant 0 : index
    %81 = vector.load %arg5[%c1_44, %c0_45, %c0_46] : memref<2x1x16xf32, #tpu.memory_space<vmem>>, vector<1x1x16xf32>
    %82 = vector.shape_cast %81 : vector<1x1x16xf32> to vector<1x16xf32>
    %83 = vector.broadcast %82 : vector<1x16xf32> to vector<8x16xf32>
    %84 = arith.addf %80, %83 : vector<8x16xf32>
    %c1_47 = arith.constant 1 : index
    %c0_48 = arith.constant 0 : index
    %c0_49 = arith.constant 0 : index
    %85 = vector.load %arg6[%c1_47, %c0_48, %c0_49] : memref<2x32x16xf32, #tpu.memory_space<vmem>>, vector<1x32x16xf32>
    %86 = vector.shape_cast %85 : vector<1x32x16xf32> to vector<32x16xf32>
    %87 = arith.truncf %23 : vector<8x32xf32> to vector<8x32xbf16>
    %88 = arith.truncf %86 : vector<32x16xf32> to vector<32x16xbf16>
    %cst_50 = arith.constant dense<0.000000e+00> : vector<8x16xf32>
    %89 = tpu.matmul %87, %88, %cst_50 {dimension_numbers = #tpu.dot_dimension_numbers<[1], [0], [0], [1], [0, 0, 1, 1], [], []>} : vector<8x32xbf16>, vector<32x16xbf16>, vector<8x16xf32> -> vector<8x16xf32>
    %c1_51 = arith.constant 1 : index
    %c0_52 = arith.constant 0 : index
    %c0_53 = arith.constant 0 : index
    %90 = vector.load %arg7[%c1_51, %c0_52, %c0_53] : memref<2x1x16xf32, #tpu.memory_space<vmem>>, vector<1x1x16xf32>
    %91 = vector.shape_cast %90 : vector<1x1x16xf32> to vector<1x16xf32>
    %92 = vector.broadcast %91 : vector<1x16xf32> to vector<8x16xf32>
    %93 = arith.addf %89, %92 : vector<8x16xf32>
    %c1_54 = arith.constant 1 : index
    %c0_55 = arith.constant 0 : index
    %c0_56 = arith.constant 0 : index
    %94 = vector.load %arg8[%c1_54, %c0_55, %c0_56] : memref<2x32x16xf32, #tpu.memory_space<vmem>>, vector<1x32x16xf32>
    %95 = vector.shape_cast %94 : vector<1x32x16xf32> to vector<32x16xf32>
    %96 = arith.truncf %23 : vector<8x32xf32> to vector<8x32xbf16>
    %97 = arith.truncf %95 : vector<32x16xf32> to vector<32x16xbf16>
    %cst_57 = arith.constant dense<0.000000e+00> : vector<8x16xf32>
    %98 = tpu.matmul %96, %97, %cst_57 {dimension_numbers = #tpu.dot_dimension_numbers<[1], [0], [0], [1], [0, 0, 1, 1], [], []>} : vector<8x32xbf16>, vector<32x16xbf16>, vector<8x16xf32> -> vector<8x16xf32>
    %c1_58 = arith.constant 1 : index
    %c0_59 = arith.constant 0 : index
    %c0_60 = arith.constant 0 : index
    %99 = vector.load %arg9[%c1_58, %c0_59, %c0_60] : memref<2x1x16xf32, #tpu.memory_space<vmem>>, vector<1x1x16xf32>
    %100 = vector.shape_cast %99 : vector<1x1x16xf32> to vector<1x16xf32>
    %101 = vector.broadcast %100 : vector<1x16xf32> to vector<8x16xf32>
    %102 = arith.addf %98, %101 : vector<8x16xf32>
    %103 = arith.truncf %84 : vector<8x16xf32> to vector<8x16xbf16>
    %104 = arith.truncf %93 : vector<8x16xf32> to vector<8x16xbf16>
    %cst_61 = arith.constant dense<0.000000e+00> : vector<8x8xf32>
    %105 = tpu.matmul %103, %104, %cst_61 {dimension_numbers = #tpu.dot_dimension_numbers<[1], [1], [0], [0], [0, 0, 1, 0], [], []>} : vector<8x16xbf16>, vector<8x16xbf16>, vector<8x8xf32> -> vector<8x8xf32>
    %cst_62 = arith.constant 2.500000e-01 : f32
    %106 = vector.broadcast %cst_62 : f32 to vector<8x8xf32>
    %107 = arith.mulf %105, %106 : vector<8x8xf32>
    %cst_63 = arith.constant dense<0xFF800000> : vector<8xf32>
    %108 = vector.multi_reduction <maximumf>, %107, %cst_63 [1] : vector<8x8xf32> to vector<8xf32>
    %109 = vector.shape_cast %108 : vector<8xf32> to vector<8x1xf32>
    %110 = vector.broadcast %109 : vector<8x1xf32> to vector<8x8xf32>
    %111 = arith.subf %107, %110 : vector<8x8xf32>
    %112 = math.exp %111 : vector<8x8xf32>
    %cst_64 = arith.constant dense<0.000000e+00> : vector<8xf32>
    %113 = vector.multi_reduction <add>, %112, %cst_64 [1] : vector<8x8xf32> to vector<8xf32>
    %114 = vector.shape_cast %113 : vector<8xf32> to vector<8x1xf32>
    %115 = tpu.reciprocal %114 {approx = true} : vector<8x1xf32> -> vector<8x1xf32>
    %116 = vector.broadcast %115 : vector<8x1xf32> to vector<8x8xf32>
    %117 = arith.mulf %112, %116 : vector<8x8xf32>
    %118 = arith.truncf %117 : vector<8x8xf32> to vector<8x8xbf16>
    %119 = arith.truncf %102 : vector<8x16xf32> to vector<8x16xbf16>
    %cst_65 = arith.constant dense<0.000000e+00> : vector<8x16xf32>
    %120 = tpu.matmul %118, %119, %cst_65 {dimension_numbers = #tpu.dot_dimension_numbers<[1], [0], [0], [1], [0, 0, 1, 1], [], []>} : vector<8x8xbf16>, vector<8x16xbf16>, vector<8x16xf32> -> vector<8x16xf32>
    %c1_66 = arith.constant 1 : index
    %c0_67 = arith.constant 0 : index
    %c0_68 = arith.constant 0 : index
    %121 = vector.load %arg10[%c1_66, %c0_67, %c0_68] : memref<2x16x32xf32, #tpu.memory_space<vmem>>, vector<1x16x32xf32>
    %122 = vector.shape_cast %121 : vector<1x16x32xf32> to vector<16x32xf32>
    %123 = arith.truncf %120 : vector<8x16xf32> to vector<8x16xbf16>
    %124 = arith.truncf %122 : vector<16x32xf32> to vector<16x32xbf16>
    %cst_69 = arith.constant dense<0.000000e+00> : vector<8x32xf32>
    %125 = tpu.matmul %123, %124, %cst_69 {dimension_numbers = #tpu.dot_dimension_numbers<[1], [0], [0], [1], [0, 0, 1, 1], [], []>} : vector<8x16xbf16>, vector<16x32xbf16>, vector<8x32xf32> -> vector<8x32xf32>
    %126 = arith.addf %75, %125 : vector<8x32xf32>
    %127 = arith.addf %1, %126 : vector<8x32xf32>
    %c0_70 = arith.constant 0 : index
    %c0_71 = arith.constant 0 : index
    %128 = vector.load %arg11[%c0_70, %c0_71] : memref<1x32xf32, #tpu.memory_space<vmem>>, vector<1x32xf32>
    %129 = vector.broadcast %128 : vector<1x32xf32> to vector<8x32xf32>
    %130 = arith.addf %127, %129 : vector<8x32xf32>
    %c0_72 = arith.constant 0 : index
    %c0_73 = arith.constant 0 : index
    %131 = vector.load %arg12[%c0_72, %c0_73] : memref<1x32xf32, #tpu.memory_space<vmem>>, vector<1x32xf32>
    %c0_74 = arith.constant 0 : index
    %c0_75 = arith.constant 0 : index
    %132 = vector.load %arg13[%c0_74, %c0_75] : memref<1x32xf32, #tpu.memory_space<vmem>>, vector<1x32xf32>
    %cst_76 = arith.constant dense<0.000000e+00> : vector<8xf32>
    %133 = vector.multi_reduction <add>, %130, %cst_76 [1] : vector<8x32xf32> to vector<8xf32>
    %134 = vector.shape_cast %133 : vector<8xf32> to vector<8x1xf32>
    %cst_77 = arith.constant 3.200000e+01 : f32
    %135 = vector.broadcast %cst_77 : f32 to vector<8x1xf32>
    %136 = arith.divf %134, %135 : vector<8x1xf32>
    %137 = vector.broadcast %136 : vector<8x1xf32> to vector<8x32xf32>
    %138 = arith.subf %130, %137 : vector<8x32xf32>
    %139 = arith.mulf %138, %138 : vector<8x32xf32>
    %cst_78 = arith.constant dense<0.000000e+00> : vector<8xf32>
    %140 = vector.multi_reduction <add>, %139, %cst_78 [1] : vector<8x32xf32> to vector<8xf32>
    %141 = vector.shape_cast %140 : vector<8xf32> to vector<8x1xf32>
    %cst_79 = arith.constant 3.200000e+01 : f32
    %142 = vector.broadcast %cst_79 : f32 to vector<8x1xf32>
    %143 = arith.divf %141, %142 : vector<8x1xf32>
    %cst_80 = arith.constant 9.99999974E-6 : f32
    %144 = vector.broadcast %cst_80 : f32 to vector<8x1xf32>
    %145 = arith.addf %143, %144 : vector<8x1xf32>
    %146 = math.rsqrt %145 : vector<8x1xf32>
    %147 = vector.broadcast %146 : vector<8x1xf32> to vector<8x32xf32>
    %148 = arith.mulf %138, %147 : vector<8x32xf32>
    %149 = vector.broadcast %131 : vector<1x32xf32> to vector<8x32xf32>
    %150 = arith.mulf %148, %149 : vector<8x32xf32>
    %151 = vector.broadcast %132 : vector<1x32xf32> to vector<8x32xf32>
    %152 = arith.addf %150, %151 : vector<8x32xf32>
    %c0_81 = arith.constant 0 : index
    %c0_82 = arith.constant 0 : index
    %153 = vector.load %arg14[%c0_81, %c0_82] : memref<32x64xf32, #tpu.memory_space<vmem>>, vector<32x64xf32>
    %154 = arith.truncf %152 : vector<8x32xf32> to vector<8x32xbf16>
    %155 = arith.truncf %153 : vector<32x64xf32> to vector<32x64xbf16>
    %cst_83 = arith.constant dense<0.000000e+00> : vector<8x64xf32>
    %156 = tpu.matmul %154, %155, %cst_83 {dimension_numbers = #tpu.dot_dimension_numbers<[1], [0], [0], [1], [0, 0, 1, 1], [], []>} : vector<8x32xbf16>, vector<32x64xbf16>, vector<8x64xf32> -> vector<8x64xf32>
    %c0_84 = arith.constant 0 : index
    %c0_85 = arith.constant 0 : index
    %157 = vector.load %arg15[%c0_84, %c0_85] : memref<1x64xf32, #tpu.memory_space<vmem>>, vector<1x64xf32>
    %158 = vector.broadcast %157 : vector<1x64xf32> to vector<8x64xf32>
    %159 = arith.addf %156, %158 : vector<8x64xf32>
    %160 = arith.mulf %159, %159 : vector<8x64xf32>
    %161 = arith.mulf %159, %160 : vector<8x64xf32>
    %cst_86 = arith.constant 4.471500e-02 : f32
    %162 = vector.broadcast %cst_86 : f32 to vector<8x64xf32>
    %163 = arith.mulf %162, %161 : vector<8x64xf32>
    %164 = arith.addf %159, %163 : vector<8x64xf32>
    %cst_87 = arith.constant 0.797884583 : f32
    %165 = vector.broadcast %cst_87 : f32 to vector<8x64xf32>
    %166 = arith.mulf %165, %164 : vector<8x64xf32>
    %167 = math.tanh %166 : vector<8x64xf32>
    %cst_88 = arith.constant 1.000000e+00 : f32
    %168 = vector.broadcast %cst_88 : f32 to vector<8x64xf32>
    %169 = arith.addf %168, %167 : vector<8x64xf32>
    %cst_89 = arith.constant 5.000000e-01 : f32
    %170 = vector.broadcast %cst_89 : f32 to vector<8x64xf32>
    %171 = arith.mulf %170, %169 : vector<8x64xf32>
    %172 = arith.mulf %159, %171 : vector<8x64xf32>
    %c0_90 = arith.constant 0 : index
    %c0_91 = arith.constant 0 : index
    %173 = vector.load %arg16[%c0_90, %c0_91] : memref<64x32xf32, #tpu.memory_space<vmem>>, vector<64x32xf32>
    %174 = arith.truncf %172 : vector<8x64xf32> to vector<8x64xbf16>
    %175 = arith.truncf %173 : vector<64x32xf32> to vector<64x32xbf16>
    %cst_92 = arith.constant dense<0.000000e+00> : vector<8x32xf32>
    %176 = tpu.matmul %174, %175, %cst_92 {dimension_numbers = #tpu.dot_dimension_numbers<[1], [0], [0], [1], [0, 0, 1, 1], [], []>} : vector<8x64xbf16>, vector<64x32xbf16>, vector<8x32xf32> -> vector<8x32xf32>
    %177 = arith.addf %130, %176 : vector<8x32xf32>
    %c0_93 = arith.constant 0 : index
    %c0_94 = arith.constant 0 : index
    %178 = vector.load %arg17[%c0_93, %c0_94] : memref<1x32xf32, #tpu.memory_space<vmem>>, vector<1x32xf32>
    %179 = vector.broadcast %178 : vector<1x32xf32> to vector<8x32xf32>
    %180 = arith.addf %177, %179 : vector<8x32xf32>
    %c0_95 = arith.constant 0 : index
    %c0_96 = arith.constant 0 : index
    %c0_97 = arith.constant 0 : index
    %181 = vector.load %arg18[%c0_95, %c0_96, %c0_97] : memref<1x8x32xf32, #tpu.memory_space<vmem>>, vector<1x8x32xf32>
    %182 = vector.shape_cast %181 : vector<1x8x32xf32> to vector<8x32xf32>
    %183 = vector.shape_cast %180 : vector<8x32xf32> to vector<1x8x32xf32>
    tpu.vector_store %arg18[%c0_95, %c0_96, %c0_97], %183 {strides = array<i32>} : memref<1x8x32xf32, #tpu.memory_space<vmem>>, vector<1x8x32xf32>,
    return
  }
  func.func @transform_0(%arg0: i32) -> (i32, i32, i32) {
    %c0_i32 = arith.constant 0 : i32
    %c0_i32_0 = arith.constant 0 : i32
    %c0_i32_1 = arith.constant 0 : i32
    return %arg0, %c0_i32, %c0_i32_0 : i32, i32, i32
  }
  func.func @transform_1(%arg0: i32) -> (i32, i32) {
    %c0_i32 = arith.constant 0 : i32
    %c0_i32_0 = arith.constant 0 : i32
    %c0_i32_1 = arith.constant 0 : i32
    return %c0_i32, %c0_i32_0 : i32, i32
  }
  func.func @transform_2(%arg0: i32) -> (i32, i32) {
    %c0_i32 = arith.constant 0 : i32
    %c0_i32_0 = arith.constant 0 : i32
    %c0_i32_1 = arith.constant 0 : i32
    return %c0_i32, %c0_i32_0 : i32, i32
  }
  func.func @transform_3(%arg0: i32) -> (i32, i32, i32) {
    %c0_i32 = arith.constant 0 : i32
    %c0_i32_0 = arith.constant 0 : i32
    %c0_i32_1 = arith.constant 0 : i32
    %c0_i32_2 = arith.constant 0 : i32
    return %c0_i32, %c0_i32_0, %c0_i32_1 : i32, i32, i32
  }
  func.func @transform_4(%arg0: i32) -> (i32, i32, i32) {
    %c0_i32 = arith.constant 0 : i32
    %c0_i32_0 = arith.constant 0 : i32
    %c0_i32_1 = arith.constant 0 : i32
    %c0_i32_2 = arith.constant 0 : i32
    return %c0_i32, %c0_i32_0, %c0_i32_1 : i32, i32, i32
  }
  func.func @transform_5(%arg0: i32) -> (i32, i32, i32) {
    %c0_i32 = arith.constant 0 : i32
    %c0_i32_0 = arith.constant 0 : i32
    %c0_i32_1 = arith.constant 0 : i32
    %c0_i32_2 = arith.constant 0 : i32
    return %c0_i32, %c0_i32_0, %c0_i32_1 : i32, i32, i32
  }
  func.func @transform_6(%arg0: i32) -> (i32, i32, i32) {
    %c0_i32 = arith.constant 0 : i32
    %c0_i32_0 = arith.constant 0 : i32
    %c0_i32_1 = arith.constant 0 : i32
    %c0_i32_2 = arith.constant 0 : i32
    return %c0_i32, %c0_i32_0, %c0_i32_1 : i32, i32, i32
  }
  func.func @transform_7(%arg0: i32) -> (i32, i32, i32) {
    %c0_i32 = arith.constant 0 : i32
    %c0_i32_0 = arith.constant 0 : i32
    %c0_i32_1 = arith.constant 0 : i32
    %c0_i32_2 = arith.constant 0 : i32
    return %c0_i32, %c0_i32_0, %c0_i32_1 : i32, i32, i32
  }
  func.func @transform_8(%arg0: i32) -> (i32, i32, i32) {
    %c0_i32 = arith.constant 0 : i32
    %c0_i32_0 = arith.constant 0 : i32
    %c0_i32_1 = arith.constant 0 : i32
    %c0_i32_2 = arith.constant 0 : i32
    return %c0_i32, %c0_i32_0, %c0_i32_1 : i32, i32, i32
  }
  func.func @transform_9(%arg0: i32) -> (i32, i32, i32) {
    %c0_i32 = arith.constant 0 : i32
    %c0_i32_0 = arith.constant 0 : i32
    %c0_i32_1 = arith.constant 0 : i32
    %c0_i32_2 = arith.constant 0 : i32
    return %c0_i32, %c0_i32_0, %c0_i32_1 : i32, i32, i32
  }
  func.func @transform_10(%arg0: i32) -> (i32, i32) {
    %c0_i32 = arith.constant 0 : i32
    %c0_i32_0 = arith.constant 0 : i32
    %c0_i32_1 = arith.constant 0 : i32
    return %c0_i32, %c0_i32_0 : i32, i32
  }
  func.func @transform_11(%arg0: i32) -> (i32, i32) {
    %c0_i32 = arith.constant 0 : i32
    %c0_i32_0 = arith.constant 0 : i32
    %c0_i32_1 = arith.constant 0 : i32
    return %c0_i32, %c0_i32_0 : i32, i32
  }
  func.func @transform_12(%arg0: i32) -> (i32, i32) {
    %c0_i32 = arith.constant 0 : i32
    %c0_i32_0 = arith.constant 0 : i32
    %c0_i32_1 = arith.constant 0 : i32
    return %c0_i32, %c0_i32_0 : i32, i32
  }
  func.func @transform_13(%arg0: i32) -> (i32, i32) {
    %c0_i32 = arith.constant 0 : i32
    %c0_i32_0 = arith.constant 0 : i32
    %c0_i32_1 = arith.constant 0 : i32
    return %c0_i32, %c0_i32_0 : i32, i32
  }
  func.func @transform_14(%arg0: i32) -> (i32, i32) {
    %c0_i32 = arith.constant 0 : i32
    %c0_i32_0 = arith.constant 0 : i32
    %c0_i32_1 = arith.constant 0 : i32
    return %c0_i32, %c0_i32_0 : i32, i32
  }
  func.func @transform_15(%arg0: i32) -> (i32, i32) {
    %c0_i32 = arith.constant 0 : i32
    %c0_i32_0 = arith.constant 0 : i32
    %c0_i32_1 = arith.constant 0 : i32
    return %c0_i32, %c0_i32_0 : i32, i32
  }
  func.func @transform_16(%arg0: i32) -> (i32, i32) {
    %c0_i32 = arith.constant 0 : i32
    %c0_i32_0 = arith.constant 0 : i32
    %c0_i32_1 = arith.constant 0 : i32
    return %c0_i32, %c0_i32_0 : i32, i32
  }
  func.func @transform_17(%arg0: i32) -> (i32, i32, i32) {
    %c0_i32 = arith.constant 0 : i32
    %c0_i32_0 = arith.constant 0 : i32
    %c0_i32_1 = arith.constant 0 : i32
    return %arg0, %c0_i32, %c0_i32_0 : i32, i32, i32
  }
}

module attributes {stable_mosaic.version = 11 : i64} {
  func.func @_final_kernel(%arg0: i32, %arg1: memref<16x32xf32, #tpu.memory_space<vmem>>, %arg2: memref<1x32xf32, #tpu.memory_space<vmem>>, %arg3: memref<1x32xf32, #tpu.memory_space<vmem>>, %arg4: memref<32x128xf32, #tpu.memory_space<vmem>>, %arg5: memref<1x128xf32, #tpu.memory_space<vmem>>, %arg6: memref<16x128xf32, #tpu.memory_space<vmem>>) attributes {dimension_semantics = [#tpu.dimension_semantics<arbitrary>], iteration_bounds = array<i64: 1>, scalar_prefetch = 0 : i64, scratch_operands = 0 : i64, tpu.core_type = #tpu.core_type<tc>, window_params = [{pipeline_mode = #tpu.pipeline_mode<synchronous>, transform_indices = @transform_0, window_bounds = array<i64: 16, 32>}, {pipeline_mode = #tpu.pipeline_mode<synchronous>, transform_indices = @transform_1, window_bounds = array<i64: 1, 32>}, {pipeline_mode = #tpu.pipeline_mode<synchronous>, transform_indices = @transform_2, window_bounds = array<i64: 1, 32>}, {pipeline_mode = #tpu.pipeline_mode<synchronous>, transform_indices = @transform_3, window_bounds = array<i64: 32, 128>}, {pipeline_mode = #tpu.pipeline_mode<synchronous>, transform_indices = @transform_4, window_bounds = array<i64: 1, 128>}, {pipeline_mode = #tpu.pipeline_mode<synchronous>, transform_indices = @transform_5, window_bounds = array<i64: 16, 128>}]} {
    %c0 = arith.constant 0 : index
    %c0_0 = arith.constant 0 : index
    %0 = vector.load %arg1[%c0, %c0_0] : memref<16x32xf32, #tpu.memory_space<vmem>>, vector<16x32xf32>
    %c0_1 = arith.constant 0 : index
    %c0_2 = arith.constant 0 : index
    %1 = vector.load %arg2[%c0_1, %c0_2] : memref<1x32xf32, #tpu.memory_space<vmem>>, vector<1x32xf32>
    %c0_3 = arith.constant 0 : index
    %c0_4 = arith.constant 0 : index
    %2 = vector.load %arg3[%c0_3, %c0_4] : memref<1x32xf32, #tpu.memory_space<vmem>>, vector<1x32xf32>
    %cst = arith.constant dense<0.000000e+00> : vector<16xf32>
    %3 = vector.multi_reduction <add>, %0, %cst [1] : vector<16x32xf32> to vector<16xf32>
    %4 = vector.shape_cast %3 : vector<16xf32> to vector<16x1xf32>
    %cst_5 = arith.constant 3.200000e+01 : f32
    %5 = vector.broadcast %cst_5 : f32 to vector<16x1xf32>
    %6 = arith.divf %4, %5 : vector<16x1xf32>
    %7 = vector.broadcast %6 : vector<16x1xf32> to vector<16x32xf32>
    %8 = arith.subf %0, %7 : vector<16x32xf32>
    %9 = arith.mulf %8, %8 : vector<16x32xf32>
    %cst_6 = arith.constant dense<0.000000e+00> : vector<16xf32>
    %10 = vector.multi_reduction <add>, %9, %cst_6 [1] : vector<16x32xf32> to vector<16xf32>
    %11 = vector.shape_cast %10 : vector<16xf32> to vector<16x1xf32>
    %cst_7 = arith.constant 3.200000e+01 : f32
    %12 = vector.broadcast %cst_7 : f32 to vector<16x1xf32>
    %13 = arith.divf %11, %12 : vector<16x1xf32>
    %cst_8 = arith.constant 9.99999974E-6 : f32
    %14 = vector.broadcast %cst_8 : f32 to vector<16x1xf32>
    %15 = arith.addf %13, %14 : vector<16x1xf32>
    %16 = math.rsqrt %15 : vector<16x1xf32>
    %17 = vector.broadcast %16 : vector<16x1xf32> to vector<16x32xf32>
    %18 = arith.mulf %8, %17 : vector<16x32xf32>
    %19 = vector.broadcast %1 : vector<1x32xf32> to vector<16x32xf32>
    %20 = arith.mulf %18, %19 : vector<16x32xf32>
    %21 = vector.broadcast %2 : vector<1x32xf32> to vector<16x32xf32>
    %22 = arith.addf %20, %21 : vector<16x32xf32>
    %c0_9 = arith.constant 0 : index
    %c0_10 = arith.constant 0 : index
    %23 = vector.load %arg4[%c0_9, %c0_10] : memref<32x128xf32, #tpu.memory_space<vmem>>, vector<32x128xf32>
    %24 = arith.truncf %22 : vector<16x32xf32> to vector<16x32xbf16>
    %25 = arith.truncf %23 : vector<32x128xf32> to vector<32x128xbf16>
    %cst_11 = arith.constant dense<0.000000e+00> : vector<16x128xf32>
    %26 = tpu.matmul %24, %25, %cst_11 {dimension_numbers = #tpu.dot_dimension_numbers<[1], [0], [0], [1], [0, 0, 1, 1], [], []>} : vector<16x32xbf16>, vector<32x128xbf16>, vector<16x128xf32> -> vector<16x128xf32>
    %c0_12 = arith.constant 0 : index
    %c0_13 = arith.constant 0 : index
    %27 = vector.load %arg5[%c0_12, %c0_13] : memref<1x128xf32, #tpu.memory_space<vmem>>, vector<1x128xf32>
    %28 = vector.broadcast %27 : vector<1x128xf32> to vector<16x128xf32>
    %29 = arith.addf %26, %28 : vector<16x128xf32>
    %c0_14 = arith.constant 0 : index
    %c0_15 = arith.constant 0 : index
    %30 = vector.load %arg6[%c0_14, %c0_15] : memref<16x128xf32, #tpu.memory_space<vmem>>, vector<16x128xf32>
    tpu.vector_store %arg6[%c0_14, %c0_15], %29 {strides = array<i32>} : memref<16x128xf32, #tpu.memory_space<vmem>>, vector<16x128xf32>,
    return
  }
  func.func @transform_0(%arg0: i32) -> (i32, i32) {
    %c0_i32 = arith.constant 0 : i32
    %c0_i32_0 = arith.constant 0 : i32
    %c0_i32_1 = arith.constant 0 : i32
    return %c0_i32, %c0_i32_0 : i32, i32
  }
  func.func @transform_1(%arg0: i32) -> (i32, i32) {
    %c0_i32 = arith.constant 0 : i32
    %c0_i32_0 = arith.constant 0 : i32
    %c0_i32_1 = arith.constant 0 : i32
    return %c0_i32, %c0_i32_0 : i32, i32
  }
  func.func @transform_2(%arg0: i32) -> (i32, i32) {
    %c0_i32 = arith.constant 0 : i32
    %c0_i32_0 = arith.constant 0 : i32
    %c0_i32_1 = arith.constant 0 : i32
    return %c0_i32, %c0_i32_0 : i32, i32
  }
  func.func @transform_3(%arg0: i32) -> (i32, i32) {
    %c0_i32 = arith.constant 0 : i32
    %c0_i32_0 = arith.constant 0 : i32
    %c0_i32_1 = arith.constant 0 : i32
    return %c0_i32, %c0_i32_0 : i32, i32
  }
  func.func @transform_4(%arg0: i32) -> (i32, i32) {
    %c0_i32 = arith.constant 0 : i32
    %c0_i32_0 = arith.constant 0 : i32
    %c0_i32_1 = arith.constant 0 : i32
    return %c0_i32, %c0_i32_0 : i32, i32
  }
  func.func @transform_5(%arg0: i32) -> (i32, i32) {
    %c0_i32 = arith.constant 0 : i32
    %c0_i32_0 = arith.constant 0 : i32
    %c0_i32_1 = arith.constant 0 : i32
    return %c0_i32, %c0_i32_0 : i32, i32
  }
}

</mosaic_0001>

<llo_original>
// kernel: rt1_forward.7
$region0: #{rt1_forward.7}
  #allocation0 [shape = 'u32[]', space=smem, size = 0x4, offset = 0x4, fixed_abs, tag = 'smem constant byte address 0x4 - core index']
  #allocation1 [shape = 'u32[72,128]{1,0:T(1,128)}', space=vmem, size = 0x9000, scoped, tag = 'internal scratch']
  %s0 = inlined_call_operand.vmem [shape: f32[128,27], index: 0, kind: input, shape index: {}]
  %s1 = inlined_call_operand.vmem [shape: f32[2,16], index: 1, kind: input, shape index: {}]
  %s2 = inlined_call_operand.vmem [shape: f32[27,16], index: 2, kind: input, shape index: {}]
  %s3 = inlined_call_operand.vmem [shape: f32[1,16], index: 3, kind: input, shape index: {}]
  %s4 = inlined_call_operand.vmem [shape: f32[16,8], index: 4, kind: input, shape index: {}]
  %s5 = inlined_call_operand.vmem [shape: f32[1,8], index: 5, kind: input, shape index: {}]
  %s6 = inlined_call_operand.vmem [shape: f32[128,16], index: 6, kind: output, shape index: {0}]
  %s7 = inlined_call_operand.vmem [shape: f32[2,8], index: 7, kind: output, shape index: {1}]
  %8 = xla_tuple %s6, %s7
  %s9 = sld [smem:[#allocation0]]
  $region42: #{rt1_forward.7} parent=0
    _
  %s11 = ssub.s32 1, %s9
  %s12 = scalar_select 0, %s11, %s9
  // Predicated region
  $region2: #{rt1_forward.7} parent=0 // pred_check
    _
  $region3: #{rt1_forward.7} parent=0 // pred_check_branch
    %14 = sbr.rel (0) target = $region5
  $region4: #{rt1_forward.7} parent=0 // pred_region
    _
  $region5: #{rt1_forward.7} parent=0 // pred_fallthru
    _
  // Predicated region
  $region6: #{rt1_forward.7} parent=0 // pred_check
    _
  $region7: #{rt1_forward.7} parent=0 // pred_check_branch
    %16 = sbr.rel (0) target = $region9
  $region8: #{rt1_forward.7} parent=0 // pred_region
    _
  $region9: #{rt1_forward.7} parent=0 // pred_fallthru
    _
  // Predicated region
  $region10: #{rt1_forward.7} parent=0 // pred_check
    _
  $region11: #{rt1_forward.7} parent=0 // pred_check_branch
    %18 = sbr.rel (0) target = $region13
  $region12: #{rt1_forward.7} parent=0 // pred_region
    _
  $region13: #{rt1_forward.7} parent=0 // pred_fallthru
    _
  // Predicated region
  $region14: #{rt1_forward.7} parent=0 // pred_check
    _
  $region15: #{rt1_forward.7} parent=0 // pred_check_branch
    %20 = sbr.rel (0) target = $region17
  $region16: #{rt1_forward.7} parent=0 // pred_region
    _
  $region17: #{rt1_forward.7} parent=0 // pred_fallthru
    _
  // Predicated region
  $region18: #{rt1_forward.7} parent=0 // pred_check
    _
  $region19: #{rt1_forward.7} parent=0 // pred_check_branch
    %22 = sbr.rel (0) target = $region21
  $region20: #{rt1_forward.7} parent=0 // pred_region
    _
  $region21: #{rt1_forward.7} parent=0 // pred_fallthru
    _
  // Predicated region
  $region22: #{rt1_forward.7} parent=0 // pred_check
    _
  $region23: #{rt1_forward.7} parent=0 // pred_check_branch
    %24 = sbr.rel (0) target = $region25
  $region24: #{rt1_forward.7} parent=0 // pred_region
    _
  $region25: #{rt1_forward.7} parent=0 // pred_fallthru
    _
  %v26 = vld [vmem:[%s0] sm:$0xff]
  %v27 = vld [vmem:[%s0 + $0x8] sm:$0xff]
  %v28 = vld [vmem:[%s0 + $0x10] sm:$0xff]
  %v29 = vld [vmem:[%s0 + $0x18] sm:$0xff]
  %v30 = vld [vmem:[%s0 + $0x20] sm:$0xff]
  %v31 = vld [vmem:[%s0 + $0x28] sm:$0xff]
  %v32 = vld [vmem:[%s0 + $0x30] sm:$0xff]
  %v33 = vld [vmem:[%s0 + $0x38] sm:$0xff]
  %v34 = vld [vmem:[%s0 + $0x40] sm:$0xff]
  %v35 = vld [vmem:[%s0 + $0x48] sm:$0xff]
  %v36 = vld [vmem:[%s0 + $0x50] sm:$0xff]
  %v37 = vld [vmem:[%s0 + $0x58] sm:$0xff]
  %v38 = vld [vmem:[%s0 + $0x60] sm:$0xff]
  %v39 = vld [vmem:[%s0 + $0x68] sm:$0xff]
  %v40 = vld [vmem:[%s0 + $0x70] sm:$0xff]
  %v41 = vld [vmem:[%s0 + $0x78] sm:$0xff]
  %v42 = vld [vmem:[%s2] sm:$0xff]
  %v43 = vld [vmem:[%s2 + $0x8] sm:$0xff]
  %v44 = vld [vmem:[%s2 + $0x10] sm:$0xff]
  %v45 = vld [vmem:[%s2 + $0x18] sm:$0x7]
  %v46 = vpack.c.bf16 %v27, %v26
  %v47 = vpack.c.bf16 %v29, %v28
  %v48 = vpack.c.bf16 %v31, %v30
  %v49 = vpack.c.bf16 %v33, %v32
  %v50 = vpack.c.bf16 %v35, %v34
  %v51 = vpack.c.bf16 %v37, %v36
  %v52 = vpack.c.bf16 %v39, %v38
  %v53 = vpack.c.bf16 %v41, %v40
  %v54 = vpack.c.bf16 %v43, %v42
  %v55 = vpack.c.bf16 %v45, %v44
  %v56 = vld [vmem:[%s3] sm:$0x1]
  %v58 = vperm.slane %v56, 0
  %vm60 = vcmask 220160
  %v62 = vsel %vm60, %v46, 0
  %v65 = vsel %vm60, %v47, 0
  %v68 = vsel %vm60, %v48, 0
  %v71 = vsel %vm60, %v49, 0
  %v74 = vsel %vm60, %v50, 0
  %v77 = vsel %vm60, %v51, 0
  %v80 = vsel %vm60, %v52, 0
  %v83 = vsel %vm60, %v53, 0
  %vm85 = vcmask 1044480
  %vm86 = vcmask 1045504
  %v87 = vsel %vm85, 4294967295, 65535
  %v88 = vsel %vm86, %v87, 0
  %v90 = vand.u32 %v55, %v88
  %92 = vmatpush.bf16.msra.mxu0 0
  %93 = vmatpush.bf16.msra.mxu0 0
  %94 = vmatpush.bf16.msra.mxu0 0
  %95 = vmatpush.bf16.msra.mxu0 0
  %96 = vmatpush.bf16.msra.mxu0 0
  %97 = vmatpush.bf16.msra.mxu0 0
  %98 = vmatpush.bf16.msra.mxu0 %v90
  %99 = vmatpush.bf16.msra.mxu0 %v54
  %100 = vmatmul.bf16.gmra.mxu0 %v62
  %v101 = vpop.f32.mrf.mxu0
  %v102 = vadd.f32 %v58, %v101
  %v103 = vpop.f32.mrf.mxu0
  %v104 = vadd.f32 %v58, %v103
  %105 = vmatmul.bf16.gmra.mxu0 %v65
  %v106 = vpop.f32.mrf.mxu0
  %v107 = vadd.f32 %v58, %v106
  %v108 = vpop.f32.mrf.mxu0
  %v109 = vadd.f32 %v58, %v108
  %110 = vmatmul.bf16.gmra.mxu0 %v68
  %v111 = vpop.f32.mrf.mxu0
  %v112 = vadd.f32 %v58, %v111
  %v113 = vpop.f32.mrf.mxu0
  %v114 = vadd.f32 %v58, %v113
  %115 = vmatmul.bf16.gmra.mxu0 %v71
  %v116 = vpop.f32.mrf.mxu0
  %v117 = vadd.f32 %v58, %v116
  %v118 = vpop.f32.mrf.mxu0
  %v119 = vadd.f32 %v58, %v118
  %120 = vmatmul.bf16.gmra.mxu0 %v74
  %v121 = vpop.f32.mrf.mxu0
  %v122 = vadd.f32 %v58, %v121
  %v123 = vpop.f32.mrf.mxu0
  %v124 = vadd.f32 %v58, %v123
  %125 = vmatmul.bf16.gmra.mxu0 %v77
  %v126 = vpop.f32.mrf.mxu0
  %v127 = vadd.f32 %v58, %v126
  %v128 = vpop.f32.mrf.mxu0
  %v129 = vadd.f32 %v58, %v128
  %130 = vmatmul.bf16.gmra.mxu0 %v80
  %v131 = vpop.f32.mrf.mxu0
  %v132 = vadd.f32 %v58, %v131
  %v133 = vpop.f32.mrf.mxu0
  %v134 = vadd.f32 %v58, %v133
  %135 = vmatmul.bf16.gmra.mxu0 %v83
  %v136 = vpop.f32.mrf.mxu0
  %v137 = vadd.f32 %v58, %v136
  %v138 = vpop.f32.mrf.mxu0
  %v139 = vadd.f32 %v58, %v138
  %140 = vdwg.mxu0
  %v141 = vxor.u32 %v102, 2147483648
  %v142 = vxor.u32 %v104, 2147483648
  %v143 = vxor.u32 %v107, 2147483648
  %v144 = vxor.u32 %v109, 2147483648
  %v145 = vxor.u32 %v112, 2147483648
  %v146 = vxor.u32 %v114, 2147483648
  %v147 = vxor.u32 %v117, 2147483648
  %v148 = vxor.u32 %v119, 2147483648
  %v149 = vxor.u32 %v122, 2147483648
  %v150 = vxor.u32 %v124, 2147483648
  %v151 = vxor.u32 %v127, 2147483648
  %v152 = vxor.u32 %v129, 2147483648
  %v153 = vxor.u32 %v132, 2147483648
  %v154 = vxor.u32 %v134, 2147483648
  %v155 = vxor.u32 %v137, 2147483648
  %v156 = vxor.u32 %v139, 2147483648
  %v157 = vmul.f32 %v141, 1.442695
  %v158 = vpow.pop %v157
  %v159 = vmul.f32 %v142, 1.442695
  %v160 = vpow.pop %v159
  %v161 = vmul.f32 %v143, 1.442695
  %v162 = vpow.pop %v161
  %v163 = vmul.f32 %v144, 1.442695
  %v164 = vpow.pop %v163
  %v165 = vmul.f32 %v145, 1.442695
  %v166 = vpow.pop %v165
  %v167 = vmul.f32 %v146, 1.442695
  %v168 = vpow.pop %v167
  %v169 = vmul.f32 %v147, 1.442695
  %v170 = vpow.pop %v169
  %v171 = vmul.f32 %v148, 1.442695
  %v172 = vpow.pop %v171
  %v173 = vmul.f32 %v149, 1.442695
  %v174 = vpow.pop %v173
  %v175 = vmul.f32 %v150, 1.442695
  %v176 = vpow.pop %v175
  %v177 = vmul.f32 %v151, 1.442695
  %v178 = vpow.pop %v177
  %v179 = vmul.f32 %v152, 1.442695
  %v180 = vpow.pop %v179
  %v181 = vmul.f32 %v153, 1.442695
  %v182 = vpow.pop %v181
  %v183 = vmul.f32 %v154, 1.442695
  %v184 = vpow.pop %v183
  %v185 = vmul.f32 %v155, 1.442695
  %v186 = vpow.pop %v185
  %v187 = vmul.f32 %v156, 1.442695
  %v188 = vpow.pop %v187
  %v189 = vadd.f32 %v158, 1.0
  %v190 = vadd.f32 %v160, 1.0
  %v191 = vadd.f32 %v162, 1.0
  %v192 = vadd.f32 %v164, 1.0
  %v193 = vadd.f32 %v166, 1.0
  %v194 = vadd.f32 %v168, 1.0
  %v195 = vadd.f32 %v170, 1.0
  %v196 = vadd.f32 %v172, 1.0
  %v197 = vadd.f32 %v174, 1.0
  %v198 = vadd.f32 %v176, 1.0
  %v199 = vadd.f32 %v178, 1.0
  %v200 = vadd.f32 %v180, 1.0
  %v201 = vadd.f32 %v182, 1.0
  %v202 = vadd.f32 %v184, 1.0
  %v203 = vadd.f32 %v186, 1.0
  %v204 = vadd.f32 %v188, 1.0
  %v205 = vrcp.pop %v189
  %v206 = vmul.f32 %v189, %v205
  %v207 = vsub.f32 1.0, %v206
  %v208 = vmul.f32 %v205, %v207
  %v209 = vadd.f32 %v205, %v208
  %vm210 = vweird.f32 %v189
  %vm211 = vweird.f32 %v205
  %vm212 = vmor %vm210, %vm211
  %v213 = vsel %vm212, %v205, %v209
  %v214 = vand.u32 2147483647, %v189
  %vm215 = vcmp.eq.f32.partialorder %v214, 8.507059e+37
  %v216 = vand.u32 %v189, 2147483648
  %v217 = vor.u32 1.1754944e-38, %v216
  %v218 = vsel %vm215, %v217, %v213
  %v219 = vmul.f32 1.0, %v218
  %v220 = vrcp.pop %v190
  %v221 = vmul.f32 %v190, %v220
  %v222 = vsub.f32 1.0, %v221
  %v223 = vmul.f32 %v220, %v222
  %v224 = vadd.f32 %v220, %v223
  %vm225 = vweird.f32 %v190
  %vm226 = vweird.f32 %v220
  %vm227 = vmor %vm225, %vm226
  %v228 = vsel %vm227, %v220, %v224
  %v229 = vand.u32 2147483647, %v190
  %vm230 = vcmp.eq.f32.partialorder %v229, 8.507059e+37
  %v231 = vand.u32 %v190, 2147483648
  %v232 = vor.u32 1.1754944e-38, %v231
  %v233 = vsel %vm230, %v232, %v228
  %v234 = vmul.f32 1.0, %v233
  %v235 = vrcp.pop %v191
  %v236 = vmul.f32 %v191, %v235
  %v237 = vsub.f32 1.0, %v236
  %v238 = vmul.f32 %v235, %v237
  %v239 = vadd.f32 %v235, %v238
  %vm240 = vweird.f32 %v191
  %vm241 = vweird.f32 %v235
  %vm242 = vmor %vm240, %vm241
  %v243 = vsel %vm242, %v235, %v239
  %v244 = vand.u32 2147483647, %v191
  %vm245 = vcmp.eq.f32.partialorder %v244, 8.507059e+37
  %v246 = vand.u32 %v191, 2147483648
  %v247 = vor.u32 1.1754944e-38, %v246
  %v248 = vsel %vm245, %v247, %v243
  %v249 = vmul.f32 1.0, %v248
  %v250 = vrcp.pop %v192
  %v251 = vmul.f32 %v192, %v250
  %v252 = vsub.f32 1.0, %v251
  %v253 = vmul.f32 %v250, %v252
  %v254 = vadd.f32 %v250, %v253
  %vm255 = vweird.f32 %v192
  %vm256 = vweird.f32 %v250
  %vm257 = vmor %vm255, %vm256
  %v258 = vsel %vm257, %v250, %v254
  %v259 = vand.u32 2147483647, %v192
  %vm260 = vcmp.eq.f32.partialorder %v259, 8.507059e+37
  %v261 = vand.u32 %v192, 2147483648
  %v262 = vor.u32 1.1754944e-38, %v261
  %v263 = vsel %vm260, %v262, %v258
  %v264 = vmul.f32 1.0, %v263
  %v265 = vrcp.pop %v193
  %v266 = vmul.f32 %v193, %v265
  %v267 = vsub.f32 1.0, %v266
  %v268 = vmul.f32 %v265, %v267
  %v269 = vadd.f32 %v265, %v268
  %vm270 = vweird.f32 %v193
  %vm271 = vweird.f32 %v265
  %vm272 = vmor %vm270, %vm271
  %v273 = vsel %vm272, %v265, %v269
  %v274 = vand.u32 2147483647, %v193
  %vm275 = vcmp.eq.f32.partialorder %v274, 8.507059e+37
  %v276 = vand.u32 %v193, 2147483648
  %v277 = vor.u32 1.1754944e-38, %v276
  %v278 = vsel %vm275, %v277, %v273
  %v279 = vmul.f32 1.0, %v278
  %v280 = vrcp.pop %v194
  %v281 = vmul.f32 %v194, %v280
  %v282 = vsub.f32 1.0, %v281
  %v283 = vmul.f32 %v280, %v282
  %v284 = vadd.f32 %v280, %v283
  %vm285 = vweird.f32 %v194
  %vm286 = vweird.f32 %v280
  %vm287 = vmor %vm285, %vm286
  %v288 = vsel %vm287, %v280, %v284
  %v289 = vand.u32 2147483647, %v194
  %vm290 = vcmp.eq.f32.partialorder %v289, 8.507059e+37
  %v291 = vand.u32 %v194, 2147483648
  %v292 = vor.u32 1.1754944e-38, %v291
  %v293 = vsel %vm290, %v292, %v288
  %v294 = vmul.f32 1.0, %v293
  %v295 = vrcp.pop %v195
  %v296 = vmul.f32 %v195, %v295
  %v297 = vsub.f32 1.0, %v296
  %v298 = vmul.f32 %v295, %v297
  %v299 = vadd.f32 %v295, %v298
  %vm300 = vweird.f32 %v195
  %vm301 = vweird.f32 %v295
  %vm302 = vmor %vm300, %vm301
  %v303 = vsel %vm302, %v295, %v299
  %v304 = vand.u32 2147483647, %v195
  %vm305 = vcmp.eq.f32.partialorder %v304, 8.507059e+37
  %v306 = vand.u32 %v195, 2147483648
  %v307 = vor.u32 1.1754944e-38, %v306
  %v308 = vsel %vm305, %v307, %v303
  %v309 = vmul.f32 1.0, %v308
  %v310 = vrcp.pop %v196
  %v311 = vmul.f32 %v196, %v310
  %v312 = vsub.f32 1.0, %v311
  %v313 = vmul.f32 %v310, %v312
  %v314 = vadd.f32 %v310, %v313
  %vm315 = vweird.f32 %v196
  %vm316 = vweird.f32 %v310
  %vm317 = vmor %vm315, %vm316
  %v318 = vsel %vm317, %v310, %v314
  %v319 = vand.u32 2147483647, %v196
  %vm320 = vcmp.eq.f32.partialorder %v319, 8.507059e+37
  %v321 = vand.u32 %v196, 2147483648
  %v322 = vor.u32 1.1754944e-38, %v321
  %v323 = vsel %vm320, %v322, %v318
  %v324 = vmul.f32 1.0, %v323
  %v325 = vrcp.pop %v197
  %v326 = vmul.f32 %v197, %v325
  %v327 = vsub.f32 1.0, %v326
  %v328 = vmul.f32 %v325, %v327
  %v329 = vadd.f32 %v325, %v328
  %vm330 = vweird.f32 %v197
  %vm331 = vweird.f32 %v325
  %vm332 = vmor %vm330, %vm331
  %v333 = vsel %vm332, %v325, %v329
  %v334 = vand.u32 2147483647, %v197
  %vm335 = vcmp.eq.f32.partialorder %v334, 8.507059e+37
  %v336 = vand.u32 %v197, 2147483648
  %v337 = vor.u32 1.1754944e-38, %v336
  %v338 = vsel %vm335, %v337, %v333
  %v339 = vmul.f32 1.0, %v338
  %v340 = vrcp.pop %v198
  %v341 = vmul.f32 %v198, %v340
  %v342 = vsub.f32 1.0, %v341
  %v343 = vmul.f32 %v340, %v342
  %v344 = vadd.f32 %v340, %v343
  %vm345 = vweird.f32 %v198
  %vm346 = vweird.f32 %v340
  %vm347 = vmor %vm345, %vm346
  %v348 = vsel %vm347, %v340, %v344
  %v349 = vand.u32 2147483647, %v198
  %vm350 = vcmp.eq.f32.partialorder %v349, 8.507059e+37
  %v351 = vand.u32 %v198, 2147483648
  %v352 = vor.u32 1.1754944e-38, %v351
  %v353 = vsel %vm350, %v352, %v348
  %v354 = vmul.f32 1.0, %v353
  %v355 = vrcp.pop %v199
  %v356 = vmul.f32 %v199, %v355
  %v357 = vsub.f32 1.0, %v356
  %v358 = vmul.f32 %v355, %v357
  %v359 = vadd.f32 %v355, %v358
  %vm360 = vweird.f32 %v199
  %vm361 = vweird.f32 %v355
  %vm362 = vmor %vm360, %vm361
  %v363 = vsel %vm362, %v355, %v359
  %v364 = vand.u32 2147483647, %v199
  %vm365 = vcmp.eq.f32.partialorder %v364, 8.507059e+37
  %v366 = vand.u32 %v199, 2147483648
  %v367 = vor.u32 1.1754944e-38, %v366
  %v368 = vsel %vm365, %v367, %v363
  %v369 = vmul.f32 1.0, %v368
  %v370 = vrcp.pop %v200
  %v371 = vmul.f32 %v200, %v370
  %v372 = vsub.f32 1.0, %v371
  %v373 = vmul.f32 %v370, %v372
  %v374 = vadd.f32 %v370, %v373
  %vm375 = vweird.f32 %v200
  %vm376 = vweird.f32 %v370
  %vm377 = vmor %vm375, %vm376
  %v378 = vsel %vm377, %v370, %v374
  %v379 = vand.u32 2147483647, %v200
  %vm380 = vcmp.eq.f32.partialorder %v379, 8.507059e+37
  %v381 = vand.u32 %v200, 2147483648
  %v382 = vor.u32 1.1754944e-38, %v381
  %v383 = vsel %vm380, %v382, %v378
  %v384 = vmul.f32 1.0, %v383
  %v385 = vrcp.pop %v201
  %v386 = vmul.f32 %v201, %v385
  %v387 = vsub.f32 1.0, %v386
  %v388 = vmul.f32 %v385, %v387
  %v389 = vadd.f32 %v385, %v388
  %vm390 = vweird.f32 %v201
  %vm391 = vweird.f32 %v385
  %vm392 = vmor %vm390, %vm391
  %v393 = vsel %vm392, %v385, %v389
  %v394 = vand.u32 2147483647, %v201
  %vm395 = vcmp.eq.f32.partialorder %v394, 8.507059e+37
  %v396 = vand.u32 %v201, 2147483648
  %v397 = vor.u32 1.1754944e-38, %v396
  %v398 = vsel %vm395, %v397, %v393
  %v399 = vmul.f32 1.0, %v398
  %v400 = vrcp.pop %v202
  %v401 = vmul.f32 %v202, %v400
  %v402 = vsub.f32 1.0, %v401
  %v403 = vmul.f32 %v400, %v402
  %v404 = vadd.f32 %v400, %v403
  %vm405 = vweird.f32 %v202
  %vm406 = vweird.f32 %v400
  %vm407 = vmor %vm405, %vm406
  %v408 = vsel %vm407, %v400, %v404
  %v409 = vand.u32 2147483647, %v202
  %vm410 = vcmp.eq.f32.partialorder %v409, 8.507059e+37
  %v411 = vand.u32 %v202, 2147483648
  %v412 = vor.u32 1.1754944e-38, %v411
  %v413 = vsel %vm410, %v412, %v408
  %v414 = vmul.f32 1.0, %v413
  %v415 = vrcp.pop %v203
  %v416 = vmul.f32 %v203, %v415
  %v417 = vsub.f32 1.0, %v416
  %v418 = vmul.f32 %v415, %v417
  %v419 = vadd.f32 %v415, %v418
  %vm420 = vweird.f32 %v203
  %vm421 = vweird.f32 %v415
  %vm422 = vmor %vm420, %vm421
  %v423 = vsel %vm422, %v415, %v419
  %v424 = vand.u32 2147483647, %v203
  %vm425 = vcmp.eq.f32.partialorder %v424, 8.507059e+37
  %v426 = vand.u32 %v203, 2147483648
  %v427 = vor.u32 1.1754944e-38, %v426
  %v428 = vsel %vm425, %v427, %v423
  %v429 = vmul.f32 1.0, %v428
  %v430 = vrcp.pop %v204
  %v431 = vmul.f32 %v204, %v430
  %v432 = vsub.f32 1.0, %v431
  %v433 = vmul.f32 %v430, %v432
  %v434 = vadd.f32 %v430, %v433
  %vm435 = vweird.f32 %v204
  %vm436 = vweird.f32 %v430
  %vm437 = vmor %vm435, %vm436
  %v438 = vsel %vm437, %v430, %v434
  %v439 = vand.u32 2147483647, %v204
  %vm440 = vcmp.eq.f32.partialorder %v439, 8.507059e+37
  %v441 = vand.u32 %v204, 2147483648
  %v442 = vor.u32 1.1754944e-38, %v441
  %v443 = vsel %vm440, %v442, %v438
  %v444 = vmul.f32 1.0, %v443
  %v445 = vmul.f32 %v102, %v219
  %v446 = vmul.f32 %v104, %v234
  %v447 = vmul.f32 %v107, %v249
  %v448 = vmul.f32 %v109, %v264
  %v449 = vmul.f32 %v112, %v279
  %v450 = vmul.f32 %v114, %v294
  %v451 = vmul.f32 %v117, %v309
  %v452 = vmul.f32 %v119, %v324
  %v453 = vmul.f32 %v122, %v339
  %v454 = vmul.f32 %v124, %v354
  %v455 = vmul.f32 %v127, %v369
  %v456 = vmul.f32 %v129, %v384
  %v457 = vmul.f32 %v132, %v399
  %v458 = vmul.f32 %v134, %v414
  %v459 = vmul.f32 %v137, %v429
  %v460 = vmul.f32 %v139, %v444
  %vm461 = vcmask 130048
  %462 = vst.msk [vmem:[%s6] sm:$0xff] %vm461, %v445
  %463 = vst.msk [vmem:[%s6 + $0x8] sm:$0xff] %vm461, %v446
  %464 = vst.msk [vmem:[%s6 + $0x10] sm:$0xff] %vm461, %v447
  %465 = vst.msk [vmem:[%s6 + $0x18] sm:$0xff] %vm461, %v448
  %466 = vst.msk [vmem:[%s6 + $0x20] sm:$0xff] %vm461, %v449
  %467 = vst.msk [vmem:[%s6 + $0x28] sm:$0xff] %vm461, %v450
  %468 = vst.msk [vmem:[%s6 + $0x30] sm:$0xff] %vm461, %v451
  %469 = vst.msk [vmem:[%s6 + $0x38] sm:$0xff] %vm461, %v452
  %470 = vst.msk [vmem:[%s6 + $0x40] sm:$0xff] %vm461, %v453
  %471 = vst.msk [vmem:[%s6 + $0x48] sm:$0xff] %vm461, %v454
  %472 = vst.msk [vmem:[%s6 + $0x50] sm:$0xff] %vm461, %v455
  %473 = vst.msk [vmem:[%s6 + $0x58] sm:$0xff] %vm461, %v456
  %474 = vst.msk [vmem:[%s6 + $0x60] sm:$0xff] %vm461, %v457
  %475 = vst.msk [vmem:[%s6 + $0x68] sm:$0xff] %vm461, %v458
  %476 = vst.msk [vmem:[%s6 + $0x70] sm:$0xff] %vm461, %v459
  %477 = vst.msk [vmem:[%s6 + $0x78] sm:$0xff] %vm461, %v460
  %v478 = vld [vmem:[%s1] sm:$0x3]
  %v479 = vld [vmem:[%s4] sm:$0xff]
  %v480 = vld [vmem:[%s4 + $0x8] sm:$0xff]
  %v481 = vpack.c.bf16 %v478, %v478
  %v482 = vpack.c.bf16 %v480, %v479
  %v483 = vld [vmem:[%s5] sm:$0x1]
  %v485 = vperm.slane %v483, 0
  %v488 = vsel %vm461, %v481, 0
  %490 = vmatpush.bf16.msra.mxu0 0
  %491 = vmatpush.bf16.msra.mxu0 0
  %492 = vmatpush.bf16.msra.mxu0 0
  %493 = vmatpush.bf16.msra.mxu0 0
  %494 = vmatpush.bf16.msra.mxu0 0
  %495 = vmatpush.bf16.msra.mxu0 0
  %496 = vmatpush.bf16.msra.mxu0 0
  %497 = vmatpush.bf16.msra.mxu0 %v482
  %498 = vmatmul.bf16.gmra.mxu0 %v488
  %v499 = vpop.f32.mrf.mxu0
  %v500 = vadd.f32 %v485, %v499
  %v501 = vpop.f32.mrf.mxu0
  %502 = vdwg.mxu0
  %v503 = vmul.f32 %v500, %v500
  %v504 = vmul.f32 %v500, %v503
  %v505 = vmul.f32 %v504, 0.044715
  %v506 = vadd.f32 %v500, %v505
  %v507 = vmul.f32 %v506, 0.7978846
  %v508 = vtanh.pop %v507
  %v509 = vadd.f32 %v508, 1.0
  %v510 = vmul.f32 %v509, 0.5
  %v511 = vmul.f32 %v500, %v510
  %vm512 = vcmask 58368
  %513 = vst.msk [vmem:[%s7] sm:$0x3] %vm512, %v511
  // Predicated region
  $region26: #{rt1_forward.7} parent=0 // pred_check
    _
  $region27: #{rt1_forward.7} parent=0 // pred_check_branch
    %515 = sbr.rel (0) target = $region29
  $region28: #{rt1_forward.7} parent=0 // pred_region
    _
  $region29: #{rt1_forward.7} parent=0 // pred_fallthru
    _
  // Predicated region
  $region30: #{rt1_forward.7} parent=0 // pred_check
    _
  $region31: #{rt1_forward.7} parent=0 // pred_check_branch
    %517 = sbr.rel (0) target = $region33
  $region32: #{rt1_forward.7} parent=0 // pred_region
    _
  $region33: #{rt1_forward.7} parent=0 // pred_fallthru
    _
  // Predicated region
  $region34: #{rt1_forward.7} parent=0 // pred_check
    _
  $region35: #{rt1_forward.7} parent=0 // pred_check_branch
    %519 = sbr.rel (0) target = $region37
  $region36: #{rt1_forward.7} parent=0 // pred_region
    _
  $region37: #{rt1_forward.7} parent=0 // pred_fallthru
    _
  // Predicated region
  $region38: #{rt1_forward.7} parent=0 // pred_check
    _
  $region39: #{rt1_forward.7} parent=0 // pred_check_branch
    %521 = sbr.rel (0) target = $region41
  $region40: #{rt1_forward.7} parent=0 // pred_region
    _
  $region41: #{rt1_forward.7} parent=0 // pred_fallthru
    _

// kernel: rt1_forward.10
$region0: #{rt1_forward.10}
  #allocation0 [shape = 'u32[]', space=smem, size = 0x4, offset = 0x4, fixed_abs, tag = 'smem constant byte address 0x4 - core index']
  #allocation1 [shape = 'u32[72,128]{1,0:T(1,128)}', space=vmem, size = 0x9000, scoped, tag = 'internal scratch']
  %s0 = inlined_call_operand.vmem [shape: f32[128,16], index: 0, kind: input, shape index: {}]
  %s1 = inlined_call_operand.vmem [shape: f32[16,48], index: 1, kind: input, shape index: {}]
  %s2 = inlined_call_operand.vmem [shape: f32[1,48], index: 2, kind: input, shape index: {}]
  %s3 = inlined_call_operand.vmem [shape: f32[48,32], index: 3, kind: input, shape index: {}]
  %s4 = inlined_call_operand.vmem [shape: f32[1,32], index: 4, kind: input, shape index: {}]
  %s5 = inlined_call_operand.vmem [shape: f32[32,8], index: 5, kind: input, shape index: {}]
  %s6 = inlined_call_operand.vmem [shape: f32[2,8,32], index: 6, kind: output, shape index: {}]
  %s7 = sld [smem:[#allocation0]]
  $region57: #{rt1_forward.10} parent=0
    _
  %s9 = ssub.s32 1, %s7
  %s10 = scalar_select 0, %s9, %s7
  loop: start=0, step=1, limit=4
  $region2: #{rt1_forward.10} parent=0 // loop_pre_header
    _
  $region3: #{rt1_forward.10} parent=0 // loop_header
    %s12 = sphi 0, %s16
    %p13 = scmp.ge.s32.totalorder %s12, 4
    %s22 = sphi 0, %s24
    %s25 = sphi 0, %s22
    %s26 = sphi 0, %s25
    %s42 = sphi 0, %s26
    %s46 = sphi 0, %s46
    %s48 = sphi 0, %s46
    %s49 = sphi 0, %s48
    %s63 = sphi 0, %s49
    %s67 = sphi 0, %s67
    %s69 = sphi 0, %s67
    %s70 = sphi 0, %s69
    %s84 = sphi 0, %s70
    %s88 = sphi 0, %s88
    %s90 = sphi 0, %s88
    %s91 = sphi 0, %s90
    %s105 = sphi 0, %s91
    %s109 = sphi 0, %s109
    %s111 = sphi 0, %s109
    %s112 = sphi 0, %s111
    %s126 = sphi 0, %s112
    %s130 = sphi 0, %s130
    %s132 = sphi 0, %s130
    %s133 = sphi 0, %s132
    %s147 = sphi 0, %s133
    %s153 = sphi 0, %s155
    %s156 = sphi 0, %s153
    %s157 = sphi 0, %s156
    %s173 = sphi 0, %s157
  $region4: #{rt1_forward.10} parent=0 // loop_header_branch
    %15 = sbr.rel (%p13) target = $region8
  $region5: #{rt1_forward.10} parent=0 // loop_body
    %s17 = ssub.s32 %s12, 1
    %s18 = ssub.s32 %s12, 2
    %s19 = sadd.s32 %s12, 1
    %s20 = ssub.s32 %s12, %s19
    %p21 = scmp.eq.s32.totalorder %s20, 0
    %s23 = sadd.s32 %s22, 1
    %s24 = scalar_select %p21, %s22, %s23
    %p27 = pneg %p21
    %p28 = scmp.eq.s32.totalorder %s12, 1
    %p29 = por %p27, %p28
    %p30 = scmp.ne.s32.totalorder %s22, %s25
    %p31 = scmp.eq.s32.totalorder %s12, 0
    %p32 = por %p30, %p31
    %p33 = scmp.ne.s32.totalorder %s22, %s25
    %p34 = scmp.eq.s32.totalorder %s17, 1
    %p35 = por %p33, %p34
    %p36 = scmp.ne.s32.totalorder %s25, %s26
    %p37 = scmp.eq.s32.totalorder %s17, 0
    %p38 = por %p36, %p37
    %p39 = scmp.ne.s32.totalorder %s25, %s26
    %p40 = scmp.eq.s32.totalorder %s18, 1
    %p41 = por %p39, %p40
    %p43 = scmp.ne.s32.totalorder %s26, %s42
    %p44 = scmp.eq.s32.totalorder %s18, 0
    %p45 = por %p43, %p44
    %s47 = sadd.s32 %s46, 1
    %p50 = scmp.eq.s32.totalorder %s12, 1
    %p51 = scmp.ne.s32.totalorder %s46, %s48
    %p52 = scmp.eq.s32.totalorder %s12, 0
    %p53 = por %p51, %p52
    %p54 = scmp.ne.s32.totalorder %s46, %s48
    %p55 = scmp.eq.s32.totalorder %s17, 1
    %p56 = por %p54, %p55
    %p57 = scmp.ne.s32.totalorder %s48, %s49
    %p58 = scmp.eq.s32.totalorder %s17, 0
    %p59 = por %p57, %p58
    %p60 = scmp.ne.s32.totalorder %s48, %s49
    %p61 = scmp.eq.s32.totalorder %s18, 1
    %p62 = por %p60, %p61
    %p64 = scmp.ne.s32.totalorder %s49, %s63
    %p65 = scmp.eq.s32.totalorder %s18, 0
    %p66 = por %p64, %p65
    %s68 = sadd.s32 %s67, 1
    %p71 = scmp.eq.s32.totalorder %s12, 1
    %p72 = scmp.ne.s32.totalorder %s67, %s69
    %p73 = scmp.eq.s32.totalorder %s12, 0
    %p74 = por %p72, %p73
    %p75 = scmp.ne.s32.totalorder %s67, %s69
    %p76 = scmp.eq.s32.totalorder %s17, 1
    %p77 = por %p75, %p76
    %p78 = scmp.ne.s32.totalorder %s69, %s70
    %p79 = scmp.eq.s32.totalorder %s17, 0
    %p80 = por %p78, %p79
    %p81 = scmp.ne.s32.totalorder %s69, %s70
    %p82 = scmp.eq.s32.totalorder %s18, 1
    %p83 = por %p81, %p82
    %p85 = scmp.ne.s32.totalorder %s70, %s84
    %p86 = scmp.eq.s32.totalorder %s18, 0
    %p87 = por %p85, %p86
    %s89 = sadd.s32 %s88, 1
    %p92 = scmp.eq.s32.totalorder %s12, 1
    %p93 = scmp.ne.s32.totalorder %s88, %s90
    %p94 = scmp.eq.s32.totalorder %s12, 0
    %p95 = por %p93, %p94
    %p96 = scmp.ne.s32.totalorder %s88, %s90
    %p97 = scmp.eq.s32.totalorder %s17, 1
    %p98 = por %p96, %p97
    %p99 = scmp.ne.s32.totalorder %s90, %s91
    %p100 = scmp.eq.s32.totalorder %s17, 0
    %p101 = por %p99, %p100
    %p102 = scmp.ne.s32.totalorder %s90, %s91
    %p103 = scmp.eq.s32.totalorder %s18, 1
    %p104 = por %p102, %p103
    %p106 = scmp.ne.s32.totalorder %s91, %s105
    %p107 = scmp.eq.s32.totalorder %s18, 0
    %p108 = por %p106, %p107
    %s110 = sadd.s32 %s109, 1
    %p113 = scmp.eq.s32.totalorder %s12, 1
    %p114 = scmp.ne.s32.totalorder %s109, %s111
    %p115 = scmp.eq.s32.totalorder %s12, 0
    %p116 = por %p114, %p115
    %p117 = scmp.ne.s32.totalorder %s109, %s111
    %p118 = scmp.eq.s32.totalorder %s17, 1
    %p119 = por %p117, %p118
    %p120 = scmp.ne.s32.totalorder %s111, %s112
    %p121 = scmp.eq.s32.totalorder %s17, 0
    %p122 = por %p120, %p121
    %p123 = scmp.ne.s32.totalorder %s111, %s112
    %p124 = scmp.eq.s32.totalorder %s18, 1
    %p125 = por %p123, %p124
    %p127 = scmp.ne.s32.totalorder %s112, %s126
    %p128 = scmp.eq.s32.totalorder %s18, 0
    %p129 = por %p127, %p128
    %s131 = sadd.s32 %s130, 1
    %p134 = scmp.eq.s32.totalorder %s12, 1
    %p135 = scmp.ne.s32.totalorder %s130, %s132
    %p136 = scmp.eq.s32.totalorder %s12, 0
    %p137 = por %p135, %p136
    %p138 = scmp.ne.s32.totalorder %s130, %s132
    %p139 = scmp.eq.s32.totalorder %s17, 1
    %p140 = por %p138, %p139
    %p141 = scmp.ne.s32.totalorder %s132, %s133
    %p142 = scmp.eq.s32.totalorder %s17, 0
    %p143 = por %p141, %p142
    %p144 = scmp.ne.s32.totalorder %s132, %s133
    %p145 = scmp.eq.s32.totalorder %s18, 1
    %p146 = por %p144, %p145
    %p148 = scmp.ne.s32.totalorder %s133, %s147
    %p149 = scmp.eq.s32.totalorder %s18, 0
    %p150 = por %p148, %p149
    %s151 = ssub.s32 %s12, %s19
    %p152 = scmp.eq.s32.totalorder %s151, 0
    %s154 = sadd.s32 %s153, 1
    %s155 = scalar_select %p152, %s153, %s154
    %p158 = pneg %p152
    %p159 = scmp.eq.s32.totalorder %s12, 1
    %p160 = por %p158, %p159
    %p161 = scmp.ne.s32.totalorder %s153, %s156
    %p162 = scmp.eq.s32.totalorder %s12, 0
    %p163 = por %p161, %p162
    %p164 = scmp.ne.s32.totalorder %s153, %s156
    %p165 = scmp.eq.s32.totalorder %s17, 1
    %p166 = por %p164, %p165
    %p167 = scmp.ne.s32.totalorder %s156, %s157
    %p168 = scmp.eq.s32.totalorder %s17, 0
    %p169 = por %p167, %p168
    %p170 = scmp.ne.s32.totalorder %s156, %s157
    %p171 = scmp.eq.s32.totalorder %s18, 1
    %p172 = por %p170, %p171
    %p174 = scmp.ne.s32.totalorder %s157, %s173
    %p175 = scmp.eq.s32.totalorder %s18, 0
    %p176 = por %p174, %p175
    %p177 = scmp.le.s32.totalorder 1, %s12
    %p178 = scmp.lt.s32.totalorder %s12, 3
    %p179 = pnand %p177, %p178
    %p180 = pneg %p179
    // Predicated region
    $region9: #{rt1_forward.10} parent=5 // pred_check
      _
    $region10: #{rt1_forward.10} parent=5 // pred_check_branch
      %182 = sbr.rel (%p179) target = $region12
    $region11: #{rt1_forward.10} parent=5 // pred_region
      %s183 = ssub.s32 %s12, 1
      // Predicated region
      $region13: #{rt1_forward.10} parent=11 // pred_check
        %p184 = pneg %p59
      $region14: #{rt1_forward.10} parent=11 // pred_check_branch
        %186 = sbr.rel (%p184) target = $region16
      $region15: #{rt1_forward.10} parent=11 // pred_region
        _
      $region16: #{rt1_forward.10} parent=11 // pred_fallthru
        _
      // Predicated region
      $region17: #{rt1_forward.10} parent=11 // pred_check
        %p187 = pneg %p80
      $region18: #{rt1_forward.10} parent=11 // pred_check_branch
        %189 = sbr.rel (%p187) target = $region20
      $region19: #{rt1_forward.10} parent=11 // pred_region
        _
      $region20: #{rt1_forward.10} parent=11 // pred_fallthru
        _
      // Predicated region
      $region21: #{rt1_forward.10} parent=11 // pred_check
        %p190 = pneg %p101
      $region22: #{rt1_forward.10} parent=11 // pred_check_branch
        %192 = sbr.rel (%p190) target = $region24
      $region23: #{rt1_forward.10} parent=11 // pred_region
        _
      $region24: #{rt1_forward.10} parent=11 // pred_fallthru
        _
      // Predicated region
      $region25: #{rt1_forward.10} parent=11 // pred_check
        %p193 = pneg %p122
      $region26: #{rt1_forward.10} parent=11 // pred_check_branch
        %195 = sbr.rel (%p193) target = $region28
      $region27: #{rt1_forward.10} parent=11 // pred_region
        _
      $region28: #{rt1_forward.10} parent=11 // pred_fallthru
        _
      // Predicated region
      $region29: #{rt1_forward.10} parent=11 // pred_check
        %p196 = pneg %p143
      $region30: #{rt1_forward.10} parent=11 // pred_check_branch
        %198 = sbr.rel (%p196) target = $region32
      $region31: #{rt1_forward.10} parent=11 // pred_region
        _
      $region32: #{rt1_forward.10} parent=11 // pred_fallthru
        _
    $region12: #{rt1_forward.10} parent=5 // pred_fallthru
      _
    %p199 = scmp.lt.s32.totalorder %s12, 2
    // Predicated region
    $region33: #{rt1_forward.10} parent=5 // pred_check
      %p200 = pneg %p199
    $region34: #{rt1_forward.10} parent=5 // pred_check_branch
      %202 = sbr.rel (%p200) target = $region36
    $region35: #{rt1_forward.10} parent=5 // pred_region
      // Predicated region
      $region37: #{rt1_forward.10} parent=35 // pred_check
        %p203 = pneg %p32
      $region38: #{rt1_forward.10} parent=35 // pred_check_branch
        %205 = sbr.rel (%p203) target = $region40
      $region39: #{rt1_forward.10} parent=35 // pred_region
        %s206 = smul.u32 8, %s12
        %p207 = scmp.lt.s32.totalorder %s206, 15
        %s208 = scalar_select %p207, %s206, 15
        %s209 = smul.addr %s208, 8
        %s210 = scalar_lea.vmem %s0, %s209
        %s211 = smul.u32 8, %s12
      $region40: #{rt1_forward.10} parent=35 // pred_fallthru
        _
    $region36: #{rt1_forward.10} parent=5 // pred_fallthru
      _
    %p212 = scmp.le.s32.totalorder 1, %s12
    %p213 = scmp.lt.s32.totalorder %s12, 3
    %p214 = pnand %p212, %p213
    %p215 = pneg %p214
    // Predicated region
    $region41: #{rt1_forward.10} parent=5 // pred_check
      _
    $region42: #{rt1_forward.10} parent=5 // pred_check_branch
      %217 = sbr.rel (%p214) target = $region44
    $region43: #{rt1_forward.10} parent=5 // pred_region
      %s218 = ssub.s32 %s12, 1
      %s219 = smul.u32 8, %s17
      %p220 = scmp.lt.s32.totalorder %s219, 15
      %s221 = scalar_select %p220, %s219, 15
      %s222 = smul.addr %s221, 8
      %s223 = scalar_lea.vmem %s0, %s222
      %p224 = pneg %p38
      %p225 = pneg %p35
      %p226 = pneg %p59
      %p227 = pneg %p56
      %p228 = pneg %p80
      %p229 = pneg %p77
      %p230 = pneg %p101
      %p231 = pneg %p98
      %p232 = pneg %p122
      %p233 = pneg %p119
      %p234 = pneg %p143
      %p235 = pneg %p140
      %p236 = pneg %p169
      %p237 = pneg %p166
      %p238 = scmp.lt.s32.totalorder %s17, 1
      %s239 = scalar_select %p238, %s17, 1
      %s240 = smul.addr %s239, 8
      %s241 = scalar_lea.vmem %s6, %s240
      %s242 = smul.u32 8, %s17
      %p243 = scmp.lt.s32.totalorder %s242, 15
      %s244 = scalar_select %p243, %s242, 15
      %s245 = smul.addr %s244, 8
      %s246 = scalar_lea.vmem %s0, %s245
      %s247 = smul.u32 8, %s17
      %p248 = scmp.lt.s32.totalorder %s17, 1
      %s249 = scalar_select %p248, %s17, 1
      %s250 = smul.addr %s249, 8
      %s251 = scalar_lea.vmem %s6, %s250
      %v253 = vld [vmem:[%s246] sm:$0xff]
      %v254 = vld [vmem:[%s246 + $0x8] sm:$0xff]
      %v255 = vld [vmem:[%s246 + $0x10] sm:$0xff]
      %v256 = vld [vmem:[%s246 + $0x18] sm:$0xff]
      %v257 = vld [vmem:[%s246 + $0x20] sm:$0xff]
      %v258 = vld [vmem:[%s246 + $0x28] sm:$0xff]
      %v259 = vld [vmem:[%s246 + $0x30] sm:$0xff]
      %v260 = vld [vmem:[%s246 + $0x38] sm:$0xff]
      %v261 = vld [vmem:[%s1] sm:$0xff]
      %v262 = vld [vmem:[%s1 + $0x8] sm:$0xff]
      %v263 = vpack.c.bf16 %v254, %v253
      %v264 = vpack.c.bf16 %v256, %v255
      %v265 = vpack.c.bf16 %v258, %v257
      %v266 = vpack.c.bf16 %v260, %v259
      %v267 = vpack.c.bf16 %v262, %v261
      %v268 = vld [vmem:[%s2] sm:$0x1]
      %v270 = vperm.slane %v268, 0
      %vm272 = vcmask 130048
      %v274 = vsel %vm272, %v263, 0
      %v277 = vsel %vm272, %v264, 0
      %v280 = vsel %vm272, %v265, 0
      %v283 = vsel %vm272, %v266, 0
      %285 = vmatpush.bf16.msra.mxu0 0
      %286 = vmatpush.bf16.msra.mxu0 0
      %287 = vmatpush.bf16.msra.mxu0 0
      %288 = vmatpush.bf16.msra.mxu0 0
      %289 = vmatpush.bf16.msra.mxu0 0
      %290 = vmatpush.bf16.msra.mxu0 0
      %291 = vmatpush.bf16.msra.mxu0 0
      %292 = vmatpush.bf16.msra.mxu0 %v267
      %293 = vmatmul.bf16.gmra.mxu0 %v274
      %v294 = vpop.f32.mrf.mxu0
      %v295 = vadd.f32 %v270, %v294
      %v296 = vpop.f32.mrf.mxu0
      %v297 = vadd.f32 %v270, %v296
      %298 = vmatmul.bf16.gmra.mxu0 %v277
      %v299 = vpop.f32.mrf.mxu0
      %v300 = vadd.f32 %v270, %v299
      %v301 = vpop.f32.mrf.mxu0
      %v302 = vadd.f32 %v270, %v301
      %303 = vmatmul.bf16.gmra.mxu0 %v280
      %v304 = vpop.f32.mrf.mxu0
      %v305 = vadd.f32 %v270, %v304
      %v306 = vpop.f32.mrf.mxu0
      %v307 = vadd.f32 %v270, %v306
      %308 = vmatmul.bf16.gmra.mxu0 %v283
      %v309 = vpop.f32.mrf.mxu0
      %v310 = vadd.f32 %v270, %v309
      %v311 = vpop.f32.mrf.mxu0
      %v312 = vadd.f32 %v270, %v311
      %313 = vdwg.mxu0
      %v314 = vxor.u32 %v295, 2147483648
      %v315 = vxor.u32 %v297, 2147483648
      %v316 = vxor.u32 %v300, 2147483648
      %v317 = vxor.u32 %v302, 2147483648
      %v318 = vxor.u32 %v305, 2147483648
      %v319 = vxor.u32 %v307, 2147483648
      %v320 = vxor.u32 %v310, 2147483648
      %v321 = vxor.u32 %v312, 2147483648
      %v322 = vmul.f32 %v314, 1.442695
      %v323 = vpow.pop %v322
      %v324 = vmul.f32 %v315, 1.442695
      %v325 = vpow.pop %v324
      %v326 = vmul.f32 %v316, 1.442695
      %v327 = vpow.pop %v326
      %v328 = vmul.f32 %v317, 1.442695
      %v329 = vpow.pop %v328
      %v330 = vmul.f32 %v318, 1.442695
      %v331 = vpow.pop %v330
      %v332 = vmul.f32 %v319, 1.442695
      %v333 = vpow.pop %v332
      %v334 = vmul.f32 %v320, 1.442695
      %v335 = vpow.pop %v334
      %v336 = vmul.f32 %v321, 1.442695
      %v337 = vpow.pop %v336
      %v338 = vadd.f32 %v323, 1.0
      %v339 = vadd.f32 %v325, 1.0
      %v340 = vadd.f32 %v327, 1.0
      %v341 = vadd.f32 %v329, 1.0
      %v342 = vadd.f32 %v331, 1.0
      %v343 = vadd.f32 %v333, 1.0
      %v344 = vadd.f32 %v335, 1.0
      %v345 = vadd.f32 %v337, 1.0
      %v346 = vrcp.pop %v338
      %v347 = vmul.f32 %v338, %v346
      %v348 = vsub.f32 1.0, %v347
      %v349 = vmul.f32 %v346, %v348
      %v350 = vadd.f32 %v346, %v349
      %vm351 = vweird.f32 %v338
      %vm352 = vweird.f32 %v346
      %vm353 = vmor %vm351, %vm352
      %v354 = vsel %vm353, %v346, %v350
      %v355 = vand.u32 2147483647, %v338
      %vm356 = vcmp.eq.f32.partialorder %v355, 8.507059e+37
      %v357 = vand.u32 %v338, 2147483648
      %v358 = vor.u32 1.1754944e-38, %v357
      %v359 = vsel %vm356, %v358, %v354
      %v360 = vmul.f32 1.0, %v359
      %v361 = vrcp.pop %v339
      %v362 = vmul.f32 %v339, %v361
      %v363 = vsub.f32 1.0, %v362
      %v364 = vmul.f32 %v361, %v363
      %v365 = vadd.f32 %v361, %v364
      %vm366 = vweird.f32 %v339
      %vm367 = vweird.f32 %v361
      %vm368 = vmor %vm366, %vm367
      %v369 = vsel %vm368, %v361, %v365
      %v370 = vand.u32 2147483647, %v339
      %vm371 = vcmp.eq.f32.partialorder %v370, 8.507059e+37
      %v372 = vand.u32 %v339, 2147483648
      %v373 = vor.u32 1.1754944e-38, %v372
      %v374 = vsel %vm371, %v373, %v369
      %v375 = vmul.f32 1.0, %v374
      %v376 = vrcp.pop %v340
      %v377 = vmul.f32 %v340, %v376
      %v378 = vsub.f32 1.0, %v377
      %v379 = vmul.f32 %v376, %v378
      %v380 = vadd.f32 %v376, %v379
      %vm381 = vweird.f32 %v340
      %vm382 = vweird.f32 %v376
      %vm383 = vmor %vm381, %vm382
      %v384 = vsel %vm383, %v376, %v380
      %v385 = vand.u32 2147483647, %v340
      %vm386 = vcmp.eq.f32.partialorder %v385, 8.507059e+37
      %v387 = vand.u32 %v340, 2147483648
      %v388 = vor.u32 1.1754944e-38, %v387
      %v389 = vsel %vm386, %v388, %v384
      %v390 = vmul.f32 1.0, %v389
      %v391 = vrcp.pop %v341
      %v392 = vmul.f32 %v341, %v391
      %v393 = vsub.f32 1.0, %v392
      %v394 = vmul.f32 %v391, %v393
      %v395 = vadd.f32 %v391, %v394
      %vm396 = vweird.f32 %v341
      %vm397 = vweird.f32 %v391
      %vm398 = vmor %vm396, %vm397
      %v399 = vsel %vm398, %v391, %v395
      %v400 = vand.u32 2147483647, %v341
      %vm401 = vcmp.eq.f32.partialorder %v400, 8.507059e+37
      %v402 = vand.u32 %v341, 2147483648
      %v403 = vor.u32 1.1754944e-38, %v402
      %v404 = vsel %vm401, %v403, %v399
      %v405 = vmul.f32 1.0, %v404
      %v406 = vrcp.pop %v342
      %v407 = vmul.f32 %v342, %v406
      %v408 = vsub.f32 1.0, %v407
      %v409 = vmul.f32 %v406, %v408
      %v410 = vadd.f32 %v406, %v409
      %vm411 = vweird.f32 %v342
      %vm412 = vweird.f32 %v406
      %vm413 = vmor %vm411, %vm412
      %v414 = vsel %vm413, %v406, %v410
      %v415 = vand.u32 2147483647, %v342
      %vm416 = vcmp.eq.f32.partialorder %v415, 8.507059e+37
      %v417 = vand.u32 %v342, 2147483648
      %v418 = vor.u32 1.1754944e-38, %v417
      %v419 = vsel %vm416, %v418, %v414
      %v420 = vmul.f32 1.0, %v419
      %v421 = vrcp.pop %v343
      %v422 = vmul.f32 %v343, %v421
      %v423 = vsub.f32 1.0, %v422
      %v424 = vmul.f32 %v421, %v423
      %v425 = vadd.f32 %v421, %v424
      %vm426 = vweird.f32 %v343
      %vm427 = vweird.f32 %v421
      %vm428 = vmor %vm426, %vm427
      %v429 = vsel %vm428, %v421, %v425
      %v430 = vand.u32 2147483647, %v343
      %vm431 = vcmp.eq.f32.partialorder %v430, 8.507059e+37
      %v432 = vand.u32 %v343, 2147483648
      %v433 = vor.u32 1.1754944e-38, %v432
      %v434 = vsel %vm431, %v433, %v429
      %v435 = vmul.f32 1.0, %v434
      %v436 = vrcp.pop %v344
      %v437 = vmul.f32 %v344, %v436
      %v438 = vsub.f32 1.0, %v437
      %v439 = vmul.f32 %v436, %v438
      %v440 = vadd.f32 %v436, %v439
      %vm441 = vweird.f32 %v344
      %vm442 = vweird.f32 %v436
      %vm443 = vmor %vm441, %vm442
      %v444 = vsel %vm443, %v436, %v440
      %v445 = vand.u32 2147483647, %v344
      %vm446 = vcmp.eq.f32.partialorder %v445, 8.507059e+37
      %v447 = vand.u32 %v344, 2147483648
      %v448 = vor.u32 1.1754944e-38, %v447
      %v449 = vsel %vm446, %v448, %v444
      %v450 = vmul.f32 1.0, %v449
      %v451 = vrcp.pop %v345
      %v452 = vmul.f32 %v345, %v451
      %v453 = vsub.f32 1.0, %v452
      %v454 = vmul.f32 %v451, %v453
      %v455 = vadd.f32 %v451, %v454
      %vm456 = vweird.f32 %v345
      %vm457 = vweird.f32 %v451
      %vm458 = vmor %vm456, %vm457
      %v459 = vsel %vm458, %v451, %v455
      %v460 = vand.u32 2147483647, %v345
      %vm461 = vcmp.eq.f32.partialorder %v460, 8.507059e+37
      %v462 = vand.u32 %v345, 2147483648
      %v463 = vor.u32 1.1754944e-38, %v462
      %v464 = vsel %vm461, %v463, %v459
      %v465 = vmul.f32 1.0, %v464
      %v466 = vmul.f32 %v295, %v360
      %v467 = vmul.f32 %v297, %v375
      %v468 = vmul.f32 %v300, %v390
      %v469 = vmul.f32 %v302, %v405
      %v470 = vmul.f32 %v305, %v420
      %v471 = vmul.f32 %v307, %v435
      %v472 = vmul.f32 %v310, %v450
      %v473 = vmul.f32 %v312, %v465
      %v474 = vld [vmem:[%s3] sm:$0xff]
      %v475 = vld [vmem:[%s3 + $0x8] sm:$0xff]
      %v476 = vld [vmem:[%s3 + $0x10] sm:$0xff]
      %v477 = vld [vmem:[%s3 + $0x18] sm:$0xff]
      %v478 = vld [vmem:[%s3 + $0x20] sm:$0xff]
      %v479 = vld [vmem:[%s3 + $0x28] sm:$0xff]
      %v480 = vpack.c.bf16 %v467, %v466
      %v481 = vpack.c.bf16 %v469, %v468
      %v482 = vpack.c.bf16 %v471, %v470
      %v483 = vpack.c.bf16 %v473, %v472
      %v484 = vpack.c.bf16 %v475, %v474
      %v485 = vpack.c.bf16 %v477, %v476
      %v486 = vpack.c.bf16 %v479, %v478
      %v487 = vld [vmem:[%s4] sm:$0x1]
      %v489 = vperm.slane %v487, 0
      %vm491 = vcmask 392192
      %v493 = vsel %vm491, %v480, 0
      %v496 = vsel %vm491, %v481, 0
      %v499 = vsel %vm491, %v482, 0
      %v502 = vsel %vm491, %v483, 0
      %504 = vmatpush.bf16.msra.mxu0 0
      %505 = vmatpush.bf16.msra.mxu0 0
      %506 = vmatpush.bf16.msra.mxu0 0
      %507 = vmatpush.bf16.msra.mxu0 0
      %508 = vmatpush.bf16.msra.mxu0 0
      %509 = vmatpush.bf16.msra.mxu0 %v486
      %510 = vmatpush.bf16.msra.mxu0 %v485
      %511 = vmatpush.bf16.msra.mxu0 %v484
      %512 = vmatmul.bf16.gmra.mxu0 %v493
      %v513 = vpop.f32.mrf.mxu0
      %v514 = vadd.f32 %v489, %v513
      %v515 = vpop.f32.mrf.mxu0
      %v516 = vadd.f32 %v489, %v515
      %517 = vmatmul.bf16.gmra.mxu0 %v496
      %v518 = vpop.f32.mrf.mxu0
      %v519 = vadd.f32 %v489, %v518
      %v520 = vpop.f32.mrf.mxu0
      %v521 = vadd.f32 %v489, %v520
      %522 = vmatmul.bf16.gmra.mxu0 %v499
      %v523 = vpop.f32.mrf.mxu0
      %v524 = vadd.f32 %v489, %v523
      %v525 = vpop.f32.mrf.mxu0
      %v526 = vadd.f32 %v489, %v525
      %527 = vmatmul.bf16.gmra.mxu0 %v502
      %v528 = vpop.f32.mrf.mxu0
      %v529 = vadd.f32 %v489, %v528
      %v530 = vpop.f32.mrf.mxu0
      %v531 = vadd.f32 %v489, %v530
      %532 = vdwg.mxu0
      %v533 = vld [vmem:[%s5] sm:$0xff]
      %v534 = vld [vmem:[%s5 + $0x8] sm:$0xff]
      %v535 = vld [vmem:[%s5 + $0x10] sm:$0xff]
      %v536 = vld [vmem:[%s5 + $0x18] sm:$0xff]
      %v537 = vpack.c.bf16 %v516, %v514
      %v538 = vpack.c.bf16 %v521, %v519
      %v539 = vpack.c.bf16 %v526, %v524
      %v540 = vpack.c.bf16 %v531, %v529
      %v541 = vpack.c.bf16 %v534, %v533
      %v542 = vpack.c.bf16 %v536, %v535
      %vm543 = vcmask 261120
      %v545 = vsel %vm543, %v537, 0
      %v548 = vsel %vm543, %v538, 0
      %v551 = vsel %vm543, %v539, 0
      %v554 = vsel %vm543, %v540, 0
      %556 = vmatpush.bf16.msra.mxu0 0
      %557 = vmatpush.bf16.msra.mxu0 0
      %558 = vmatpush.bf16.msra.mxu0 0
      %559 = vmatpush.bf16.msra.mxu0 0
      %560 = vmatpush.bf16.msra.mxu0 0
      %561 = vmatpush.bf16.msra.mxu0 0
      %562 = vmatpush.bf16.msra.mxu0 %v542
      %563 = vmatpush.bf16.msra.mxu0 %v541
      %564 = vmatmul.bf16.gmra.mxu0 %v545
      %v565 = vpop.f32.mrf.mxu0
      %v566 = vadd.f32 0.0, %v565
      %v567 = vpop.f32.mrf.mxu0
      %v568 = vadd.f32 0.0, %v567
      %569 = vmatmul.bf16.gmra.mxu0 %v548
      %v570 = vpop.f32.mrf.mxu0
      %v571 = vadd.f32 0.0, %v570
      %v572 = vpop.f32.mrf.mxu0
      %v573 = vadd.f32 0.0, %v572
      %574 = vmatmul.bf16.gmra.mxu0 %v551
      %v575 = vpop.f32.mrf.mxu0
      %v576 = vadd.f32 0.0, %v575
      %v577 = vpop.f32.mrf.mxu0
      %v578 = vadd.f32 0.0, %v577
      %579 = vmatmul.bf16.gmra.mxu0 %v554
      %v580 = vpop.f32.mrf.mxu0
      %v581 = vadd.f32 0.0, %v580
      %v582 = vpop.f32.mrf.mxu0
      %v583 = vadd.f32 0.0, %v582
      %584 = vdwg.mxu0
      %vm585 = vcmask 64512
      %v586 = vsel %vm585, %v566, -inf
      %v587 = vsel %vm585, %v568, -inf
      %v588 = vsel %vm585, %v571, -inf
      %v589 = vsel %vm585, %v573, -inf
      %v590 = vsel %vm585, %v576, -inf
      %v591 = vmax.f32 %v586, %v590
      %v592 = vsel %vm585, %v578, -inf
      %v593 = vmax.f32 %v587, %v592
      %v594 = vsel %vm585, %v581, -inf
      %v595 = vmax.f32 %v588, %v594
      %v596 = vsel %vm585, %v583, -inf
      %v597 = vmax.f32 %v589, %v596
      %v598 = vmax.f32 %v591, %v593
      %v599 = vmax.f32 %v595, %v597
      %v600 = vmax.f32 %v598, %v599
      %v601 = vrot.slane %v600, 4
      %v602 = vmax.f32 %v600, %v601
      %v603 = vrot.slane %v602, 2
      %v604 = vmax.f32 %v602, %v603
      %v605 = vrot.slane %v604, 1
      %v606 = vmax.f32 %v604, %v605
      %v607 = vsub.f32 %v566, %v606
      %v608 = vsub.f32 %v568, %v606
      %v609 = vsub.f32 %v571, %v606
      %v610 = vsub.f32 %v573, %v606
      %v611 = vsub.f32 %v576, %v606
      %v612 = vsub.f32 %v578, %v606
      %v613 = vsub.f32 %v581, %v606
      %v614 = vsub.f32 %v583, %v606
      %v615 = vmul.f32 %v607, 1.442695
      %v616 = vpow.pop %v615
      %v617 = vmul.f32 %v608, 1.442695
      %v618 = vpow.pop %v617
      %v619 = vmul.f32 %v609, 1.442695
      %v620 = vpow.pop %v619
      %v621 = vmul.f32 %v610, 1.442695
      %v622 = vpow.pop %v621
      %v623 = vmul.f32 %v611, 1.442695
      %v624 = vpow.pop %v623
      %v625 = vmul.f32 %v612, 1.442695
      %v626 = vpow.pop %v625
      %v627 = vmul.f32 %v613, 1.442695
      %v628 = vpow.pop %v627
      %v629 = vmul.f32 %v614, 1.442695
      %v630 = vpow.pop %v629
      %v631 = vsel %vm585, %v616, 0.0
      %v632 = vsel %vm585, %v618, 0.0
      %v633 = vadd.f32 %v631, %v632
      %v634 = vsel %vm585, %v620, 0.0
      %v635 = vadd.f32 %v633, %v634
      %v636 = vsel %vm585, %v622, 0.0
      %v637 = vadd.f32 %v635, %v636
      %v638 = vsel %vm585, %v624, 0.0
      %v639 = vadd.f32 %v637, %v638
      %v640 = vsel %vm585, %v626, 0.0
      %v641 = vadd.f32 %v639, %v640
      %v642 = vsel %vm585, %v628, 0.0
      %v643 = vadd.f32 %v641, %v642
      %v644 = vsel %vm585, %v630, 0.0
      %v645 = vadd.f32 %v643, %v644
      %v646 = vrot.slane %v645, 4
      %v647 = vadd.f32 %v645, %v646
      %v648 = vrot.slane %v647, 2
      %v649 = vadd.f32 %v647, %v648
      %v650 = vrot.slane %v649, 1
      %v651 = vadd.f32 %v649, %v650
      %v652 = vrcp.pop %v651
      %v653 = vmul.f32 %v616, %v652
      %v654 = vmul.f32 %v618, %v652
      %v655 = vmul.f32 %v620, %v652
      %v656 = vmul.f32 %v622, %v652
      %v657 = vmul.f32 %v624, %v652
      %v658 = vmul.f32 %v626, %v652
      %v659 = vmul.f32 %v628, %v652
      %v660 = vmul.f32 %v630, %v652
      %v661 = vpack.c.bf16 %v654, %v653
      %v662 = vpack.c.bf16 %v656, %v655
      %v663 = vpack.c.bf16 %v658, %v657
      %v664 = vpack.c.bf16 %v660, %v659
      %665 = vxpose.xlu0.c.b16.start [1/8] %v661, 128
      %666 = vxpose.xlu0.c.b16.cont [2/8] %v662, 128
      %667 = vxpose.xlu0.c.b16.cont [3/8] %v663, 128
      %668 = vxpose.xlu0.c.b16.cont [4/8] %v664, 128
      %669 = vxpose.xlu0.c.b16.cont [5/8] 0, 128
      %670 = vxpose.xlu0.c.b16.cont [6/8] 0, 128
      %671 = vxpose.xlu0.c.b16.cont [7/8] 0, 128
      %672 = vxpose.xlu0.c.b16.end [8/8] 0, 128
      %v673 = vpop.trf.xlu0
      %v674 = vpop.trf.xlu0
      %v675 = vpop.trf.xlu0
      %v676 = vpop.trf.xlu0
      %v677 = vpop.trf.xlu0
      %v678 = vpop.trf.xlu0
      %v679 = vpop.trf.xlu0
      %v680 = vpop.trf.xlu0
      %vm681 = vcmask 523264
      %v683 = vsel %vm681, %v673, 0
      %685 = vmatpush.bf16.msra.mxu0 0
      %686 = vmatpush.bf16.msra.mxu0 0
      %687 = vmatpush.bf16.msra.mxu0 0
      %688 = vmatpush.bf16.msra.mxu0 0
      %689 = vmatpush.bf16.msra.mxu0 %v540
      %690 = vmatpush.bf16.msra.mxu0 %v539
      %691 = vmatpush.bf16.msra.mxu0 %v538
      %692 = vmatpush.bf16.msra.mxu0 %v537
      %693 = vmatmul.bf16.gmra.mxu0 %v683
      %v694 = vpop.f32.mrf.mxu0
      %v695 = vadd.f32 0.0, %v694
      %v696 = vpop.f32.mrf.mxu0
      %697 = vdwg.mxu0
      %698 = vst.msk [vmem:[%s251] sm:$0xff] %vm543, %v695
      %p699 = scmp.lt.s32.totalorder %s17, 1
      %s700 = scalar_select %p699, %s17, 1
      %s701 = smul.addr %s700, 8
      %s702 = scalar_lea.vmem %s6, %s701
      // Predicated region
      $region45: #{rt1_forward.10} parent=43 // pred_check
        %p703 = pneg %p166
      $region46: #{rt1_forward.10} parent=43 // pred_check_branch
        %705 = sbr.rel (%p703) target = $region48
      $region47: #{rt1_forward.10} parent=43 // pred_region
        _
      $region48: #{rt1_forward.10} parent=43 // pred_fallthru
        _
    $region44: #{rt1_forward.10} parent=5 // pred_fallthru
      _
    %p706 = scmp.le.s32.totalorder 2, %s12
    // Predicated region
    $region49: #{rt1_forward.10} parent=5 // pred_check
      %p707 = pneg %p706
    $region50: #{rt1_forward.10} parent=5 // pred_check_branch
      %709 = sbr.rel (%p707) target = $region52
    $region51: #{rt1_forward.10} parent=5 // pred_region
      %s710 = ssub.s32 %s12, 2
      // Predicated region
      $region53: #{rt1_forward.10} parent=51 // pred_check
        %p711 = pneg %p172
      $region54: #{rt1_forward.10} parent=51 // pred_check_branch
        %713 = sbr.rel (%p711) target = $region56
      $region55: #{rt1_forward.10} parent=51 // pred_region
        %p714 = scmp.lt.s32.totalorder %s18, 1
        %s715 = scalar_select %p714, %s18, 1
        %s716 = smul.addr %s715, 8
        %s717 = scalar_lea.vmem %s6, %s716
      $region56: #{rt1_forward.10} parent=51 // pred_fallthru
        _
    $region52: #{rt1_forward.10} parent=5 // pred_fallthru
      _
  $region6: #{rt1_forward.10} parent=0 // loop_footer
    %s16 = sadd.s32 1, %s12
  $region7: #{rt1_forward.10} parent=0 // loop_footer_branch
    %11 = sbr.rel target = $region3
  $region8: #{rt1_forward.10} parent=0 // loop_exit
    _

// kernel: rt1_forward.8
$region0: #{rt1_forward.8}
  #allocation0 [shape = 'u32[]', space=smem, size = 0x4, offset = 0x4, fixed_abs, tag = 'smem constant byte address 0x4 - core index']
  #allocation1 [shape = 'u32[72,128]{1,0:T(1,128)}', space=vmem, size = 0x9000, scoped, tag = 'internal scratch']
  %s0 = inlined_call_operand.vmem [shape: f32[128,16], index: 0, kind: input, shape index: {}]
  %s1 = inlined_call_operand.vmem [shape: f32[2,1,8], index: 1, kind: input, shape index: {}]
  %s2 = inlined_call_operand.vmem [shape: f32[9,64,64], index: 2, kind: input, shape index: {}]
  %s3 = inlined_call_operand.vmem [shape: f32[16,32], index: 3, kind: input, shape index: {}]
  %s4 = inlined_call_operand.vmem [shape: f32[1,32], index: 4, kind: input, shape index: {}]
  %s5 = inlined_call_operand.vmem [shape: f32[9,1,32], index: 5, kind: input, shape index: {}]
  %s6 = inlined_call_operand.vmem [shape: f32[1,32], index: 6, kind: input, shape index: {}]
  %s7 = inlined_call_operand.vmem [shape: f32[32,16], index: 7, kind: input, shape index: {}]
  %s8 = inlined_call_operand.vmem [shape: f32[1,16], index: 8, kind: input, shape index: {}]
  %s9 = inlined_call_operand.vmem [shape: f32[8,16], index: 9, kind: input, shape index: {}]
  %s10 = inlined_call_operand.vmem [shape: f32[1,16], index: 10, kind: input, shape index: {}]
  %s11 = inlined_call_operand.vmem [shape: f32[8,16], index: 11, kind: input, shape index: {}]
  %s12 = inlined_call_operand.vmem [shape: f32[1,16], index: 12, kind: input, shape index: {}]
  %s13 = inlined_call_operand.vmem [shape: f32[128,16], index: 13, kind: output, shape index: {}]
  %s14 = sld [smem:[#allocation0]]
  $region85: #{rt1_forward.8} parent=0
    _
  %s16 = ssub.s32 1, %s14
  %s17 = scalar_select 0, %s16, %s14
  loop: start=0, step=1, limit=4
  $region2: #{rt1_forward.8} parent=0 // loop_pre_header
    _
  $region3: #{rt1_forward.8} parent=0 // loop_header
    %s19 = sphi 0, %s23
    %p20 = scmp.ge.s32.totalorder %s19, 4
    %s29 = sphi 0, %s31
    %s32 = sphi 0, %s29
    %s33 = sphi 0, %s32
    %s49 = sphi 0, %s33
    %s55 = sphi 0, %s57
    %s58 = sphi 0, %s55
    %s59 = sphi 0, %s58
    %s75 = sphi 0, %s59
    %s79 = sphi 0, %s79
    %s81 = sphi 0, %s79
    %s82 = sphi 0, %s81
    %s96 = sphi 0, %s82
    %s100 = sphi 0, %s100
    %s102 = sphi 0, %s100
    %s103 = sphi 0, %s102
    %s117 = sphi 0, %s103
    %s121 = sphi 0, %s121
    %s123 = sphi 0, %s121
    %s124 = sphi 0, %s123
    %s138 = sphi 0, %s124
    %s142 = sphi 0, %s142
    %s144 = sphi 0, %s142
    %s145 = sphi 0, %s144
    %s159 = sphi 0, %s145
    %s163 = sphi 0, %s163
    %s165 = sphi 0, %s163
    %s166 = sphi 0, %s165
    %s180 = sphi 0, %s166
    %s184 = sphi 0, %s184
    %s186 = sphi 0, %s184
    %s187 = sphi 0, %s186
    %s201 = sphi 0, %s187
    %s205 = sphi 0, %s205
    %s207 = sphi 0, %s205
    %s208 = sphi 0, %s207
    %s222 = sphi 0, %s208
    %s226 = sphi 0, %s226
    %s228 = sphi 0, %s226
    %s229 = sphi 0, %s228
    %s243 = sphi 0, %s229
    %s247 = sphi 0, %s247
    %s249 = sphi 0, %s247
    %s250 = sphi 0, %s249
    %s264 = sphi 0, %s250
    %s268 = sphi 0, %s268
    %s270 = sphi 0, %s268
    %s271 = sphi 0, %s270
    %s285 = sphi 0, %s271
    %s289 = sphi 0, %s289
    %s291 = sphi 0, %s289
    %s292 = sphi 0, %s291
    %s306 = sphi 0, %s292
    %s312 = sphi 0, %s314
    %s315 = sphi 0, %s312
    %s316 = sphi 0, %s315
    %s332 = sphi 0, %s316
  $region4: #{rt1_forward.8} parent=0 // loop_header_branch
    %22 = sbr.rel (%p20) target = $region8
  $region5: #{rt1_forward.8} parent=0 // loop_body
    %s24 = ssub.s32 %s19, 1
    %s25 = ssub.s32 %s19, 2
    %s26 = sadd.s32 %s19, 1
    %s27 = ssub.s32 %s19, %s26
    %p28 = scmp.eq.s32.totalorder %s27, 0
    %s30 = sadd.s32 %s29, 1
    %s31 = scalar_select %p28, %s29, %s30
    %p34 = pneg %p28
    %p35 = scmp.eq.s32.totalorder %s19, 1
    %p36 = por %p34, %p35
    %p37 = scmp.ne.s32.totalorder %s29, %s32
    %p38 = scmp.eq.s32.totalorder %s19, 0
    %p39 = por %p37, %p38
    %p40 = scmp.ne.s32.totalorder %s29, %s32
    %p41 = scmp.eq.s32.totalorder %s24, 1
    %p42 = por %p40, %p41
    %p43 = scmp.ne.s32.totalorder %s32, %s33
    %p44 = scmp.eq.s32.totalorder %s24, 0
    %p45 = por %p43, %p44
    %p46 = scmp.ne.s32.totalorder %s32, %s33
    %p47 = scmp.eq.s32.totalorder %s25, 1
    %p48 = por %p46, %p47
    %p50 = scmp.ne.s32.totalorder %s33, %s49
    %p51 = scmp.eq.s32.totalorder %s25, 0
    %p52 = por %p50, %p51
    %s53 = ssub.s32 %s19, %s26
    %p54 = scmp.eq.s32.totalorder %s53, 0
    %s56 = sadd.s32 %s55, 1
    %s57 = scalar_select %p54, %s55, %s56
    %p60 = pneg %p54
    %p61 = scmp.eq.s32.totalorder %s19, 1
    %p62 = por %p60, %p61
    %p63 = scmp.ne.s32.totalorder %s55, %s58
    %p64 = scmp.eq.s32.totalorder %s19, 0
    %p65 = por %p63, %p64
    %p66 = scmp.ne.s32.totalorder %s55, %s58
    %p67 = scmp.eq.s32.totalorder %s24, 1
    %p68 = por %p66, %p67
    %p69 = scmp.ne.s32.totalorder %s58, %s59
    %p70 = scmp.eq.s32.totalorder %s24, 0
    %p71 = por %p69, %p70
    %p72 = scmp.ne.s32.totalorder %s58, %s59
    %p73 = scmp.eq.s32.totalorder %s25, 1
    %p74 = por %p72, %p73
    %p76 = scmp.ne.s32.totalorder %s59, %s75
    %p77 = scmp.eq.s32.totalorder %s25, 0
    %p78 = por %p76, %p77
    %s80 = sadd.s32 %s79, 1
    %p83 = scmp.eq.s32.totalorder %s19, 1
    %p84 = scmp.ne.s32.totalorder %s79, %s81
    %p85 = scmp.eq.s32.totalorder %s19, 0
    %p86 = por %p84, %p85
    %p87 = scmp.ne.s32.totalorder %s79, %s81
    %p88 = scmp.eq.s32.totalorder %s24, 1
    %p89 = por %p87, %p88
    %p90 = scmp.ne.s32.totalorder %s81, %s82
    %p91 = scmp.eq.s32.totalorder %s24, 0
    %p92 = por %p90, %p91
    %p93 = scmp.ne.s32.totalorder %s81, %s82
    %p94 = scmp.eq.s32.totalorder %s25, 1
    %p95 = por %p93, %p94
    %p97 = scmp.ne.s32.totalorder %s82, %s96
    %p98 = scmp.eq.s32.totalorder %s25, 0
    %p99 = por %p97, %p98
    %s101 = sadd.s32 %s100, 1
    %p104 = scmp.eq.s32.totalorder %s19, 1
    %p105 = scmp.ne.s32.totalorder %s100, %s102
    %p106 = scmp.eq.s32.totalorder %s19, 0
    %p107 = por %p105, %p106
    %p108 = scmp.ne.s32.totalorder %s100, %s102
    %p109 = scmp.eq.s32.totalorder %s24, 1
    %p110 = por %p108, %p109
    %p111 = scmp.ne.s32.totalorder %s102, %s103
    %p112 = scmp.eq.s32.totalorder %s24, 0
    %p113 = por %p111, %p112
    %p114 = scmp.ne.s32.totalorder %s102, %s103
    %p115 = scmp.eq.s32.totalorder %s25, 1
    %p116 = por %p114, %p115
    %p118 = scmp.ne.s32.totalorder %s103, %s117
    %p119 = scmp.eq.s32.totalorder %s25, 0
    %p120 = por %p118, %p119
    %s122 = sadd.s32 %s121, 1
    %p125 = scmp.eq.s32.totalorder %s19, 1
    %p126 = scmp.ne.s32.totalorder %s121, %s123
    %p127 = scmp.eq.s32.totalorder %s19, 0
    %p128 = por %p126, %p127
    %p129 = scmp.ne.s32.totalorder %s121, %s123
    %p130 = scmp.eq.s32.totalorder %s24, 1
    %p131 = por %p129, %p130
    %p132 = scmp.ne.s32.totalorder %s123, %s124
    %p133 = scmp.eq.s32.totalorder %s24, 0
    %p134 = por %p132, %p133
    %p135 = scmp.ne.s32.totalorder %s123, %s124
    %p136 = scmp.eq.s32.totalorder %s25, 1
    %p137 = por %p135, %p136
    %p139 = scmp.ne.s32.totalorder %s124, %s138
    %p140 = scmp.eq.s32.totalorder %s25, 0
    %p141 = por %p139, %p140
    %s143 = sadd.s32 %s142, 1
    %p146 = scmp.eq.s32.totalorder %s19, 1
    %p147 = scmp.ne.s32.totalorder %s142, %s144
    %p148 = scmp.eq.s32.totalorder %s19, 0
    %p149 = por %p147, %p148
    %p150 = scmp.ne.s32.totalorder %s142, %s144
    %p151 = scmp.eq.s32.totalorder %s24, 1
    %p152 = por %p150, %p151
    %p153 = scmp.ne.s32.totalorder %s144, %s145
    %p154 = scmp.eq.s32.totalorder %s24, 0
    %p155 = por %p153, %p154
    %p156 = scmp.ne.s32.totalorder %s144, %s145
    %p157 = scmp.eq.s32.totalorder %s25, 1
    %p158 = por %p156, %p157
    %p160 = scmp.ne.s32.totalorder %s145, %s159
    %p161 = scmp.eq.s32.totalorder %s25, 0
    %p162 = por %p160, %p161
    %s164 = sadd.s32 %s163, 1
    %p167 = scmp.eq.s32.totalorder %s19, 1
    %p168 = scmp.ne.s32.totalorder %s163, %s165
    %p169 = scmp.eq.s32.totalorder %s19, 0
    %p170 = por %p168, %p169
    %p171 = scmp.ne.s32.totalorder %s163, %s165
    %p172 = scmp.eq.s32.totalorder %s24, 1
    %p173 = por %p171, %p172
    %p174 = scmp.ne.s32.totalorder %s165, %s166
    %p175 = scmp.eq.s32.totalorder %s24, 0
    %p176 = por %p174, %p175
    %p177 = scmp.ne.s32.totalorder %s165, %s166
    %p178 = scmp.eq.s32.totalorder %s25, 1
    %p179 = por %p177, %p178
    %p181 = scmp.ne.s32.totalorder %s166, %s180
    %p182 = scmp.eq.s32.totalorder %s25, 0
    %p183 = por %p181, %p182
    %s185 = sadd.s32 %s184, 1
    %p188 = scmp.eq.s32.totalorder %s19, 1
    %p189 = scmp.ne.s32.totalorder %s184, %s186
    %p190 = scmp.eq.s32.totalorder %s19, 0
    %p191 = por %p189, %p190
    %p192 = scmp.ne.s32.totalorder %s184, %s186
    %p193 = scmp.eq.s32.totalorder %s24, 1
    %p194 = por %p192, %p193
    %p195 = scmp.ne.s32.totalorder %s186, %s187
    %p196 = scmp.eq.s32.totalorder %s24, 0
    %p197 = por %p195, %p196
    %p198 = scmp.ne.s32.totalorder %s186, %s187
    %p199 = scmp.eq.s32.totalorder %s25, 1
    %p200 = por %p198, %p199
    %p202 = scmp.ne.s32.totalorder %s187, %s201
    %p203 = scmp.eq.s32.totalorder %s25, 0
    %p204 = por %p202, %p203
    %s206 = sadd.s32 %s205, 1
    %p209 = scmp.eq.s32.totalorder %s19, 1
    %p210 = scmp.ne.s32.totalorder %s205, %s207
    %p211 = scmp.eq.s32.totalorder %s19, 0
    %p212 = por %p210, %p211
    %p213 = scmp.ne.s32.totalorder %s205, %s207
    %p214 = scmp.eq.s32.totalorder %s24, 1
    %p215 = por %p213, %p214
    %p216 = scmp.ne.s32.totalorder %s207, %s208
    %p217 = scmp.eq.s32.totalorder %s24, 0
    %p218 = por %p216, %p217
    %p219 = scmp.ne.s32.totalorder %s207, %s208
    %p220 = scmp.eq.s32.totalorder %s25, 1
    %p221 = por %p219, %p220
    %p223 = scmp.ne.s32.totalorder %s208, %s222
    %p224 = scmp.eq.s32.totalorder %s25, 0
    %p225 = por %p223, %p224
    %s227 = sadd.s32 %s226, 1
    %p230 = scmp.eq.s32.totalorder %s19, 1
    %p231 = scmp.ne.s32.totalorder %s226, %s228
    %p232 = scmp.eq.s32.totalorder %s19, 0
    %p233 = por %p231, %p232
    %p234 = scmp.ne.s32.totalorder %s226, %s228
    %p235 = scmp.eq.s32.totalorder %s24, 1
    %p236 = por %p234, %p235
    %p237 = scmp.ne.s32.totalorder %s228, %s229
    %p238 = scmp.eq.s32.totalorder %s24, 0
    %p239 = por %p237, %p238
    %p240 = scmp.ne.s32.totalorder %s228, %s229
    %p241 = scmp.eq.s32.totalorder %s25, 1
    %p242 = por %p240, %p241
    %p244 = scmp.ne.s32.totalorder %s229, %s243
    %p245 = scmp.eq.s32.totalorder %s25, 0
    %p246 = por %p244, %p245
    %s248 = sadd.s32 %s247, 1
    %p251 = scmp.eq.s32.totalorder %s19, 1
    %p252 = scmp.ne.s32.totalorder %s247, %s249
    %p253 = scmp.eq.s32.totalorder %s19, 0
    %p254 = por %p252, %p253
    %p255 = scmp.ne.s32.totalorder %s247, %s249
    %p256 = scmp.eq.s32.totalorder %s24, 1
    %p257 = por %p255, %p256
    %p258 = scmp.ne.s32.totalorder %s249, %s250
    %p259 = scmp.eq.s32.totalorder %s24, 0
    %p260 = por %p258, %p259
    %p261 = scmp.ne.s32.totalorder %s249, %s250
    %p262 = scmp.eq.s32.totalorder %s25, 1
    %p263 = por %p261, %p262
    %p265 = scmp.ne.s32.totalorder %s250, %s264
    %p266 = scmp.eq.s32.totalorder %s25, 0
    %p267 = por %p265, %p266
    %s269 = sadd.s32 %s268, 1
    %p272 = scmp.eq.s32.totalorder %s19, 1
    %p273 = scmp.ne.s32.totalorder %s268, %s270
    %p274 = scmp.eq.s32.totalorder %s19, 0
    %p275 = por %p273, %p274
    %p276 = scmp.ne.s32.totalorder %s268, %s270
    %p277 = scmp.eq.s32.totalorder %s24, 1
    %p278 = por %p276, %p277
    %p279 = scmp.ne.s32.totalorder %s270, %s271
    %p280 = scmp.eq.s32.totalorder %s24, 0
    %p281 = por %p279, %p280
    %p282 = scmp.ne.s32.totalorder %s270, %s271
    %p283 = scmp.eq.s32.totalorder %s25, 1
    %p284 = por %p282, %p283
    %p286 = scmp.ne.s32.totalorder %s271, %s285
    %p287 = scmp.eq.s32.totalorder %s25, 0
    %p288 = por %p286, %p287
    %s290 = sadd.s32 %s289, 1
    %p293 = scmp.eq.s32.totalorder %s19, 1
    %p294 = scmp.ne.s32.totalorder %s289, %s291
    %p295 = scmp.eq.s32.totalorder %s19, 0
    %p296 = por %p294, %p295
    %p297 = scmp.ne.s32.totalorder %s289, %s291
    %p298 = scmp.eq.s32.totalorder %s24, 1
    %p299 = por %p297, %p298
    %p300 = scmp.ne.s32.totalorder %s291, %s292
    %p301 = scmp.eq.s32.totalorder %s24, 0
    %p302 = por %p300, %p301
    %p303 = scmp.ne.s32.totalorder %s291, %s292
    %p304 = scmp.eq.s32.totalorder %s25, 1
    %p305 = por %p303, %p304
    %p307 = scmp.ne.s32.totalorder %s292, %s306
    %p308 = scmp.eq.s32.totalorder %s25, 0
    %p309 = por %p307, %p308
    %s310 = ssub.s32 %s19, %s26
    %p311 = scmp.eq.s32.totalorder %s310, 0
    %s313 = sadd.s32 %s312, 1
    %s314 = scalar_select %p311, %s312, %s313
    %p317 = pneg %p311
    %p318 = scmp.eq.s32.totalorder %s19, 1
    %p319 = por %p317, %p318
    %p320 = scmp.ne.s32.totalorder %s312, %s315
    %p321 = scmp.eq.s32.totalorder %s19, 0
    %p322 = por %p320, %p321
    %p323 = scmp.ne.s32.totalorder %s312, %s315
    %p324 = scmp.eq.s32.totalorder %s24, 1
    %p325 = por %p323, %p324
    %p326 = scmp.ne.s32.totalorder %s315, %s316
    %p327 = scmp.eq.s32.totalorder %s24, 0
    %p328 = por %p326, %p327
    %p329 = scmp.ne.s32.totalorder %s315, %s316
    %p330 = scmp.eq.s32.totalorder %s25, 1
    %p331 = por %p329, %p330
    %p333 = scmp.ne.s32.totalorder %s316, %s332
    %p334 = scmp.eq.s32.totalorder %s25, 0
    %p335 = por %p333, %p334
    %p336 = scmp.le.s32.totalorder 1, %s19
    %p337 = scmp.lt.s32.totalorder %s19, 3
    %p338 = pnand %p336, %p337
    %p339 = pneg %p338
    // Predicated region
    $region9: #{rt1_forward.8} parent=5 // pred_check
      _
    $region10: #{rt1_forward.8} parent=5 // pred_check_branch
      %341 = sbr.rel (%p338) target = $region12
    $region11: #{rt1_forward.8} parent=5 // pred_region
      %s342 = ssub.s32 %s19, 1
      // Predicated region
      $region13: #{rt1_forward.8} parent=11 // pred_check
        %p343 = pneg %p92
      $region14: #{rt1_forward.8} parent=11 // pred_check_branch
        %345 = sbr.rel (%p343) target = $region16
      $region15: #{rt1_forward.8} parent=11 // pred_region
        _
      $region16: #{rt1_forward.8} parent=11 // pred_fallthru
        _
      // Predicated region
      $region17: #{rt1_forward.8} parent=11 // pred_check
        %p346 = pneg %p113
      $region18: #{rt1_forward.8} parent=11 // pred_check_branch
        %348 = sbr.rel (%p346) target = $region20
      $region19: #{rt1_forward.8} parent=11 // pred_region
        _
      $region20: #{rt1_forward.8} parent=11 // pred_fallthru
        _
      // Predicated region
      $region21: #{rt1_forward.8} parent=11 // pred_check
        %p349 = pneg %p134
      $region22: #{rt1_forward.8} parent=11 // pred_check_branch
        %351 = sbr.rel (%p349) target = $region24
      $region23: #{rt1_forward.8} parent=11 // pred_region
        _
      $region24: #{rt1_forward.8} parent=11 // pred_fallthru
        _
      // Predicated region
      $region25: #{rt1_forward.8} parent=11 // pred_check
        %p352 = pneg %p155
      $region26: #{rt1_forward.8} parent=11 // pred_check_branch
        %354 = sbr.rel (%p352) target = $region28
      $region27: #{rt1_forward.8} parent=11 // pred_region
        _
      $region28: #{rt1_forward.8} parent=11 // pred_fallthru
        _
      // Predicated region
      $region29: #{rt1_forward.8} parent=11 // pred_check
        %p355 = pneg %p176
      $region30: #{rt1_forward.8} parent=11 // pred_check_branch
        %357 = sbr.rel (%p355) target = $region32
      $region31: #{rt1_forward.8} parent=11 // pred_region
        _
      $region32: #{rt1_forward.8} parent=11 // pred_fallthru
        _
      // Predicated region
      $region33: #{rt1_forward.8} parent=11 // pred_check
        %p358 = pneg %p197
      $region34: #{rt1_forward.8} parent=11 // pred_check_branch
        %360 = sbr.rel (%p358) target = $region36
      $region35: #{rt1_forward.8} parent=11 // pred_region
        _
      $region36: #{rt1_forward.8} parent=11 // pred_fallthru
        _
      // Predicated region
      $region37: #{rt1_forward.8} parent=11 // pred_check
        %p361 = pneg %p218
      $region38: #{rt1_forward.8} parent=11 // pred_check_branch
        %363 = sbr.rel (%p361) target = $region40
      $region39: #{rt1_forward.8} parent=11 // pred_region
        _
      $region40: #{rt1_forward.8} parent=11 // pred_fallthru
        _
      // Predicated region
      $region41: #{rt1_forward.8} parent=11 // pred_check
        %p364 = pneg %p239
      $region42: #{rt1_forward.8} parent=11 // pred_check_branch
        %366 = sbr.rel (%p364) target = $region44
      $region43: #{rt1_forward.8} parent=11 // pred_region
        _
      $region44: #{rt1_forward.8} parent=11 // pred_fallthru
        _
      // Predicated region
      $region45: #{rt1_forward.8} parent=11 // pred_check
        %p367 = pneg %p260
      $region46: #{rt1_forward.8} parent=11 // pred_check_branch
        %369 = sbr.rel (%p367) target = $region48
      $region47: #{rt1_forward.8} parent=11 // pred_region
        _
      $region48: #{rt1_forward.8} parent=11 // pred_fallthru
        _
      // Predicated region
      $region49: #{rt1_forward.8} parent=11 // pred_check
        %p370 = pneg %p281
      $region50: #{rt1_forward.8} parent=11 // pred_check_branch
        %372 = sbr.rel (%p370) target = $region52
      $region51: #{rt1_forward.8} parent=11 // pred_region
        _
      $region52: #{rt1_forward.8} parent=11 // pred_fallthru
        _
      // Predicated region
      $region53: #{rt1_forward.8} parent=11 // pred_check
        %p373 = pneg %p302
      $region54: #{rt1_forward.8} parent=11 // pred_check_branch
        %375 = sbr.rel (%p373) target = $region56
      $region55: #{rt1_forward.8} parent=11 // pred_region
        _
      $region56: #{rt1_forward.8} parent=11 // pred_fallthru
        _
    $region12: #{rt1_forward.8} parent=5 // pred_fallthru
      _
    %p376 = scmp.lt.s32.totalorder %s19, 2
    // Predicated region
    $region57: #{rt1_forward.8} parent=5 // pred_check
      %p377 = pneg %p376
    $region58: #{rt1_forward.8} parent=5 // pred_check_branch
      %379 = sbr.rel (%p377) target = $region60
    $region59: #{rt1_forward.8} parent=5 // pred_region
      // Predicated region
      $region61: #{rt1_forward.8} parent=59 // pred_check
        %p380 = pneg %p39
      $region62: #{rt1_forward.8} parent=59 // pred_check_branch
        %382 = sbr.rel (%p380) target = $region64
      $region63: #{rt1_forward.8} parent=59 // pred_region
        %s383 = smul.u32 8, %s19
        %p384 = scmp.lt.s32.totalorder %s383, 15
        %s385 = scalar_select %p384, %s383, 15
        %s386 = smul.addr %s385, 8
        %s387 = scalar_lea.vmem %s0, %s386
        %s388 = smul.u32 8, %s19
      $region64: #{rt1_forward.8} parent=59 // pred_fallthru
        _
      // Predicated region
      $region65: #{rt1_forward.8} parent=59 // pred_check
        %p389 = pneg %p65
      $region66: #{rt1_forward.8} parent=59 // pred_check_branch
        %391 = sbr.rel (%p389) target = $region68
      $region67: #{rt1_forward.8} parent=59 // pred_region
        %p392 = scmp.lt.s32.totalorder %s19, 1
        %s393 = scalar_select %p392, %s19, 1
        %s394 = scalar_lea.vmem %s1, %s393
      $region68: #{rt1_forward.8} parent=59 // pred_fallthru
        _
    $region60: #{rt1_forward.8} parent=5 // pred_fallthru
      _
    %p395 = scmp.le.s32.totalorder 1, %s19
    %p396 = scmp.lt.s32.totalorder %s19, 3
    %p397 = pnand %p395, %p396
    %p398 = pneg %p397
    // Predicated region
    $region69: #{rt1_forward.8} parent=5 // pred_check
      _
    $region70: #{rt1_forward.8} parent=5 // pred_check_branch
      %400 = sbr.rel (%p397) target = $region72
    $region71: #{rt1_forward.8} parent=5 // pred_region
      %s401 = ssub.s32 %s19, 1
      %s402 = smul.u32 8, %s24
      %p403 = scmp.lt.s32.totalorder %s402, 15
      %s404 = scalar_select %p403, %s402, 15
      %s405 = smul.addr %s404, 8
      %s406 = scalar_lea.vmem %s0, %s405
      %p407 = pneg %p45
      %p408 = pneg %p42
      %p409 = scmp.lt.s32.totalorder %s24, 1
      %s410 = scalar_select %p409, %s24, 1
      %s411 = scalar_lea.vmem %s1, %s410
      %p412 = pneg %p71
      %p413 = pneg %p68
      %p414 = pneg %p92
      %p415 = pneg %p89
      %p416 = pneg %p113
      %p417 = pneg %p110
      %p418 = pneg %p134
      %p419 = pneg %p131
      %p420 = pneg %p155
      %p421 = pneg %p152
      %p422 = pneg %p176
      %p423 = pneg %p173
      %p424 = pneg %p197
      %p425 = pneg %p194
      %p426 = pneg %p218
      %p427 = pneg %p215
      %p428 = pneg %p239
      %p429 = pneg %p236
      %p430 = pneg %p260
      %p431 = pneg %p257
      %p432 = pneg %p281
      %p433 = pneg %p278
      %p434 = pneg %p302
      %p435 = pneg %p299
      %p436 = pneg %p328
      %p437 = pneg %p325
      %s438 = smul.u32 8, %s24
      %p439 = scmp.lt.s32.totalorder %s438, 15
      %s440 = scalar_select %p439, %s438, 15
      %s441 = smul.addr %s440, 8
      %s442 = scalar_lea.vmem %s13, %s441
      %s443 = smul.u32 8, %s24
      %p444 = scmp.lt.s32.totalorder %s443, 15
      %s445 = scalar_select %p444, %s443, 15
      %s446 = smul.addr %s445, 8
      %s447 = scalar_lea.vmem %s0, %s446
      %s448 = smul.u32 8, %s24
      %p449 = scmp.lt.s32.totalorder %s24, 1
      %s450 = scalar_select %p449, %s24, 1
      %s451 = scalar_lea.vmem %s1, %s450
      %s452 = smul.u32 8, %s24
      %p453 = scmp.lt.s32.totalorder %s452, 15
      %s454 = scalar_select %p453, %s452, 15
      %s455 = smul.addr %s454, 8
      %s456 = scalar_lea.vmem %s13, %s455
      %s457 = smul.u32 8, %s24
      %v459 = vld [vmem:[%s447] sm:$0xff]
      %v460 = vld [vmem:[%s447 + $0x8] sm:$0xff]
      %v461 = vld [vmem:[%s447 + $0x10] sm:$0xff]
      %v462 = vld [vmem:[%s447 + $0x18] sm:$0xff]
      %v463 = vld [vmem:[%s447 + $0x20] sm:$0xff]
      %v464 = vld [vmem:[%s447 + $0x28] sm:$0xff]
      %v465 = vld [vmem:[%s447 + $0x30] sm:$0xff]
      %v466 = vld [vmem:[%s447 + $0x38] sm:$0xff]
      %v467 = vld [vmem:[%s3] sm:$0xff]
      %v468 = vld [vmem:[%s3 + $0x8] sm:$0xff]
      %v469 = vpack.c.bf16 %v460, %v459
      %v470 = vpack.c.bf16 %v462, %v461
      %v471 = vpack.c.bf16 %v464, %v463
      %v472 = vpack.c.bf16 %v466, %v465
      %v473 = vpack.c.bf16 %v468, %v467
      %v474 = vld [vmem:[%s4] sm:$0x1]
      %v476 = vperm.slane %v474, 0
      %vm478 = vcmask 130048
      %v480 = vsel %vm478, %v469, 0
      %v483 = vsel %vm478, %v470, 0
      %v486 = vsel %vm478, %v471, 0
      %v489 = vsel %vm478, %v472, 0
      %491 = vmatpush.bf16.msra.mxu0 0
      %492 = vmatpush.bf16.msra.mxu0 0
      %493 = vmatpush.bf16.msra.mxu0 0
      %494 = vmatpush.bf16.msra.mxu0 0
      %495 = vmatpush.bf16.msra.mxu0 0
      %496 = vmatpush.bf16.msra.mxu0 0
      %497 = vmatpush.bf16.msra.mxu0 0
      %498 = vmatpush.bf16.msra.mxu0 %v473
      %499 = vmatmul.bf16.gmra.mxu0 %v480
      %v500 = vpop.f32.mrf.mxu0
      %v501 = vadd.f32 %v476, %v500
      %v502 = vpop.f32.mrf.mxu0
      %v503 = vadd.f32 %v476, %v502
      %504 = vmatmul.bf16.gmra.mxu0 %v483
      %v505 = vpop.f32.mrf.mxu0
      %v506 = vadd.f32 %v476, %v505
      %v507 = vpop.f32.mrf.mxu0
      %v508 = vadd.f32 %v476, %v507
      %509 = vmatmul.bf16.gmra.mxu0 %v486
      %v510 = vpop.f32.mrf.mxu0
      %v511 = vadd.f32 %v476, %v510
      %v512 = vpop.f32.mrf.mxu0
      %v513 = vadd.f32 %v476, %v512
      %514 = vmatmul.bf16.gmra.mxu0 %v489
      %v515 = vpop.f32.mrf.mxu0
      %v516 = vadd.f32 %v476, %v515
      %v517 = vpop.f32.mrf.mxu0
      %v518 = vadd.f32 %v476, %v517
      %519 = vdwg.mxu0
      %v520 = vxor.u32 %v501, 2147483648
      %v521 = vxor.u32 %v503, 2147483648
      %v522 = vxor.u32 %v506, 2147483648
      %v523 = vxor.u32 %v508, 2147483648
      %v524 = vxor.u32 %v511, 2147483648
      %v525 = vxor.u32 %v513, 2147483648
      %v526 = vxor.u32 %v516, 2147483648
      %v527 = vxor.u32 %v518, 2147483648
      %v528 = vmul.f32 %v520, 1.442695
      %v529 = vpow.pop %v528
      %v530 = vmul.f32 %v521, 1.442695
      %v531 = vpow.pop %v530
      %v532 = vmul.f32 %v522, 1.442695
      %v533 = vpow.pop %v532
      %v534 = vmul.f32 %v523, 1.442695
      %v535 = vpow.pop %v534
      %v536 = vmul.f32 %v524, 1.442695
      %v537 = vpow.pop %v536
      %v538 = vmul.f32 %v525, 1.442695
      %v539 = vpow.pop %v538
      %v540 = vmul.f32 %v526, 1.442695
      %v541 = vpow.pop %v540
      %v542 = vmul.f32 %v527, 1.442695
      %v543 = vpow.pop %v542
      %v544 = vadd.f32 %v529, 1.0
      %v545 = vadd.f32 %v531, 1.0
      %v546 = vadd.f32 %v533, 1.0
      %v547 = vadd.f32 %v535, 1.0
      %v548 = vadd.f32 %v537, 1.0
      %v549 = vadd.f32 %v539, 1.0
      %v550 = vadd.f32 %v541, 1.0
      %v551 = vadd.f32 %v543, 1.0
      %v552 = vrcp.pop %v544
      %v553 = vmul.f32 %v544, %v552
      %v554 = vsub.f32 1.0, %v553
      %v555 = vmul.f32 %v552, %v554
      %v556 = vadd.f32 %v552, %v555
      %vm557 = vweird.f32 %v544
      %vm558 = vweird.f32 %v552
      %vm559 = vmor %vm557, %vm558
      %v560 = vsel %vm559, %v552, %v556
      %v561 = vand.u32 2147483647, %v544
      %vm562 = vcmp.eq.f32.partialorder %v561, 8.507059e+37
      %v563 = vand.u32 %v544, 2147483648
      %v564 = vor.u32 1.1754944e-38, %v563
      %v565 = vsel %vm562, %v564, %v560
      %v566 = vmul.f32 1.0, %v565
      %v567 = vrcp.pop %v545
      %v568 = vmul.f32 %v545, %v567
      %v569 = vsub.f32 1.0, %v568
      %v570 = vmul.f32 %v567, %v569
      %v571 = vadd.f32 %v567, %v570
      %vm572 = vweird.f32 %v545
      %vm573 = vweird.f32 %v567
      %vm574 = vmor %vm572, %vm573
      %v575 = vsel %vm574, %v567, %v571
      %v576 = vand.u32 2147483647, %v545
      %vm577 = vcmp.eq.f32.partialorder %v576, 8.507059e+37
      %v578 = vand.u32 %v545, 2147483648
      %v579 = vor.u32 1.1754944e-38, %v578
      %v580 = vsel %vm577, %v579, %v575
      %v581 = vmul.f32 1.0, %v580
      %v582 = vrcp.pop %v546
      %v583 = vmul.f32 %v546, %v582
      %v584 = vsub.f32 1.0, %v583
      %v585 = vmul.f32 %v582, %v584
      %v586 = vadd.f32 %v582, %v585
      %vm587 = vweird.f32 %v546
      %vm588 = vweird.f32 %v582
      %vm589 = vmor %vm587, %vm588
      %v590 = vsel %vm589, %v582, %v586
      %v591 = vand.u32 2147483647, %v546
      %vm592 = vcmp.eq.f32.partialorder %v591, 8.507059e+37
      %v593 = vand.u32 %v546, 2147483648
      %v594 = vor.u32 1.1754944e-38, %v593
      %v595 = vsel %vm592, %v594, %v590
      %v596 = vmul.f32 1.0, %v595
      %v597 = vrcp.pop %v547
      %v598 = vmul.f32 %v547, %v597
      %v599 = vsub.f32 1.0, %v598
      %v600 = vmul.f32 %v597, %v599
      %v601 = vadd.f32 %v597, %v600
      %vm602 = vweird.f32 %v547
      %vm603 = vweird.f32 %v597
      %vm604 = vmor %vm602, %vm603
      %v605 = vsel %vm604, %v597, %v601
      %v606 = vand.u32 2147483647, %v547
      %vm607 = vcmp.eq.f32.partialorder %v606, 8.507059e+37
      %v608 = vand.u32 %v547, 2147483648
      %v609 = vor.u32 1.1754944e-38, %v608
      %v610 = vsel %vm607, %v609, %v605
      %v611 = vmul.f32 1.0, %v610
      %v612 = vrcp.pop %v548
      %v613 = vmul.f32 %v548, %v612
      %v614 = vsub.f32 1.0, %v613
      %v615 = vmul.f32 %v612, %v614
      %v616 = vadd.f32 %v612, %v615
      %vm617 = vweird.f32 %v548
      %vm618 = vweird.f32 %v612
      %vm619 = vmor %vm617, %vm618
      %v620 = vsel %vm619, %v612, %v616
      %v621 = vand.u32 2147483647, %v548
      %vm622 = vcmp.eq.f32.partialorder %v621, 8.507059e+37
      %v623 = vand.u32 %v548, 2147483648
      %v624 = vor.u32 1.1754944e-38, %v623
      %v625 = vsel %vm622, %v624, %v620
      %v626 = vmul.f32 1.0, %v625
      %v627 = vrcp.pop %v549
      %v628 = vmul.f32 %v549, %v627
      %v629 = vsub.f32 1.0, %v628
      %v630 = vmul.f32 %v627, %v629
      %v631 = vadd.f32 %v627, %v630
      %vm632 = vweird.f32 %v549
      %vm633 = vweird.f32 %v627
      %vm634 = vmor %vm632, %vm633
      %v635 = vsel %vm634, %v627, %v631
      %v636 = vand.u32 2147483647, %v549
      %vm637 = vcmp.eq.f32.partialorder %v636, 8.507059e+37
      %v638 = vand.u32 %v549, 2147483648
      %v639 = vor.u32 1.1754944e-38, %v638
      %v640 = vsel %vm637, %v639, %v635
      %v641 = vmul.f32 1.0, %v640
      %v642 = vrcp.pop %v550
      %v643 = vmul.f32 %v550, %v642
      %v644 = vsub.f32 1.0, %v643
      %v645 = vmul.f32 %v642, %v644
      %v646 = vadd.f32 %v642, %v645
      %vm647 = vweird.f32 %v550
      %vm648 = vweird.f32 %v642
      %vm649 = vmor %vm647, %vm648
      %v650 = vsel %vm649, %v642, %v646
      %v651 = vand.u32 2147483647, %v550
      %vm652 = vcmp.eq.f32.partialorder %v651, 8.507059e+37
      %v653 = vand.u32 %v550, 2147483648
      %v654 = vor.u32 1.1754944e-38, %v653
      %v655 = vsel %vm652, %v654, %v650
      %v656 = vmul.f32 1.0, %v655
      %v657 = vrcp.pop %v551
      %v658 = vmul.f32 %v551, %v657
      %v659 = vsub.f32 1.0, %v658
      %v660 = vmul.f32 %v657, %v659
      %v661 = vadd.f32 %v657, %v660
      %vm662 = vweird.f32 %v551
      %vm663 = vweird.f32 %v657
      %vm664 = vmor %vm662, %vm663
      %v665 = vsel %vm664, %v657, %v661
      %v666 = vand.u32 2147483647, %v551
      %vm667 = vcmp.eq.f32.partialorder %v666, 8.507059e+37
      %v668 = vand.u32 %v551, 2147483648
      %v669 = vor.u32 1.1754944e-38, %v668
      %v670 = vsel %vm667, %v669, %v665
      %v671 = vmul.f32 1.0, %v670
      %v672 = vmul.f32 %v501, %v566
      %v673 = vmul.f32 %v503, %v581
      %v674 = vmul.f32 %v506, %v596
      %v675 = vmul.f32 %v508, %v611
      %v676 = vmul.f32 %v511, %v626
      %v677 = vmul.f32 %v513, %v641
      %v678 = vmul.f32 %v516, %v656
      %v679 = vmul.f32 %v518, %v671
      %v680 = vld [vmem:[%s2] sm:$0xff]
      %v681 = vld [vmem:[%s2 + $0x8] sm:$0xff]
      %v682 = vld [vmem:[%s2 + $0x10] sm:$0xff]
      %v683 = vld [vmem:[%s2 + $0x18] sm:$0xff]
      %v684 = vld [vmem:[%s2 + $0x20] sm:$0xff]
      %v685 = vld [vmem:[%s2 + $0x28] sm:$0xff]
      %v686 = vld [vmem:[%s2 + $0x30] sm:$0xff]
      %v687 = vld [vmem:[%s2 + $0x38] sm:$0xff]
      %v688 = vpack.c.bf16 %v681, %v680
      %v689 = vpack.c.bf16 %v683, %v682
      %v690 = vpack.c.bf16 %v685, %v684
      %v691 = vpack.c.bf16 %v687, %v686
      %v692 = vpack.c.bf16 %v673, %v672
      %v693 = vpack.c.bf16 %v675, %v674
      %v694 = vpack.c.bf16 %v677, %v676
      %v695 = vpack.c.bf16 %v679, %v678
      %vm696 = vcmask 523264
      %v698 = vsel %vm696, %v688, 0
      %v701 = vsel %vm696, %v689, 0
      %v704 = vsel %vm696, %v690, 0
      %v707 = vsel %vm696, %v691, 0
      %709 = vmatpush.bf16.msra.mxu0 0
      %710 = vmatpush.bf16.msra.mxu0 0
      %711 = vmatpush.bf16.msra.mxu0 0
      %712 = vmatpush.bf16.msra.mxu0 0
      %713 = vmatpush.bf16.msra.mxu0 %v695
      %714 = vmatpush.bf16.msra.mxu0 %v694
      %715 = vmatpush.bf16.msra.mxu0 %v693
      %716 = vmatpush.bf16.msra.mxu0 %v692
      %717 = vmatmul.bf16.gmra.mxu0 %v698
      %v718 = vpop.f32.mrf.mxu0
      %v719 = vadd.f32 0.0, %v718
      %v720 = vpop.f32.mrf.mxu0
      %v721 = vadd.f32 0.0, %v720
      %722 = vmatmul.bf16.gmra.mxu0 %v701
      %v723 = vpop.f32.mrf.mxu0
      %v724 = vadd.f32 0.0, %v723
      %v725 = vpop.f32.mrf.mxu0
      %v726 = vadd.f32 0.0, %v725
      %727 = vmatmul.bf16.gmra.mxu0 %v704
      %v728 = vpop.f32.mrf.mxu0
      %v729 = vadd.f32 0.0, %v728
      %v730 = vpop.f32.mrf.mxu0
      %v731 = vadd.f32 0.0, %v730
      %732 = vmatmul.bf16.gmra.mxu0 %v707
      %v733 = vpop.f32.mrf.mxu0
      %v734 = vadd.f32 0.0, %v733
      %v735 = vpop.f32.mrf.mxu0
      %v736 = vadd.f32 0.0, %v735
      %737 = vdwg.mxu0
      %v738 = vld [vmem:[%s5] sm:$0x1]
      %v740 = vperm.slane %v738, 0
      %v742 = vmul.f32 %v719, %v740
      %v743 = vmul.f32 %v721, %v740
      %v744 = vmul.f32 %v724, %v740
      %v745 = vmul.f32 %v726, %v740
      %v746 = vmul.f32 %v729, %v740
      %v747 = vmul.f32 %v731, %v740
      %v748 = vmul.f32 %v734, %v740
      %v749 = vmul.f32 %v736, %v740
      %s750 = scalar_lea.vmem %s2, 64
      %v751 = vld [vmem:[%s750] sm:$0xff]
      %v752 = vld [vmem:[%s750 + $0x8] sm:$0xff]
      %v753 = vld [vmem:[%s750 + $0x10] sm:$0xff]
      %v754 = vld [vmem:[%s750 + $0x18] sm:$0xff]
      %v755 = vld [vmem:[%s750 + $0x20] sm:$0xff]
      %v756 = vld [vmem:[%s750 + $0x28] sm:$0xff]
      %v757 = vld [vmem:[%s750 + $0x30] sm:$0xff]
      %v758 = vld [vmem:[%s750 + $0x38] sm:$0xff]
      %v759 = vpack.c.bf16 %v752, %v751
      %v760 = vpack.c.bf16 %v754, %v753
      %v761 = vpack.c.bf16 %v756, %v755
      %v762 = vpack.c.bf16 %v758, %v757
      %v764 = vsel %vm696, %v759, 0
      %v767 = vsel %vm696, %v760, 0
      %v770 = vsel %vm696, %v761, 0
      %v773 = vsel %vm696, %v762, 0
      %775 = vmatpush.bf16.msra.mxu0 0
      %776 = vmatpush.bf16.msra.mxu0 0
      %777 = vmatpush.bf16.msra.mxu0 0
      %778 = vmatpush.bf16.msra.mxu0 0
      %779 = vmatpush.bf16.msra.mxu0 %v695
      %780 = vmatpush.bf16.msra.mxu0 %v694
      %781 = vmatpush.bf16.msra.mxu0 %v693
      %782 = vmatpush.bf16.msra.mxu0 %v692
      %783 = vmatmul.bf16.gmra.mxu0 %v764
      %v784 = vpop.f32.mrf.mxu0
      %v785 = vadd.f32 0.0, %v784
      %v786 = vpop.f32.mrf.mxu0
      %v787 = vadd.f32 0.0, %v786
      %788 = vmatmul.bf16.gmra.mxu0 %v767
      %v789 = vpop.f32.mrf.mxu0
      %v790 = vadd.f32 0.0, %v789
      %v791 = vpop.f32.mrf.mxu0
      %v792 = vadd.f32 0.0, %v791
      %793 = vmatmul.bf16.gmra.mxu0 %v770
      %v794 = vpop.f32.mrf.mxu0
      %v795 = vadd.f32 0.0, %v794
      %v796 = vpop.f32.mrf.mxu0
      %v797 = vadd.f32 0.0, %v796
      %798 = vmatmul.bf16.gmra.mxu0 %v773
      %v799 = vpop.f32.mrf.mxu0
      %v800 = vadd.f32 0.0, %v799
      %v801 = vpop.f32.mrf.mxu0
      %v802 = vadd.f32 0.0, %v801
      %803 = vdwg.mxu0
      %s804 = scalar_lea.vmem %s5, 1
      %v805 = vld [vmem:[%s804] sm:$0x1]
      %v807 = vperm.slane %v805, 0
      %v809 = vmul.f32 %v785, %v807
      %v810 = vmul.f32 %v787, %v807
      %v811 = vmul.f32 %v790, %v807
      %v812 = vmul.f32 %v792, %v807
      %v813 = vmul.f32 %v795, %v807
      %v814 = vmul.f32 %v797, %v807
      %v815 = vmul.f32 %v800, %v807
      %v816 = vmul.f32 %v802, %v807
      %v817 = vadd.f32 %v742, %v809
      %v818 = vadd.f32 %v743, %v810
      %v819 = vadd.f32 %v744, %v811
      %v820 = vadd.f32 %v745, %v812
      %v821 = vadd.f32 %v746, %v813
      %v822 = vadd.f32 %v747, %v814
      %v823 = vadd.f32 %v748, %v815
      %v824 = vadd.f32 %v749, %v816
      %s825 = scalar_lea.vmem %s2, 128
      %v826 = vld [vmem:[%s825] sm:$0xff]
      %v827 = vld [vmem:[%s825 + $0x8] sm:$0xff]
      %v828 = vld [vmem:[%s825 + $0x10] sm:$0xff]
      %v829 = vld [vmem:[%s825 + $0x18] sm:$0xff]
      %v830 = vld [vmem:[%s825 + $0x20] sm:$0xff]
      %v831 = vld [vmem:[%s825 + $0x28] sm:$0xff]
      %v832 = vld [vmem:[%s825 + $0x30] sm:$0xff]
      %v833 = vld [vmem:[%s825 + $0x38] sm:$0xff]
      %v834 = vpack.c.bf16 %v827, %v826
      %v835 = vpack.c.bf16 %v829, %v828
      %v836 = vpack.c.bf16 %v831, %v830
      %v837 = vpack.c.bf16 %v833, %v832
      %v839 = vsel %vm696, %v834, 0
      %v842 = vsel %vm696, %v835, 0
      %v845 = vsel %vm696, %v836, 0
      %v848 = vsel %vm696, %v837, 0
      %850 = vmatpush.bf16.msra.mxu0 0
      %851 = vmatpush.bf16.msra.mxu0 0
      %852 = vmatpush.bf16.msra.mxu0 0
      %853 = vmatpush.bf16.msra.mxu0 0
      %854 = vmatpush.bf16.msra.mxu0 %v695
      %855 = vmatpush.bf16.msra.mxu0 %v694
      %856 = vmatpush.bf16.msra.mxu0 %v693
      %857 = vmatpush.bf16.msra.mxu0 %v692
      %858 = vmatmul.bf16.gmra.mxu0 %v839
      %v859 = vpop.f32.mrf.mxu0
      %v860 = vadd.f32 0.0, %v859
      %v861 = vpop.f32.mrf.mxu0
      %v862 = vadd.f32 0.0, %v861
      %863 = vmatmul.bf16.gmra.mxu0 %v842
      %v864 = vpop.f32.mrf.mxu0
      %v865 = vadd.f32 0.0, %v864
      %v866 = vpop.f32.mrf.mxu0
      %v867 = vadd.f32 0.0, %v866
      %868 = vmatmul.bf16.gmra.mxu0 %v845
      %v869 = vpop.f32.mrf.mxu0
      %v870 = vadd.f32 0.0, %v869
      %v871 = vpop.f32.mrf.mxu0
      %v872 = vadd.f32 0.0, %v871
      %873 = vmatmul.bf16.gmra.mxu0 %v848
      %v874 = vpop.f32.mrf.mxu0
      %v875 = vadd.f32 0.0, %v874
      %v876 = vpop.f32.mrf.mxu0
      %v877 = vadd.f32 0.0, %v876
      %878 = vdwg.mxu0
      %s879 = scalar_lea.vmem %s5, 2
      %v880 = vld [vmem:[%s879] sm:$0x1]
      %v882 = vperm.slane %v880, 0
      %v884 = vmul.f32 %v860, %v882
      %v885 = vmul.f32 %v862, %v882
      %v886 = vmul.f32 %v865, %v882
      %v887 = vmul.f32 %v867, %v882
      %v888 = vmul.f32 %v870, %v882
      %v889 = vmul.f32 %v872, %v882
      %v890 = vmul.f32 %v875, %v882
      %v891 = vmul.f32 %v877, %v882
      %v892 = vadd.f32 %v817, %v884
      %v893 = vadd.f32 %v818, %v885
      %v894 = vadd.f32 %v819, %v886
      %v895 = vadd.f32 %v820, %v887
      %v896 = vadd.f32 %v821, %v888
      %v897 = vadd.f32 %v822, %v889
      %v898 = vadd.f32 %v823, %v890
      %v899 = vadd.f32 %v824, %v891
      %s900 = scalar_lea.vmem %s2, 192
      %v901 = vld [vmem:[%s900] sm:$0xff]
      %v902 = vld [vmem:[%s900 + $0x8] sm:$0xff]
      %v903 = vld [vmem:[%s900 + $0x10] sm:$0xff]
      %v904 = vld [vmem:[%s900 + $0x18] sm:$0xff]
      %v905 = vld [vmem:[%s900 + $0x20] sm:$0xff]
      %v906 = vld [vmem:[%s900 + $0x28] sm:$0xff]
      %v907 = vld [vmem:[%s900 + $0x30] sm:$0xff]
      %v908 = vld [vmem:[%s900 + $0x38] sm:$0xff]
      %v909 = vpack.c.bf16 %v902, %v901
      %v910 = vpack.c.bf16 %v904, %v903
      %v911 = vpack.c.bf16 %v906, %v905
      %v912 = vpack.c.bf16 %v908, %v907
      %v914 = vsel %vm696, %v909, 0
      %v917 = vsel %vm696, %v910, 0
      %v920 = vsel %vm696, %v911, 0
      %v923 = vsel %vm696, %v912, 0
      %925 = vmatpush.bf16.msra.mxu0 0
      %926 = vmatpush.bf16.msra.mxu0 0
      %927 = vmatpush.bf16.msra.mxu0 0
      %928 = vmatpush.bf16.msra.mxu0 0
      %929 = vmatpush.bf16.msra.mxu0 %v695
      %930 = vmatpush.bf16.msra.mxu0 %v694
      %931 = vmatpush.bf16.msra.mxu0 %v693
      %932 = vmatpush.bf16.msra.mxu0 %v692
      %933 = vmatmul.bf16.gmra.mxu0 %v914
      %v934 = vpop.f32.mrf.mxu0
      %v935 = vadd.f32 0.0, %v934
      %v936 = vpop.f32.mrf.mxu0
      %v937 = vadd.f32 0.0, %v936
      %938 = vmatmul.bf16.gmra.mxu0 %v917
      %v939 = vpop.f32.mrf.mxu0
      %v940 = vadd.f32 0.0, %v939
      %v941 = vpop.f32.mrf.mxu0
      %v942 = vadd.f32 0.0, %v941
      %943 = vmatmul.bf16.gmra.mxu0 %v920
      %v944 = vpop.f32.mrf.mxu0
      %v945 = vadd.f32 0.0, %v944
      %v946 = vpop.f32.mrf.mxu0
      %v947 = vadd.f32 0.0, %v946
      %948 = vmatmul.bf16.gmra.mxu0 %v923
      %v949 = vpop.f32.mrf.mxu0
      %v950 = vadd.f32 0.0, %v949
      %v951 = vpop.f32.mrf.mxu0
      %v952 = vadd.f32 0.0, %v951
      %953 = vdwg.mxu0
      %s954 = scalar_lea.vmem %s5, 3
      %v955 = vld [vmem:[%s954] sm:$0x1]
      %v957 = vperm.slane %v955, 0
      %v959 = vmul.f32 %v935, %v957
      %v960 = vmul.f32 %v937, %v957
      %v961 = vmul.f32 %v940, %v957
      %v962 = vmul.f32 %v942, %v957
      %v963 = vmul.f32 %v945, %v957
      %v964 = vmul.f32 %v947, %v957
      %v965 = vmul.f32 %v950, %v957
      %v966 = vmul.f32 %v952, %v957
      %v967 = vadd.f32 %v892, %v959
      %v968 = vadd.f32 %v893, %v960
      %v969 = vadd.f32 %v894, %v961
      %v970 = vadd.f32 %v895, %v962
      %v971 = vadd.f32 %v896, %v963
      %v972 = vadd.f32 %v897, %v964
      %v973 = vadd.f32 %v898, %v965
      %v974 = vadd.f32 %v899, %v966
      %s975 = scalar_lea.vmem %s2, 256
      %v976 = vld [vmem:[%s975] sm:$0xff]
      %v977 = vld [vmem:[%s975 + $0x8] sm:$0xff]
      %v978 = vld [vmem:[%s975 + $0x10] sm:$0xff]
      %v979 = vld [vmem:[%s975 + $0x18] sm:$0xff]
      %v980 = vld [vmem:[%s975 + $0x20] sm:$0xff]
      %v981 = vld [vmem:[%s975 + $0x28] sm:$0xff]
      %v982 = vld [vmem:[%s975 + $0x30] sm:$0xff]
      %v983 = vld [vmem:[%s975 + $0x38] sm:$0xff]
      %v984 = vpack.c.bf16 %v977, %v976
      %v985 = vpack.c.bf16 %v979, %v978
      %v986 = vpack.c.bf16 %v981, %v980
      %v987 = vpack.c.bf16 %v983, %v982
      %v989 = vsel %vm696, %v984, 0
      %v992 = vsel %vm696, %v985, 0
      %v995 = vsel %vm696, %v986, 0
      %v998 = vsel %vm696, %v987, 0
      %1000 = vmatpush.bf16.msra.mxu0 0
      %1001 = vmatpush.bf16.msra.mxu0 0
      %1002 = vmatpush.bf16.msra.mxu0 0
      %1003 = vmatpush.bf16.msra.mxu0 0
      %1004 = vmatpush.bf16.msra.mxu0 %v695
      %1005 = vmatpush.bf16.msra.mxu0 %v694
      %1006 = vmatpush.bf16.msra.mxu0 %v693
      %1007 = vmatpush.bf16.msra.mxu0 %v692
      %1008 = vmatmul.bf16.gmra.mxu0 %v989
      %v1009 = vpop.f32.mrf.mxu0
      %v1010 = vadd.f32 0.0, %v1009
      %v1011 = vpop.f32.mrf.mxu0
      %v1012 = vadd.f32 0.0, %v1011
      %1013 = vmatmul.bf16.gmra.mxu0 %v992
      %v1014 = vpop.f32.mrf.mxu0
      %v1015 = vadd.f32 0.0, %v1014
      %v1016 = vpop.f32.mrf.mxu0
      %v1017 = vadd.f32 0.0, %v1016
      %1018 = vmatmul.bf16.gmra.mxu0 %v995
      %v1019 = vpop.f32.mrf.mxu0
      %v1020 = vadd.f32 0.0, %v1019
      %v1021 = vpop.f32.mrf.mxu0
      %v1022 = vadd.f32 0.0, %v1021
      %1023 = vmatmul.bf16.gmra.mxu0 %v998
      %v1024 = vpop.f32.mrf.mxu0
      %v1025 = vadd.f32 0.0, %v1024
      %v1026 = vpop.f32.mrf.mxu0
      %v1027 = vadd.f32 0.0, %v1026
      %1028 = vdwg.mxu0
      %s1029 = scalar_lea.vmem %s5, 4
      %v1030 = vld [vmem:[%s1029] sm:$0x1]
      %v1032 = vperm.slane %v1030, 0
      %v1034 = vmul.f32 %v1010, %v1032
      %v1035 = vmul.f32 %v1012, %v1032
      %v1036 = vmul.f32 %v1015, %v1032
      %v1037 = vmul.f32 %v1017, %v1032
      %v1038 = vmul.f32 %v1020, %v1032
      %v1039 = vmul.f32 %v1022, %v1032
      %v1040 = vmul.f32 %v1025, %v1032
      %v1041 = vmul.f32 %v1027, %v1032
      %v1042 = vadd.f32 %v967, %v1034
      %v1043 = vadd.f32 %v968, %v1035
      %v1044 = vadd.f32 %v969, %v1036
      %v1045 = vadd.f32 %v970, %v1037
      %v1046 = vadd.f32 %v971, %v1038
      %v1047 = vadd.f32 %v972, %v1039
      %v1048 = vadd.f32 %v973, %v1040
      %v1049 = vadd.f32 %v974, %v1041
      %s1050 = scalar_lea.vmem %s2, 320
      %v1051 = vld [vmem:[%s1050] sm:$0xff]
      %v1052 = vld [vmem:[%s1050 + $0x8] sm:$0xff]
      %v1053 = vld [vmem:[%s1050 + $0x10] sm:$0xff]
      %v1054 = vld [vmem:[%s1050 + $0x18] sm:$0xff]
      %v1055 = vld [vmem:[%s1050 + $0x20] sm:$0xff]
      %v1056 = vld [vmem:[%s1050 + $0x28] sm:$0xff]
      %v1057 = vld [vmem:[%s1050 + $0x30] sm:$0xff]
      %v1058 = vld [vmem:[%s1050 + $0x38] sm:$0xff]
      %v1059 = vpack.c.bf16 %v1052, %v1051
      %v1060 = vpack.c.bf16 %v1054, %v1053
      %v1061 = vpack.c.bf16 %v1056, %v1055
      %v1062 = vpack.c.bf16 %v1058, %v1057
      %v1064 = vsel %vm696, %v1059, 0
      %v1067 = vsel %vm696, %v1060, 0
      %v1070 = vsel %vm696, %v1061, 0
      %v1073 = vsel %vm696, %v1062, 0
      %1075 = vmatpush.bf16.msra.mxu0 0
      %1076 = vmatpush.bf16.msra.mxu0 0
      %1077 = vmatpush.bf16.msra.mxu0 0
      %1078 = vmatpush.bf16.msra.mxu0 0
      %1079 = vmatpush.bf16.msra.mxu0 %v695
      %1080 = vmatpush.bf16.msra.mxu0 %v694
      %1081 = vmatpush.bf16.msra.mxu0 %v693
      %1082 = vmatpush.bf16.msra.mxu0 %v692
      %1083 = vmatmul.bf16.gmra.mxu0 %v1064
      %v1084 = vpop.f32.mrf.mxu0
      %v1085 = vadd.f32 0.0, %v1084
      %v1086 = vpop.f32.mrf.mxu0
      %v1087 = vadd.f32 0.0, %v1086
      %1088 = vmatmul.bf16.gmra.mxu0 %v1067
      %v1089 = vpop.f32.mrf.mxu0
      %v1090 = vadd.f32 0.0, %v1089
      %v1091 = vpop.f32.mrf.mxu0
      %v1092 = vadd.f32 0.0, %v1091
      %1093 = vmatmul.bf16.gmra.mxu0 %v1070
      %v1094 = vpop.f32.mrf.mxu0
      %v1095 = vadd.f32 0.0, %v1094
      %v1096 = vpop.f32.mrf.mxu0
      %v1097 = vadd.f32 0.0, %v1096
      %1098 = vmatmul.bf16.gmra.mxu0 %v1073
      %v1099 = vpop.f32.mrf.mxu0
      %v1100 = vadd.f32 0.0, %v1099
      %v1101 = vpop.f32.mrf.mxu0
      %v1102 = vadd.f32 0.0, %v1101
      %1103 = vdwg.mxu0
      %s1104 = scalar_lea.vmem %s5, 5
      %v1105 = vld [vmem:[%s1104] sm:$0x1]
      %v1107 = vperm.slane %v1105, 0
      %v1109 = vmul.f32 %v1085, %v1107
      %v1110 = vmul.f32 %v1087, %v1107
      %v1111 = vmul.f32 %v1090, %v1107
      %v1112 = vmul.f32 %v1092, %v1107
      %v1113 = vmul.f32 %v1095, %v1107
      %v1114 = vmul.f32 %v1097, %v1107
      %v1115 = vmul.f32 %v1100, %v1107
      %v1116 = vmul.f32 %v1102, %v1107
      %v1117 = vadd.f32 %v1042, %v1109
      %v1118 = vadd.f32 %v1043, %v1110
      %v1119 = vadd.f32 %v1044, %v1111
      %v1120 = vadd.f32 %v1045, %v1112
      %v1121 = vadd.f32 %v1046, %v1113
      %v1122 = vadd.f32 %v1047, %v1114
      %v1123 = vadd.f32 %v1048, %v1115
      %v1124 = vadd.f32 %v1049, %v1116
      %s1125 = scalar_lea.vmem %s2, 384
      %v1126 = vld [vmem:[%s1125] sm:$0xff]
      %v1127 = vld [vmem:[%s1125 + $0x8] sm:$0xff]
      %v1128 = vld [vmem:[%s1125 + $0x10] sm:$0xff]
      %v1129 = vld [vmem:[%s1125 + $0x18] sm:$0xff]
      %v1130 = vld [vmem:[%s1125 + $0x20] sm:$0xff]
      %v1131 = vld [vmem:[%s1125 + $0x28] sm:$0xff]
      %v1132 = vld [vmem:[%s1125 + $0x30] sm:$0xff]
      %v1133 = vld [vmem:[%s1125 + $0x38] sm:$0xff]
      %v1134 = vpack.c.bf16 %v1127, %v1126
      %v1135 = vpack.c.bf16 %v1129, %v1128
      %v1136 = vpack.c.bf16 %v1131, %v1130
      %v1137 = vpack.c.bf16 %v1133, %v1132
      %v1139 = vsel %vm696, %v1134, 0
      %v1142 = vsel %vm696, %v1135, 0
      %v1145 = vsel %vm696, %v1136, 0
      %v1148 = vsel %vm696, %v1137, 0
      %1150 = vmatpush.bf16.msra.mxu0 0
      %1151 = vmatpush.bf16.msra.mxu0 0
      %1152 = vmatpush.bf16.msra.mxu0 0
      %1153 = vmatpush.bf16.msra.mxu0 0
      %1154 = vmatpush.bf16.msra.mxu0 %v695
      %1155 = vmatpush.bf16.msra.mxu0 %v694
      %1156 = vmatpush.bf16.msra.mxu0 %v693
      %1157 = vmatpush.bf16.msra.mxu0 %v692
      %1158 = vmatmul.bf16.gmra.mxu0 %v1139
      %v1159 = vpop.f32.mrf.mxu0
      %v1160 = vadd.f32 0.0, %v1159
      %v1161 = vpop.f32.mrf.mxu0
      %v1162 = vadd.f32 0.0, %v1161
      %1163 = vmatmul.bf16.gmra.mxu0 %v1142
      %v1164 = vpop.f32.mrf.mxu0
      %v1165 = vadd.f32 0.0, %v1164
      %v1166 = vpop.f32.mrf.mxu0
      %v1167 = vadd.f32 0.0, %v1166
      %1168 = vmatmul.bf16.gmra.mxu0 %v1145
      %v1169 = vpop.f32.mrf.mxu0
      %v1170 = vadd.f32 0.0, %v1169
      %v1171 = vpop.f32.mrf.mxu0
      %v1172 = vadd.f32 0.0, %v1171
      %1173 = vmatmul.bf16.gmra.mxu0 %v1148
      %v1174 = vpop.f32.mrf.mxu0
      %v1175 = vadd.f32 0.0, %v1174
      %v1176 = vpop.f32.mrf.mxu0
      %v1177 = vadd.f32 0.0, %v1176
      %1178 = vdwg.mxu0
      %s1179 = scalar_lea.vmem %s5, 6
      %v1180 = vld [vmem:[%s1179] sm:$0x1]
      %v1182 = vperm.slane %v1180, 0
      %v1184 = vmul.f32 %v1160, %v1182
      %v1185 = vmul.f32 %v1162, %v1182
      %v1186 = vmul.f32 %v1165, %v1182
      %v1187 = vmul.f32 %v1167, %v1182
      %v1188 = vmul.f32 %v1170, %v1182
      %v1189 = vmul.f32 %v1172, %v1182
      %v1190 = vmul.f32 %v1175, %v1182
      %v1191 = vmul.f32 %v1177, %v1182
      %v1192 = vadd.f32 %v1117, %v1184
      %v1193 = vadd.f32 %v1118, %v1185
      %v1194 = vadd.f32 %v1119, %v1186
      %v1195 = vadd.f32 %v1120, %v1187
      %v1196 = vadd.f32 %v1121, %v1188
      %v1197 = vadd.f32 %v1122, %v1189
      %v1198 = vadd.f32 %v1123, %v1190
      %v1199 = vadd.f32 %v1124, %v1191
      %s1200 = scalar_lea.vmem %s2, 448
      %v1201 = vld [vmem:[%s1200] sm:$0xff]
      %v1202 = vld [vmem:[%s1200 + $0x8] sm:$0xff]
      %v1203 = vld [vmem:[%s1200 + $0x10] sm:$0xff]
      %v1204 = vld [vmem:[%s1200 + $0x18] sm:$0xff]
      %v1205 = vld [vmem:[%s1200 + $0x20] sm:$0xff]
      %v1206 = vld [vmem:[%s1200 + $0x28] sm:$0xff]
      %v1207 = vld [vmem:[%s1200 + $0x30] sm:$0xff]
      %v1208 = vld [vmem:[%s1200 + $0x38] sm:$0xff]
      %v1209 = vpack.c.bf16 %v1202, %v1201
      %v1210 = vpack.c.bf16 %v1204, %v1203
      %v1211 = vpack.c.bf16 %v1206, %v1205
      %v1212 = vpack.c.bf16 %v1208, %v1207
      %v1214 = vsel %vm696, %v1209, 0
      %v1217 = vsel %vm696, %v1210, 0
      %v1220 = vsel %vm696, %v1211, 0
      %v1223 = vsel %vm696, %v1212, 0
      %1225 = vmatpush.bf16.msra.mxu0 0
      %1226 = vmatpush.bf16.msra.mxu0 0
      %1227 = vmatpush.bf16.msra.mxu0 0
      %1228 = vmatpush.bf16.msra.mxu0 0
      %1229 = vmatpush.bf16.msra.mxu0 %v695
      %1230 = vmatpush.bf16.msra.mxu0 %v694
      %1231 = vmatpush.bf16.msra.mxu0 %v693
      %1232 = vmatpush.bf16.msra.mxu0 %v692
      %1233 = vmatmul.bf16.gmra.mxu0 %v1214
      %v1234 = vpop.f32.mrf.mxu0
      %v1235 = vadd.f32 0.0, %v1234
      %v1236 = vpop.f32.mrf.mxu0
      %v1237 = vadd.f32 0.0, %v1236
      %1238 = vmatmul.bf16.gmra.mxu0 %v1217
      %v1239 = vpop.f32.mrf.mxu0
      %v1240 = vadd.f32 0.0, %v1239
      %v1241 = vpop.f32.mrf.mxu0
      %v1242 = vadd.f32 0.0, %v1241
      %1243 = vmatmul.bf16.gmra.mxu0 %v1220
      %v1244 = vpop.f32.mrf.mxu0
      %v1245 = vadd.f32 0.0, %v1244
      %v1246 = vpop.f32.mrf.mxu0
      %v1247 = vadd.f32 0.0, %v1246
      %1248 = vmatmul.bf16.gmra.mxu0 %v1223
      %v1249 = vpop.f32.mrf.mxu0
      %v1250 = vadd.f32 0.0, %v1249
      %v1251 = vpop.f32.mrf.mxu0
      %v1252 = vadd.f32 0.0, %v1251
      %1253 = vdwg.mxu0
      %s1254 = scalar_lea.vmem %s5, 7
      %v1255 = vld [vmem:[%s1254] sm:$0x1]
      %v1257 = vperm.slane %v1255, 0
      %v1259 = vmul.f32 %v1235, %v1257
      %v1260 = vmul.f32 %v1237, %v1257
      %v1261 = vmul.f32 %v1240, %v1257
      %v1262 = vmul.f32 %v1242, %v1257
      %v1263 = vmul.f32 %v1245, %v1257
      %v1264 = vmul.f32 %v1247, %v1257
      %v1265 = vmul.f32 %v1250, %v1257
      %v1266 = vmul.f32 %v1252, %v1257
      %v1267 = vadd.f32 %v1192, %v1259
      %v1268 = vadd.f32 %v1193, %v1260
      %v1269 = vadd.f32 %v1194, %v1261
      %v1270 = vadd.f32 %v1195, %v1262
      %v1271 = vadd.f32 %v1196, %v1263
      %v1272 = vadd.f32 %v1197, %v1264
      %v1273 = vadd.f32 %v1198, %v1265
      %v1274 = vadd.f32 %v1199, %v1266
      %s1275 = scalar_lea.vmem %s2, 512
      %v1276 = vld [vmem:[%s1275] sm:$0xff]
      %v1277 = vld [vmem:[%s1275 + $0x8] sm:$0xff]
      %v1278 = vld [vmem:[%s1275 + $0x10] sm:$0xff]
      %v1279 = vld [vmem:[%s1275 + $0x18] sm:$0xff]
      %v1280 = vld [vmem:[%s1275 + $0x20] sm:$0xff]
      %v1281 = vld [vmem:[%s1275 + $0x28] sm:$0xff]
      %v1282 = vld [vmem:[%s1275 + $0x30] sm:$0xff]
      %v1283 = vld [vmem:[%s1275 + $0x38] sm:$0xff]
      %v1284 = vpack.c.bf16 %v1277, %v1276
      %v1285 = vpack.c.bf16 %v1279, %v1278
      %v1286 = vpack.c.bf16 %v1281, %v1280
      %v1287 = vpack.c.bf16 %v1283, %v1282
      %v1289 = vsel %vm696, %v1284, 0
      %v1292 = vsel %vm696, %v1285, 0
      %v1295 = vsel %vm696, %v1286, 0
      %v1298 = vsel %vm696, %v1287, 0
      %1300 = vmatpush.bf16.msra.mxu0 0
      %1301 = vmatpush.bf16.msra.mxu0 0
      %1302 = vmatpush.bf16.msra.mxu0 0
      %1303 = vmatpush.bf16.msra.mxu0 0
      %1304 = vmatpush.bf16.msra.mxu0 %v695
      %1305 = vmatpush.bf16.msra.mxu0 %v694
      %1306 = vmatpush.bf16.msra.mxu0 %v693
      %1307 = vmatpush.bf16.msra.mxu0 %v692
      %1308 = vmatmul.bf16.gmra.mxu0 %v1289
      %v1309 = vpop.f32.mrf.mxu0
      %v1310 = vadd.f32 0.0, %v1309
      %v1311 = vpop.f32.mrf.mxu0
      %v1312 = vadd.f32 0.0, %v1311
      %1313 = vmatmul.bf16.gmra.mxu0 %v1292
      %v1314 = vpop.f32.mrf.mxu0
      %v1315 = vadd.f32 0.0, %v1314
      %v1316 = vpop.f32.mrf.mxu0
      %v1317 = vadd.f32 0.0, %v1316
      %1318 = vmatmul.bf16.gmra.mxu0 %v1295
      %v1319 = vpop.f32.mrf.mxu0
      %v1320 = vadd.f32 0.0, %v1319
      %v1321 = vpop.f32.mrf.mxu0
      %v1322 = vadd.f32 0.0, %v1321
      %1323 = vmatmul.bf16.gmra.mxu0 %v1298
      %v1324 = vpop.f32.mrf.mxu0
      %v1325 = vadd.f32 0.0, %v1324
      %v1326 = vpop.f32.mrf.mxu0
      %v1327 = vadd.f32 0.0, %v1326
      %1328 = vdwg.mxu0
      %s1329 = scalar_lea.vmem %s5, 8
      %v1330 = vld [vmem:[%s1329] sm:$0x1]
      %v1332 = vperm.slane %v1330, 0
      %v1334 = vmul.f32 %v1310, %v1332
      %v1335 = vmul.f32 %v1312, %v1332
      %v1336 = vmul.f32 %v1315, %v1332
      %v1337 = vmul.f32 %v1317, %v1332
      %v1338 = vmul.f32 %v1320, %v1332
      %v1339 = vmul.f32 %v1322, %v1332
      %v1340 = vmul.f32 %v1325, %v1332
      %v1341 = vmul.f32 %v1327, %v1332
      %v1342 = vadd.f32 %v1267, %v1334
      %v1343 = vadd.f32 %v1268, %v1335
      %v1344 = vadd.f32 %v1269, %v1336
      %v1345 = vadd.f32 %v1270, %v1337
      %v1346 = vadd.f32 %v1271, %v1338
      %v1347 = vadd.f32 %v1272, %v1339
      %v1348 = vadd.f32 %v1273, %v1340
      %v1349 = vadd.f32 %v1274, %v1341
      %v1350 = vld [vmem:[%s6] sm:$0x1]
      %v1352 = vperm.slane %v1350, 0
      %v1354 = vadd.f32 %v1342, %v1352
      %v1355 = vadd.f32 %v1343, %v1352
      %v1356 = vadd.f32 %v1344, %v1352
      %v1357 = vadd.f32 %v1345, %v1352
      %v1358 = vadd.f32 %v1346, %v1352
      %v1359 = vadd.f32 %v1347, %v1352
      %v1360 = vadd.f32 %v1348, %v1352
      %v1361 = vadd.f32 %v1349, %v1352
      %v1362 = vxor.u32 %v1354, 2147483648
      %v1363 = vxor.u32 %v1355, 2147483648
      %v1364 = vxor.u32 %v1356, 2147483648
      %v1365 = vxor.u32 %v1357, 2147483648
      %v1366 = vxor.u32 %v1358, 2147483648
      %v1367 = vxor.u32 %v1359, 2147483648
      %v1368 = vxor.u32 %v1360, 2147483648
      %v1369 = vxor.u32 %v1361, 2147483648
      %v1370 = vmul.f32 %v1362, 1.442695
      %v1371 = vpow.pop %v1370
      %v1372 = vmul.f32 %v1363, 1.442695
      %v1373 = vpow.pop %v1372
      %v1374 = vmul.f32 %v1364, 1.442695
      %v1375 = vpow.pop %v1374
      %v1376 = vmul.f32 %v1365, 1.442695
      %v1377 = vpow.pop %v1376
      %v1378 = vmul.f32 %v1366, 1.442695
      %v1379 = vpow.pop %v1378
      %v1380 = vmul.f32 %v1367, 1.442695
      %v1381 = vpow.pop %v1380
      %v1382 = vmul.f32 %v1368, 1.442695
      %v1383 = vpow.pop %v1382
      %v1384 = vmul.f32 %v1369, 1.442695
      %v1385 = vpow.pop %v1384
      %v1386 = vadd.f32 %v1371, 1.0
      %v1387 = vadd.f32 %v1373, 1.0
      %v1388 = vadd.f32 %v1375, 1.0
      %v1389 = vadd.f32 %v1377, 1.0
      %v1390 = vadd.f32 %v1379, 1.0
      %v1391 = vadd.f32 %v1381, 1.0
      %v1392 = vadd.f32 %v1383, 1.0
      %v1393 = vadd.f32 %v1385, 1.0
      %v1394 = vrcp.pop %v1386
      %v1395 = vmul.f32 %v1386, %v1394
      %v1396 = vsub.f32 1.0, %v1395
      %v1397 = vmul.f32 %v1394, %v1396
      %v1398 = vadd.f32 %v1394, %v1397
      %vm1399 = vweird.f32 %v1386
      %vm1400 = vweird.f32 %v1394
      %vm1401 = vmor %vm1399, %vm1400
      %v1402 = vsel %vm1401, %v1394, %v1398
      %v1403 = vand.u32 2147483647, %v1386
      %vm1404 = vcmp.eq.f32.partialorder %v1403, 8.507059e+37
      %v1405 = vand.u32 %v1386, 2147483648
      %v1406 = vor.u32 1.1754944e-38, %v1405
      %v1407 = vsel %vm1404, %v1406, %v1402
      %v1408 = vmul.f32 1.0, %v1407
      %v1409 = vrcp.pop %v1387
      %v1410 = vmul.f32 %v1387, %v1409
      %v1411 = vsub.f32 1.0, %v1410
      %v1412 = vmul.f32 %v1409, %v1411
      %v1413 = vadd.f32 %v1409, %v1412
      %vm1414 = vweird.f32 %v1387
      %vm1415 = vweird.f32 %v1409
      %vm1416 = vmor %vm1414, %vm1415
      %v1417 = vsel %vm1416, %v1409, %v1413
      %v1418 = vand.u32 2147483647, %v1387
      %vm1419 = vcmp.eq.f32.partialorder %v1418, 8.507059e+37
      %v1420 = vand.u32 %v1387, 2147483648
      %v1421 = vor.u32 1.1754944e-38, %v1420
      %v1422 = vsel %vm1419, %v1421, %v1417
      %v1423 = vmul.f32 1.0, %v1422
      %v1424 = vrcp.pop %v1388
      %v1425 = vmul.f32 %v1388, %v1424
      %v1426 = vsub.f32 1.0, %v1425
      %v1427 = vmul.f32 %v1424, %v1426
      %v1428 = vadd.f32 %v1424, %v1427
      %vm1429 = vweird.f32 %v1388
      %vm1430 = vweird.f32 %v1424
      %vm1431 = vmor %vm1429, %vm1430
      %v1432 = vsel %vm1431, %v1424, %v1428
      %v1433 = vand.u32 2147483647, %v1388
      %vm1434 = vcmp.eq.f32.partialorder %v1433, 8.507059e+37
      %v1435 = vand.u32 %v1388, 2147483648
      %v1436 = vor.u32 1.1754944e-38, %v1435
      %v1437 = vsel %vm1434, %v1436, %v1432
      %v1438 = vmul.f32 1.0, %v1437
      %v1439 = vrcp.pop %v1389
      %v1440 = vmul.f32 %v1389, %v1439
      %v1441 = vsub.f32 1.0, %v1440
      %v1442 = vmul.f32 %v1439, %v1441
      %v1443 = vadd.f32 %v1439, %v1442
      %vm1444 = vweird.f32 %v1389
      %vm1445 = vweird.f32 %v1439
      %vm1446 = vmor %vm1444, %vm1445
      %v1447 = vsel %vm1446, %v1439, %v1443
      %v1448 = vand.u32 2147483647, %v1389
      %vm1449 = vcmp.eq.f32.partialorder %v1448, 8.507059e+37
      %v1450 = vand.u32 %v1389, 2147483648
      %v1451 = vor.u32 1.1754944e-38, %v1450
      %v1452 = vsel %vm1449, %v1451, %v1447
      %v1453 = vmul.f32 1.0, %v1452
      %v1454 = vrcp.pop %v1390
      %v1455 = vmul.f32 %v1390, %v1454
      %v1456 = vsub.f32 1.0, %v1455
      %v1457 = vmul.f32 %v1454, %v1456
      %v1458 = vadd.f32 %v1454, %v1457
      %vm1459 = vweird.f32 %v1390
      %vm1460 = vweird.f32 %v1454
      %vm1461 = vmor %vm1459, %vm1460
      %v1462 = vsel %vm1461, %v1454, %v1458
      %v1463 = vand.u32 2147483647, %v1390
      %vm1464 = vcmp.eq.f32.partialorder %v1463, 8.507059e+37
      %v1465 = vand.u32 %v1390, 2147483648
      %v1466 = vor.u32 1.1754944e-38, %v1465
      %v1467 = vsel %vm1464, %v1466, %v1462
      %v1468 = vmul.f32 1.0, %v1467
      %v1469 = vrcp.pop %v1391
      %v1470 = vmul.f32 %v1391, %v1469
      %v1471 = vsub.f32 1.0, %v1470
      %v1472 = vmul.f32 %v1469, %v1471
      %v1473 = vadd.f32 %v1469, %v1472
      %vm1474 = vweird.f32 %v1391
      %vm1475 = vweird.f32 %v1469
      %vm1476 = vmor %vm1474, %vm1475
      %v1477 = vsel %vm1476, %v1469, %v1473
      %v1478 = vand.u32 2147483647, %v1391
      %vm1479 = vcmp.eq.f32.partialorder %v1478, 8.507059e+37
      %v1480 = vand.u32 %v1391, 2147483648
      %v1481 = vor.u32 1.1754944e-38, %v1480
      %v1482 = vsel %vm1479, %v1481, %v1477
      %v1483 = vmul.f32 1.0, %v1482
      %v1484 = vrcp.pop %v1392
      %v1485 = vmul.f32 %v1392, %v1484
      %v1486 = vsub.f32 1.0, %v1485
      %v1487 = vmul.f32 %v1484, %v1486
      %v1488 = vadd.f32 %v1484, %v1487
      %vm1489 = vweird.f32 %v1392
      %vm1490 = vweird.f32 %v1484
      %vm1491 = vmor %vm1489, %vm1490
      %v1492 = vsel %vm1491, %v1484, %v1488
      %v1493 = vand.u32 2147483647, %v1392
      %vm1494 = vcmp.eq.f32.partialorder %v1493, 8.507059e+37
      %v1495 = vand.u32 %v1392, 2147483648
      %v1496 = vor.u32 1.1754944e-38, %v1495
      %v1497 = vsel %vm1494, %v1496, %v1492
      %v1498 = vmul.f32 1.0, %v1497
      %v1499 = vrcp.pop %v1393
      %v1500 = vmul.f32 %v1393, %v1499
      %v1501 = vsub.f32 1.0, %v1500
      %v1502 = vmul.f32 %v1499, %v1501
      %v1503 = vadd.f32 %v1499, %v1502
      %vm1504 = vweird.f32 %v1393
      %vm1505 = vweird.f32 %v1499
      %vm1506 = vmor %vm1504, %vm1505
      %v1507 = vsel %vm1506, %v1499, %v1503
      %v1508 = vand.u32 2147483647, %v1393
      %vm1509 = vcmp.eq.f32.partialorder %v1508, 8.507059e+37
      %v1510 = vand.u32 %v1393, 2147483648
      %v1511 = vor.u32 1.1754944e-38, %v1510
      %v1512 = vsel %vm1509, %v1511, %v1507
      %v1513 = vmul.f32 1.0, %v1512
      %v1514 = vmul.f32 %v1354, %v1408
      %v1515 = vmul.f32 %v1355, %v1423
      %v1516 = vmul.f32 %v1356, %v1438
      %v1517 = vmul.f32 %v1357, %v1453
      %v1518 = vmul.f32 %v1358, %v1468
      %v1519 = vmul.f32 %v1359, %v1483
      %v1520 = vmul.f32 %v1360, %v1498
      %v1521 = vmul.f32 %v1361, %v1513
      %v1522 = vld [vmem:[%s7] sm:$0xff]
      %v1523 = vld [vmem:[%s7 + $0x8] sm:$0xff]
      %v1524 = vld [vmem:[%s7 + $0x10] sm:$0xff]
      %v1525 = vld [vmem:[%s7 + $0x18] sm:$0xff]
      %v1526 = vpack.c.bf16 %v1515, %v1514
      %v1527 = vpack.c.bf16 %v1517, %v1516
      %v1528 = vpack.c.bf16 %v1519, %v1518
      %v1529 = vpack.c.bf16 %v1521, %v1520
      %v1530 = vpack.c.bf16 %v1523, %v1522
      %v1531 = vpack.c.bf16 %v1525, %v1524
      %vm1532 = vcmask 261120
      %v1534 = vsel %vm1532, %v1526, 0
      %v1537 = vsel %vm1532, %v1527, 0
      %v1540 = vsel %vm1532, %v1528, 0
      %v1543 = vsel %vm1532, %v1529, 0
      %1545 = vmatpush.bf16.msra.mxu0 0
      %1546 = vmatpush.bf16.msra.mxu0 0
      %1547 = vmatpush.bf16.msra.mxu0 0
      %1548 = vmatpush.bf16.msra.mxu0 0
      %1549 = vmatpush.bf16.msra.mxu0 0
      %1550 = vmatpush.bf16.msra.mxu0 0
      %1551 = vmatpush.bf16.msra.mxu0 %v1531
      %1552 = vmatpush.bf16.msra.mxu0 %v1530
      %1553 = vmatmul.bf16.gmra.mxu0 %v1534
      %v1554 = vpop.f32.mrf.mxu0
      %v1555 = vadd.f32 0.0, %v1554
      %v1556 = vpop.f32.mrf.mxu0
      %v1557 = vadd.f32 0.0, %v1556
      %1558 = vmatmul.bf16.gmra.mxu0 %v1537
      %v1559 = vpop.f32.mrf.mxu0
      %v1560 = vadd.f32 0.0, %v1559
      %v1561 = vpop.f32.mrf.mxu0
      %v1562 = vadd.f32 0.0, %v1561
      %1563 = vmatmul.bf16.gmra.mxu0 %v1540
      %v1564 = vpop.f32.mrf.mxu0
      %v1565 = vadd.f32 0.0, %v1564
      %v1566 = vpop.f32.mrf.mxu0
      %v1567 = vadd.f32 0.0, %v1566
      %1568 = vmatmul.bf16.gmra.mxu0 %v1543
      %v1569 = vpop.f32.mrf.mxu0
      %v1570 = vadd.f32 0.0, %v1569
      %v1571 = vpop.f32.mrf.mxu0
      %v1572 = vadd.f32 0.0, %v1571
      %1573 = vdwg.mxu0
      %v1574 = vadd.f32 %v459, %v1555
      %v1575 = vadd.f32 %v460, %v1557
      %v1576 = vadd.f32 %v461, %v1560
      %v1577 = vadd.f32 %v462, %v1562
      %v1578 = vadd.f32 %v463, %v1565
      %v1579 = vadd.f32 %v464, %v1567
      %v1580 = vadd.f32 %v465, %v1570
      %v1581 = vadd.f32 %v466, %v1572
      %v1582 = vld [vmem:[%s8] sm:$0x1]
      %v1584 = vperm.slane %v1582, 0
      %v1586 = vadd.f32 %v1574, %v1584
      %v1587 = vadd.f32 %v1575, %v1584
      %v1588 = vadd.f32 %v1576, %v1584
      %v1589 = vadd.f32 %v1577, %v1584
      %v1590 = vadd.f32 %v1578, %v1584
      %v1591 = vadd.f32 %v1579, %v1584
      %v1592 = vadd.f32 %v1580, %v1584
      %v1593 = vadd.f32 %v1581, %v1584
      %v1594 = vld [vmem:[%s451] sm:$0x1]
      %v1595 = vld [vmem:[%s9] sm:$0xff]
      %v1596 = vpack.c.bf16 %v1594, %v1594
      %v1597 = vpack.c.bf16 %v1595, %v1595
      %v1598 = vld [vmem:[%s10] sm:$0x1]
      %vm1599 = vcmask 64512
      %v1601 = vsel %vm1599, %v1596, 0
      %vm1603 = vcmask 1043456
      %v1605 = vsel %vm1603, %v1597, 0
      %1607 = vmatpush.bf16.msra.mxu0 0
      %1608 = vmatpush.bf16.msra.mxu0 0
      %1609 = vmatpush.bf16.msra.mxu0 0
      %1610 = vmatpush.bf16.msra.mxu0 0
      %1611 = vmatpush.bf16.msra.mxu0 0
      %1612 = vmatpush.bf16.msra.mxu0 0
      %1613 = vmatpush.bf16.msra.mxu0 0
      %1614 = vmatpush.bf16.msra.mxu0 %v1605
      %1615 = vmatmul.bf16.gmra.mxu0 %v1601
      %v1616 = vpop.f32.mrf.mxu0
      %v1617 = vadd.f32 %v1598, %v1616
      %v1618 = vpop.f32.mrf.mxu0
      %1619 = vdwg.mxu0
      %v1620 = vld [vmem:[%s11] sm:$0xff]
      %v1621 = vpack.c.bf16 %v1620, %v1620
      %v1622 = vld [vmem:[%s12] sm:$0x1]
      %v1624 = vsel %vm1603, %v1621, 0
      %1626 = vmatpush.bf16.msra.mxu0 0
      %1627 = vmatpush.bf16.msra.mxu0 0
      %1628 = vmatpush.bf16.msra.mxu0 0
      %1629 = vmatpush.bf16.msra.mxu0 0
      %1630 = vmatpush.bf16.msra.mxu0 0
      %1631 = vmatpush.bf16.msra.mxu0 0
      %1632 = vmatpush.bf16.msra.mxu0 0
      %1633 = vmatpush.bf16.msra.mxu0 %v1624
      %1634 = vmatmul.bf16.gmra.mxu0 %v1601
      %v1635 = vpop.f32.mrf.mxu0
      %v1636 = vadd.f32 %v1622, %v1635
      %v1637 = vpop.f32.mrf.mxu0
      %1638 = vdwg.mxu0
      %v1639 = vadd.f32 %v1617, 1.0
      %v1640 = vperm.slane %v1639, 0
      %v1641 = vmul.f32 %v1586, %v1640
      %v1642 = vmul.f32 %v1587, %v1640
      %v1643 = vmul.f32 %v1588, %v1640
      %v1644 = vmul.f32 %v1589, %v1640
      %v1645 = vmul.f32 %v1590, %v1640
      %v1646 = vmul.f32 %v1591, %v1640
      %v1647 = vmul.f32 %v1592, %v1640
      %v1648 = vmul.f32 %v1593, %v1640
      %v1649 = vperm.slane %v1636, 0
      %v1650 = vadd.f32 %v1641, %v1649
      %v1651 = vadd.f32 %v1642, %v1649
      %v1652 = vadd.f32 %v1643, %v1649
      %v1653 = vadd.f32 %v1644, %v1649
      %v1654 = vadd.f32 %v1645, %v1649
      %v1655 = vadd.f32 %v1646, %v1649
      %v1656 = vadd.f32 %v1647, %v1649
      %v1657 = vadd.f32 %v1648, %v1649
      %1658 = vst.msk [vmem:[%s456] sm:$0xff] %vm478, %v1650
      %1659 = vst.msk [vmem:[%s456 + $0x8] sm:$0xff] %vm478, %v1651
      %1660 = vst.msk [vmem:[%s456 + $0x10] sm:$0xff] %vm478, %v1652
      %1661 = vst.msk [vmem:[%s456 + $0x18] sm:$0xff] %vm478, %v1653
      %1662 = vst.msk [vmem:[%s456 + $0x20] sm:$0xff] %vm478, %v1654
      %1663 = vst.msk [vmem:[%s456 + $0x28] sm:$0xff] %vm478, %v1655
      %1664 = vst.msk [vmem:[%s456 + $0x30] sm:$0xff] %vm478, %v1656
      %1665 = vst.msk [vmem:[%s456 + $0x38] sm:$0xff] %vm478, %v1657
      %s1666 = smul.u32 8, %s24
      %p1667 = scmp.lt.s32.totalorder %s1666, 15
      %s1668 = scalar_select %p1667, %s1666, 15
      %s1669 = smul.addr %s1668, 8
      %s1670 = scalar_lea.vmem %s13, %s1669
      // Predicated region
      $region73: #{rt1_forward.8} parent=71 // pred_check
        %p1671 = pneg %p325
      $region74: #{rt1_forward.8} parent=71 // pred_check_branch
        %1673 = sbr.rel (%p1671) target = $region76
      $region75: #{rt1_forward.8} parent=71 // pred_region
        %s1674 = smul.u32 8, %s24
      $region76: #{rt1_forward.8} parent=71 // pred_fallthru
        _
    $region72: #{rt1_forward.8} parent=5 // pred_fallthru
      _
    %p1675 = scmp.le.s32.totalorder 2, %s19
    // Predicated region
    $region77: #{rt1_forward.8} parent=5 // pred_check
      %p1676 = pneg %p1675
    $region78: #{rt1_forward.8} parent=5 // pred_check_branch
      %1678 = sbr.rel (%p1676) target = $region80
    $region79: #{rt1_forward.8} parent=5 // pred_region
      %s1679 = ssub.s32 %s19, 2
      // Predicated region
      $region81: #{rt1_forward.8} parent=79 // pred_check
        %p1680 = pneg %p331
      $region82: #{rt1_forward.8} parent=79 // pred_check_branch
        %1682 = sbr.rel (%p1680) target = $region84
      $region83: #{rt1_forward.8} parent=79 // pred_region
        %s1683 = smul.u32 8, %s25
        %p1684 = scmp.lt.s32.totalorder %s1683, 15
        %s1685 = scalar_select %p1684, %s1683, 15
        %s1686 = smul.addr %s1685, 8
        %s1687 = scalar_lea.vmem %s13, %s1686
      $region84: #{rt1_forward.8} parent=79 // pred_fallthru
        _
    $region80: #{rt1_forward.8} parent=5 // pred_fallthru
      _
  $region6: #{rt1_forward.8} parent=0 // loop_footer
    %s23 = sadd.s32 1, %s19
  $region7: #{rt1_forward.8} parent=0 // loop_footer_branch
    %18 = sbr.rel target = $region3
  $region8: #{rt1_forward.8} parent=0 // loop_exit
    _

// kernel: rt1_forward.11
$region0: #{rt1_forward.11}
  #allocation0 [shape = 'u32[]', space=smem, size = 0x4, offset = 0x4, fixed_abs, tag = 'smem constant byte address 0x4 - core index']
  #allocation1 [shape = 'u32[72,128]{1,0:T(1,128)}', space=vmem, size = 0x9000, scoped, tag = 'internal scratch']
  %s0 = inlined_call_operand.vmem [shape: f32[2,8,32], index: 0, kind: input, shape index: {}]
  %s1 = inlined_call_operand.vmem [shape: f32[1,32], index: 1, kind: input, shape index: {}]
  %s2 = inlined_call_operand.vmem [shape: f32[1,32], index: 2, kind: input, shape index: {}]
  %s3 = inlined_call_operand.vmem [shape: f32[2,32,16], index: 3, kind: input, shape index: {}]
  %s4 = inlined_call_operand.vmem [shape: f32[2,1,16], index: 4, kind: input, shape index: {}]
  %s5 = inlined_call_operand.vmem [shape: f32[2,32,16], index: 5, kind: input, shape index: {}]
  %s6 = inlined_call_operand.vmem [shape: f32[2,1,16], index: 6, kind: input, shape index: {}]
  %s7 = inlined_call_operand.vmem [shape: f32[2,32,16], index: 7, kind: input, shape index: {}]
  %s8 = inlined_call_operand.vmem [shape: f32[2,1,16], index: 8, kind: input, shape index: {}]
  %s9 = inlined_call_operand.vmem [shape: f32[2,16,32], index: 9, kind: input, shape index: {}]
  %s10 = inlined_call_operand.vmem [shape: f32[1,32], index: 10, kind: input, shape index: {}]
  %s11 = inlined_call_operand.vmem [shape: f32[1,32], index: 11, kind: input, shape index: {}]
  %s12 = inlined_call_operand.vmem [shape: f32[1,32], index: 12, kind: input, shape index: {}]
  %s13 = inlined_call_operand.vmem [shape: f32[32,64], index: 13, kind: input, shape index: {}]
  %s14 = inlined_call_operand.vmem [shape: f32[1,64], index: 14, kind: input, shape index: {}]
  %s15 = inlined_call_operand.vmem [shape: f32[64,32], index: 15, kind: input, shape index: {}]
  %s16 = inlined_call_operand.vmem [shape: f32[1,32], index: 16, kind: input, shape index: {}]
  %s17 = inlined_call_operand.vmem [shape: f32[2,8,32], index: 17, kind: output, shape index: {}]
  %s18 = sld [smem:[#allocation0]]
  $region101: #{rt1_forward.11} parent=0
    _
  %s20 = ssub.s32 1, %s18
  %s21 = scalar_select 0, %s20, %s18
  loop: start=0, step=1, limit=4
  $region2: #{rt1_forward.11} parent=0 // loop_pre_header
    _
  $region3: #{rt1_forward.11} parent=0 // loop_header
    %s23 = sphi 0, %s27
    %p24 = scmp.ge.s32.totalorder %s23, 4
    %s33 = sphi 0, %s35
    %s36 = sphi 0, %s33
    %s37 = sphi 0, %s36
    %s53 = sphi 0, %s37
    %s57 = sphi 0, %s57
    %s59 = sphi 0, %s57
    %s60 = sphi 0, %s59
    %s74 = sphi 0, %s60
    %s78 = sphi 0, %s78
    %s80 = sphi 0, %s78
    %s81 = sphi 0, %s80
    %s95 = sphi 0, %s81
    %s99 = sphi 0, %s99
    %s101 = sphi 0, %s99
    %s102 = sphi 0, %s101
    %s116 = sphi 0, %s102
    %s120 = sphi 0, %s120
    %s122 = sphi 0, %s120
    %s123 = sphi 0, %s122
    %s137 = sphi 0, %s123
    %s141 = sphi 0, %s141
    %s143 = sphi 0, %s141
    %s144 = sphi 0, %s143
    %s158 = sphi 0, %s144
    %s162 = sphi 0, %s162
    %s164 = sphi 0, %s162
    %s165 = sphi 0, %s164
    %s179 = sphi 0, %s165
    %s183 = sphi 0, %s183
    %s185 = sphi 0, %s183
    %s186 = sphi 0, %s185
    %s200 = sphi 0, %s186
    %s204 = sphi 0, %s204
    %s206 = sphi 0, %s204
    %s207 = sphi 0, %s206
    %s221 = sphi 0, %s207
    %s225 = sphi 0, %s225
    %s227 = sphi 0, %s225
    %s228 = sphi 0, %s227
    %s242 = sphi 0, %s228
    %s246 = sphi 0, %s246
    %s248 = sphi 0, %s246
    %s249 = sphi 0, %s248
    %s263 = sphi 0, %s249
    %s267 = sphi 0, %s267
    %s269 = sphi 0, %s267
    %s270 = sphi 0, %s269
    %s284 = sphi 0, %s270
    %s288 = sphi 0, %s288
    %s290 = sphi 0, %s288
    %s291 = sphi 0, %s290
    %s305 = sphi 0, %s291
    %s309 = sphi 0, %s309
    %s311 = sphi 0, %s309
    %s312 = sphi 0, %s311
    %s326 = sphi 0, %s312
    %s330 = sphi 0, %s330
    %s332 = sphi 0, %s330
    %s333 = sphi 0, %s332
    %s347 = sphi 0, %s333
    %s351 = sphi 0, %s351
    %s353 = sphi 0, %s351
    %s354 = sphi 0, %s353
    %s368 = sphi 0, %s354
    %s372 = sphi 0, %s372
    %s374 = sphi 0, %s372
    %s375 = sphi 0, %s374
    %s389 = sphi 0, %s375
    %s395 = sphi 0, %s397
    %s398 = sphi 0, %s395
    %s399 = sphi 0, %s398
    %s415 = sphi 0, %s399
  $region4: #{rt1_forward.11} parent=0 // loop_header_branch
    %26 = sbr.rel (%p24) target = $region8
  $region5: #{rt1_forward.11} parent=0 // loop_body
    %s28 = ssub.s32 %s23, 1
    %s29 = ssub.s32 %s23, 2
    %s30 = sadd.s32 %s23, 1
    %s31 = ssub.s32 %s23, %s30
    %p32 = scmp.eq.s32.totalorder %s31, 0
    %s34 = sadd.s32 %s33, 1
    %s35 = scalar_select %p32, %s33, %s34
    %p38 = pneg %p32
    %p39 = scmp.eq.s32.totalorder %s23, 1
    %p40 = por %p38, %p39
    %p41 = scmp.ne.s32.totalorder %s33, %s36
    %p42 = scmp.eq.s32.totalorder %s23, 0
    %p43 = por %p41, %p42
    %p44 = scmp.ne.s32.totalorder %s33, %s36
    %p45 = scmp.eq.s32.totalorder %s28, 1
    %p46 = por %p44, %p45
    %p47 = scmp.ne.s32.totalorder %s36, %s37
    %p48 = scmp.eq.s32.totalorder %s28, 0
    %p49 = por %p47, %p48
    %p50 = scmp.ne.s32.totalorder %s36, %s37
    %p51 = scmp.eq.s32.totalorder %s29, 1
    %p52 = por %p50, %p51
    %p54 = scmp.ne.s32.totalorder %s37, %s53
    %p55 = scmp.eq.s32.totalorder %s29, 0
    %p56 = por %p54, %p55
    %s58 = sadd.s32 %s57, 1
    %p61 = scmp.eq.s32.totalorder %s23, 1
    %p62 = scmp.ne.s32.totalorder %s57, %s59
    %p63 = scmp.eq.s32.totalorder %s23, 0
    %p64 = por %p62, %p63
    %p65 = scmp.ne.s32.totalorder %s57, %s59
    %p66 = scmp.eq.s32.totalorder %s28, 1
    %p67 = por %p65, %p66
    %p68 = scmp.ne.s32.totalorder %s59, %s60
    %p69 = scmp.eq.s32.totalorder %s28, 0
    %p70 = por %p68, %p69
    %p71 = scmp.ne.s32.totalorder %s59, %s60
    %p72 = scmp.eq.s32.totalorder %s29, 1
    %p73 = por %p71, %p72
    %p75 = scmp.ne.s32.totalorder %s60, %s74
    %p76 = scmp.eq.s32.totalorder %s29, 0
    %p77 = por %p75, %p76
    %s79 = sadd.s32 %s78, 1
    %p82 = scmp.eq.s32.totalorder %s23, 1
    %p83 = scmp.ne.s32.totalorder %s78, %s80
    %p84 = scmp.eq.s32.totalorder %s23, 0
    %p85 = por %p83, %p84
    %p86 = scmp.ne.s32.totalorder %s78, %s80
    %p87 = scmp.eq.s32.totalorder %s28, 1
    %p88 = por %p86, %p87
    %p89 = scmp.ne.s32.totalorder %s80, %s81
    %p90 = scmp.eq.s32.totalorder %s28, 0
    %p91 = por %p89, %p90
    %p92 = scmp.ne.s32.totalorder %s80, %s81
    %p93 = scmp.eq.s32.totalorder %s29, 1
    %p94 = por %p92, %p93
    %p96 = scmp.ne.s32.totalorder %s81, %s95
    %p97 = scmp.eq.s32.totalorder %s29, 0
    %p98 = por %p96, %p97
    %s100 = sadd.s32 %s99, 1
    %p103 = scmp.eq.s32.totalorder %s23, 1
    %p104 = scmp.ne.s32.totalorder %s99, %s101
    %p105 = scmp.eq.s32.totalorder %s23, 0
    %p106 = por %p104, %p105
    %p107 = scmp.ne.s32.totalorder %s99, %s101
    %p108 = scmp.eq.s32.totalorder %s28, 1
    %p109 = por %p107, %p108
    %p110 = scmp.ne.s32.totalorder %s101, %s102
    %p111 = scmp.eq.s32.totalorder %s28, 0
    %p112 = por %p110, %p111
    %p113 = scmp.ne.s32.totalorder %s101, %s102
    %p114 = scmp.eq.s32.totalorder %s29, 1
    %p115 = por %p113, %p114
    %p117 = scmp.ne.s32.totalorder %s102, %s116
    %p118 = scmp.eq.s32.totalorder %s29, 0
    %p119 = por %p117, %p118
    %s121 = sadd.s32 %s120, 1
    %p124 = scmp.eq.s32.totalorder %s23, 1
    %p125 = scmp.ne.s32.totalorder %s120, %s122
    %p126 = scmp.eq.s32.totalorder %s23, 0
    %p127 = por %p125, %p126
    %p128 = scmp.ne.s32.totalorder %s120, %s122
    %p129 = scmp.eq.s32.totalorder %s28, 1
    %p130 = por %p128, %p129
    %p131 = scmp.ne.s32.totalorder %s122, %s123
    %p132 = scmp.eq.s32.totalorder %s28, 0
    %p133 = por %p131, %p132
    %p134 = scmp.ne.s32.totalorder %s122, %s123
    %p135 = scmp.eq.s32.totalorder %s29, 1
    %p136 = por %p134, %p135
    %p138 = scmp.ne.s32.totalorder %s123, %s137
    %p139 = scmp.eq.s32.totalorder %s29, 0
    %p140 = por %p138, %p139
    %s142 = sadd.s32 %s141, 1
    %p145 = scmp.eq.s32.totalorder %s23, 1
    %p146 = scmp.ne.s32.totalorder %s141, %s143
    %p147 = scmp.eq.s32.totalorder %s23, 0
    %p148 = por %p146, %p147
    %p149 = scmp.ne.s32.totalorder %s141, %s143
    %p150 = scmp.eq.s32.totalorder %s28, 1
    %p151 = por %p149, %p150
    %p152 = scmp.ne.s32.totalorder %s143, %s144
    %p153 = scmp.eq.s32.totalorder %s28, 0
    %p154 = por %p152, %p153
    %p155 = scmp.ne.s32.totalorder %s143, %s144
    %p156 = scmp.eq.s32.totalorder %s29, 1
    %p157 = por %p155, %p156
    %p159 = scmp.ne.s32.totalorder %s144, %s158
    %p160 = scmp.eq.s32.totalorder %s29, 0
    %p161 = por %p159, %p160
    %s163 = sadd.s32 %s162, 1
    %p166 = scmp.eq.s32.totalorder %s23, 1
    %p167 = scmp.ne.s32.totalorder %s162, %s164
    %p168 = scmp.eq.s32.totalorder %s23, 0
    %p169 = por %p167, %p168
    %p170 = scmp.ne.s32.totalorder %s162, %s164
    %p171 = scmp.eq.s32.totalorder %s28, 1
    %p172 = por %p170, %p171
    %p173 = scmp.ne.s32.totalorder %s164, %s165
    %p174 = scmp.eq.s32.totalorder %s28, 0
    %p175 = por %p173, %p174
    %p176 = scmp.ne.s32.totalorder %s164, %s165
    %p177 = scmp.eq.s32.totalorder %s29, 1
    %p178 = por %p176, %p177
    %p180 = scmp.ne.s32.totalorder %s165, %s179
    %p181 = scmp.eq.s32.totalorder %s29, 0
    %p182 = por %p180, %p181
    %s184 = sadd.s32 %s183, 1
    %p187 = scmp.eq.s32.totalorder %s23, 1
    %p188 = scmp.ne.s32.totalorder %s183, %s185
    %p189 = scmp.eq.s32.totalorder %s23, 0
    %p190 = por %p188, %p189
    %p191 = scmp.ne.s32.totalorder %s183, %s185
    %p192 = scmp.eq.s32.totalorder %s28, 1
    %p193 = por %p191, %p192
    %p194 = scmp.ne.s32.totalorder %s185, %s186
    %p195 = scmp.eq.s32.totalorder %s28, 0
    %p196 = por %p194, %p195
    %p197 = scmp.ne.s32.totalorder %s185, %s186
    %p198 = scmp.eq.s32.totalorder %s29, 1
    %p199 = por %p197, %p198
    %p201 = scmp.ne.s32.totalorder %s186, %s200
    %p202 = scmp.eq.s32.totalorder %s29, 0
    %p203 = por %p201, %p202
    %s205 = sadd.s32 %s204, 1
    %p208 = scmp.eq.s32.totalorder %s23, 1
    %p209 = scmp.ne.s32.totalorder %s204, %s206
    %p210 = scmp.eq.s32.totalorder %s23, 0
    %p211 = por %p209, %p210
    %p212 = scmp.ne.s32.totalorder %s204, %s206
    %p213 = scmp.eq.s32.totalorder %s28, 1
    %p214 = por %p212, %p213
    %p215 = scmp.ne.s32.totalorder %s206, %s207
    %p216 = scmp.eq.s32.totalorder %s28, 0
    %p217 = por %p215, %p216
    %p218 = scmp.ne.s32.totalorder %s206, %s207
    %p219 = scmp.eq.s32.totalorder %s29, 1
    %p220 = por %p218, %p219
    %p222 = scmp.ne.s32.totalorder %s207, %s221
    %p223 = scmp.eq.s32.totalorder %s29, 0
    %p224 = por %p222, %p223
    %s226 = sadd.s32 %s225, 1
    %p229 = scmp.eq.s32.totalorder %s23, 1
    %p230 = scmp.ne.s32.totalorder %s225, %s227
    %p231 = scmp.eq.s32.totalorder %s23, 0
    %p232 = por %p230, %p231
    %p233 = scmp.ne.s32.totalorder %s225, %s227
    %p234 = scmp.eq.s32.totalorder %s28, 1
    %p235 = por %p233, %p234
    %p236 = scmp.ne.s32.totalorder %s227, %s228
    %p237 = scmp.eq.s32.totalorder %s28, 0
    %p238 = por %p236, %p237
    %p239 = scmp.ne.s32.totalorder %s227, %s228
    %p240 = scmp.eq.s32.totalorder %s29, 1
    %p241 = por %p239, %p240
    %p243 = scmp.ne.s32.totalorder %s228, %s242
    %p244 = scmp.eq.s32.totalorder %s29, 0
    %p245 = por %p243, %p244
    %s247 = sadd.s32 %s246, 1
    %p250 = scmp.eq.s32.totalorder %s23, 1
    %p251 = scmp.ne.s32.totalorder %s246, %s248
    %p252 = scmp.eq.s32.totalorder %s23, 0
    %p253 = por %p251, %p252
    %p254 = scmp.ne.s32.totalorder %s246, %s248
    %p255 = scmp.eq.s32.totalorder %s28, 1
    %p256 = por %p254, %p255
    %p257 = scmp.ne.s32.totalorder %s248, %s249
    %p258 = scmp.eq.s32.totalorder %s28, 0
    %p259 = por %p257, %p258
    %p260 = scmp.ne.s32.totalorder %s248, %s249
    %p261 = scmp.eq.s32.totalorder %s29, 1
    %p262 = por %p260, %p261
    %p264 = scmp.ne.s32.totalorder %s249, %s263
    %p265 = scmp.eq.s32.totalorder %s29, 0
    %p266 = por %p264, %p265
    %s268 = sadd.s32 %s267, 1
    %p271 = scmp.eq.s32.totalorder %s23, 1
    %p272 = scmp.ne.s32.totalorder %s267, %s269
    %p273 = scmp.eq.s32.totalorder %s23, 0
    %p274 = por %p272, %p273
    %p275 = scmp.ne.s32.totalorder %s267, %s269
    %p276 = scmp.eq.s32.totalorder %s28, 1
    %p277 = por %p275, %p276
    %p278 = scmp.ne.s32.totalorder %s269, %s270
    %p279 = scmp.eq.s32.totalorder %s28, 0
    %p280 = por %p278, %p279
    %p281 = scmp.ne.s32.totalorder %s269, %s270
    %p282 = scmp.eq.s32.totalorder %s29, 1
    %p283 = por %p281, %p282
    %p285 = scmp.ne.s32.totalorder %s270, %s284
    %p286 = scmp.eq.s32.totalorder %s29, 0
    %p287 = por %p285, %p286
    %s289 = sadd.s32 %s288, 1
    %p292 = scmp.eq.s32.totalorder %s23, 1
    %p293 = scmp.ne.s32.totalorder %s288, %s290
    %p294 = scmp.eq.s32.totalorder %s23, 0
    %p295 = por %p293, %p294
    %p296 = scmp.ne.s32.totalorder %s288, %s290
    %p297 = scmp.eq.s32.totalorder %s28, 1
    %p298 = por %p296, %p297
    %p299 = scmp.ne.s32.totalorder %s290, %s291
    %p300 = scmp.eq.s32.totalorder %s28, 0
    %p301 = por %p299, %p300
    %p302 = scmp.ne.s32.totalorder %s290, %s291
    %p303 = scmp.eq.s32.totalorder %s29, 1
    %p304 = por %p302, %p303
    %p306 = scmp.ne.s32.totalorder %s291, %s305
    %p307 = scmp.eq.s32.totalorder %s29, 0
    %p308 = por %p306, %p307
    %s310 = sadd.s32 %s309, 1
    %p313 = scmp.eq.s32.totalorder %s23, 1
    %p314 = scmp.ne.s32.totalorder %s309, %s311
    %p315 = scmp.eq.s32.totalorder %s23, 0
    %p316 = por %p314, %p315
    %p317 = scmp.ne.s32.totalorder %s309, %s311
    %p318 = scmp.eq.s32.totalorder %s28, 1
    %p319 = por %p317, %p318
    %p320 = scmp.ne.s32.totalorder %s311, %s312
    %p321 = scmp.eq.s32.totalorder %s28, 0
    %p322 = por %p320, %p321
    %p323 = scmp.ne.s32.totalorder %s311, %s312
    %p324 = scmp.eq.s32.totalorder %s29, 1
    %p325 = por %p323, %p324
    %p327 = scmp.ne.s32.totalorder %s312, %s326
    %p328 = scmp.eq.s32.totalorder %s29, 0
    %p329 = por %p327, %p328
    %s331 = sadd.s32 %s330, 1
    %p334 = scmp.eq.s32.totalorder %s23, 1
    %p335 = scmp.ne.s32.totalorder %s330, %s332
    %p336 = scmp.eq.s32.totalorder %s23, 0
    %p337 = por %p335, %p336
    %p338 = scmp.ne.s32.totalorder %s330, %s332
    %p339 = scmp.eq.s32.totalorder %s28, 1
    %p340 = por %p338, %p339
    %p341 = scmp.ne.s32.totalorder %s332, %s333
    %p342 = scmp.eq.s32.totalorder %s28, 0
    %p343 = por %p341, %p342
    %p344 = scmp.ne.s32.totalorder %s332, %s333
    %p345 = scmp.eq.s32.totalorder %s29, 1
    %p346 = por %p344, %p345
    %p348 = scmp.ne.s32.totalorder %s333, %s347
    %p349 = scmp.eq.s32.totalorder %s29, 0
    %p350 = por %p348, %p349
    %s352 = sadd.s32 %s351, 1
    %p355 = scmp.eq.s32.totalorder %s23, 1
    %p356 = scmp.ne.s32.totalorder %s351, %s353
    %p357 = scmp.eq.s32.totalorder %s23, 0
    %p358 = por %p356, %p357
    %p359 = scmp.ne.s32.totalorder %s351, %s353
    %p360 = scmp.eq.s32.totalorder %s28, 1
    %p361 = por %p359, %p360
    %p362 = scmp.ne.s32.totalorder %s353, %s354
    %p363 = scmp.eq.s32.totalorder %s28, 0
    %p364 = por %p362, %p363
    %p365 = scmp.ne.s32.totalorder %s353, %s354
    %p366 = scmp.eq.s32.totalorder %s29, 1
    %p367 = por %p365, %p366
    %p369 = scmp.ne.s32.totalorder %s354, %s368
    %p370 = scmp.eq.s32.totalorder %s29, 0
    %p371 = por %p369, %p370
    %s373 = sadd.s32 %s372, 1
    %p376 = scmp.eq.s32.totalorder %s23, 1
    %p377 = scmp.ne.s32.totalorder %s372, %s374
    %p378 = scmp.eq.s32.totalorder %s23, 0
    %p379 = por %p377, %p378
    %p380 = scmp.ne.s32.totalorder %s372, %s374
    %p381 = scmp.eq.s32.totalorder %s28, 1
    %p382 = por %p380, %p381
    %p383 = scmp.ne.s32.totalorder %s374, %s375
    %p384 = scmp.eq.s32.totalorder %s28, 0
    %p385 = por %p383, %p384
    %p386 = scmp.ne.s32.totalorder %s374, %s375
    %p387 = scmp.eq.s32.totalorder %s29, 1
    %p388 = por %p386, %p387
    %p390 = scmp.ne.s32.totalorder %s375, %s389
    %p391 = scmp.eq.s32.totalorder %s29, 0
    %p392 = por %p390, %p391
    %s393 = ssub.s32 %s23, %s30
    %p394 = scmp.eq.s32.totalorder %s393, 0
    %s396 = sadd.s32 %s395, 1
    %s397 = scalar_select %p394, %s395, %s396
    %p400 = pneg %p394
    %p401 = scmp.eq.s32.totalorder %s23, 1
    %p402 = por %p400, %p401
    %p403 = scmp.ne.s32.totalorder %s395, %s398
    %p404 = scmp.eq.s32.totalorder %s23, 0
    %p405 = por %p403, %p404
    %p406 = scmp.ne.s32.totalorder %s395, %s398
    %p407 = scmp.eq.s32.totalorder %s28, 1
    %p408 = por %p406, %p407
    %p409 = scmp.ne.s32.totalorder %s398, %s399
    %p410 = scmp.eq.s32.totalorder %s28, 0
    %p411 = por %p409, %p410
    %p412 = scmp.ne.s32.totalorder %s398, %s399
    %p413 = scmp.eq.s32.totalorder %s29, 1
    %p414 = por %p412, %p413
    %p416 = scmp.ne.s32.totalorder %s399, %s415
    %p417 = scmp.eq.s32.totalorder %s29, 0
    %p418 = por %p416, %p417
    %p419 = scmp.le.s32.totalorder 1, %s23
    %p420 = scmp.lt.s32.totalorder %s23, 3
    %p421 = pnand %p419, %p420
    %p422 = pneg %p421
    // Predicated region
    $region9: #{rt1_forward.11} parent=5 // pred_check
      _
    $region10: #{rt1_forward.11} parent=5 // pred_check_branch
      %424 = sbr.rel (%p421) target = $region12
    $region11: #{rt1_forward.11} parent=5 // pred_region
      %s425 = ssub.s32 %s23, 1
      // Predicated region
      $region13: #{rt1_forward.11} parent=11 // pred_check
        %p426 = pneg %p70
      $region14: #{rt1_forward.11} parent=11 // pred_check_branch
        %428 = sbr.rel (%p426) target = $region16
      $region15: #{rt1_forward.11} parent=11 // pred_region
        _
      $region16: #{rt1_forward.11} parent=11 // pred_fallthru
        _
      // Predicated region
      $region17: #{rt1_forward.11} parent=11 // pred_check
        %p429 = pneg %p91
      $region18: #{rt1_forward.11} parent=11 // pred_check_branch
        %431 = sbr.rel (%p429) target = $region20
      $region19: #{rt1_forward.11} parent=11 // pred_region
        _
      $region20: #{rt1_forward.11} parent=11 // pred_fallthru
        _
      // Predicated region
      $region21: #{rt1_forward.11} parent=11 // pred_check
        %p432 = pneg %p112
      $region22: #{rt1_forward.11} parent=11 // pred_check_branch
        %434 = sbr.rel (%p432) target = $region24
      $region23: #{rt1_forward.11} parent=11 // pred_region
        _
      $region24: #{rt1_forward.11} parent=11 // pred_fallthru
        _
      // Predicated region
      $region25: #{rt1_forward.11} parent=11 // pred_check
        %p435 = pneg %p133
      $region26: #{rt1_forward.11} parent=11 // pred_check_branch
        %437 = sbr.rel (%p435) target = $region28
      $region27: #{rt1_forward.11} parent=11 // pred_region
        _
      $region28: #{rt1_forward.11} parent=11 // pred_fallthru
        _
      // Predicated region
      $region29: #{rt1_forward.11} parent=11 // pred_check
        %p438 = pneg %p154
      $region30: #{rt1_forward.11} parent=11 // pred_check_branch
        %440 = sbr.rel (%p438) target = $region32
      $region31: #{rt1_forward.11} parent=11 // pred_region
        _
      $region32: #{rt1_forward.11} parent=11 // pred_fallthru
        _
      // Predicated region
      $region33: #{rt1_forward.11} parent=11 // pred_check
        %p441 = pneg %p175
      $region34: #{rt1_forward.11} parent=11 // pred_check_branch
        %443 = sbr.rel (%p441) target = $region36
      $region35: #{rt1_forward.11} parent=11 // pred_region
        _
      $region36: #{rt1_forward.11} parent=11 // pred_fallthru
        _
      // Predicated region
      $region37: #{rt1_forward.11} parent=11 // pred_check
        %p444 = pneg %p196
      $region38: #{rt1_forward.11} parent=11 // pred_check_branch
        %446 = sbr.rel (%p444) target = $region40
      $region39: #{rt1_forward.11} parent=11 // pred_region
        _
      $region40: #{rt1_forward.11} parent=11 // pred_fallthru
        _
      // Predicated region
      $region41: #{rt1_forward.11} parent=11 // pred_check
        %p447 = pneg %p217
      $region42: #{rt1_forward.11} parent=11 // pred_check_branch
        %449 = sbr.rel (%p447) target = $region44
      $region43: #{rt1_forward.11} parent=11 // pred_region
        _
      $region44: #{rt1_forward.11} parent=11 // pred_fallthru
        _
      // Predicated region
      $region45: #{rt1_forward.11} parent=11 // pred_check
        %p450 = pneg %p238
      $region46: #{rt1_forward.11} parent=11 // pred_check_branch
        %452 = sbr.rel (%p450) target = $region48
      $region47: #{rt1_forward.11} parent=11 // pred_region
        _
      $region48: #{rt1_forward.11} parent=11 // pred_fallthru
        _
      // Predicated region
      $region49: #{rt1_forward.11} parent=11 // pred_check
        %p453 = pneg %p259
      $region50: #{rt1_forward.11} parent=11 // pred_check_branch
        %455 = sbr.rel (%p453) target = $region52
      $region51: #{rt1_forward.11} parent=11 // pred_region
        _
      $region52: #{rt1_forward.11} parent=11 // pred_fallthru
        _
      // Predicated region
      $region53: #{rt1_forward.11} parent=11 // pred_check
        %p456 = pneg %p280
      $region54: #{rt1_forward.11} parent=11 // pred_check_branch
        %458 = sbr.rel (%p456) target = $region56
      $region55: #{rt1_forward.11} parent=11 // pred_region
        _
      $region56: #{rt1_forward.11} parent=11 // pred_fallthru
        _
      // Predicated region
      $region57: #{rt1_forward.11} parent=11 // pred_check
        %p459 = pneg %p301
      $region58: #{rt1_forward.11} parent=11 // pred_check_branch
        %461 = sbr.rel (%p459) target = $region60
      $region59: #{rt1_forward.11} parent=11 // pred_region
        _
      $region60: #{rt1_forward.11} parent=11 // pred_fallthru
        _
      // Predicated region
      $region61: #{rt1_forward.11} parent=11 // pred_check
        %p462 = pneg %p322
      $region62: #{rt1_forward.11} parent=11 // pred_check_branch
        %464 = sbr.rel (%p462) target = $region64
      $region63: #{rt1_forward.11} parent=11 // pred_region
        _
      $region64: #{rt1_forward.11} parent=11 // pred_fallthru
        _
      // Predicated region
      $region65: #{rt1_forward.11} parent=11 // pred_check
        %p465 = pneg %p343
      $region66: #{rt1_forward.11} parent=11 // pred_check_branch
        %467 = sbr.rel (%p465) target = $region68
      $region67: #{rt1_forward.11} parent=11 // pred_region
        _
      $region68: #{rt1_forward.11} parent=11 // pred_fallthru
        _
      // Predicated region
      $region69: #{rt1_forward.11} parent=11 // pred_check
        %p468 = pneg %p364
      $region70: #{rt1_forward.11} parent=11 // pred_check_branch
        %470 = sbr.rel (%p468) target = $region72
      $region71: #{rt1_forward.11} parent=11 // pred_region
        _
      $region72: #{rt1_forward.11} parent=11 // pred_fallthru
        _
      // Predicated region
      $region73: #{rt1_forward.11} parent=11 // pred_check
        %p471 = pneg %p385
      $region74: #{rt1_forward.11} parent=11 // pred_check_branch
        %473 = sbr.rel (%p471) target = $region76
      $region75: #{rt1_forward.11} parent=11 // pred_region
        _
      $region76: #{rt1_forward.11} parent=11 // pred_fallthru
        _
    $region12: #{rt1_forward.11} parent=5 // pred_fallthru
      _
    %p474 = scmp.lt.s32.totalorder %s23, 2
    // Predicated region
    $region77: #{rt1_forward.11} parent=5 // pred_check
      %p475 = pneg %p474
    $region78: #{rt1_forward.11} parent=5 // pred_check_branch
      %477 = sbr.rel (%p475) target = $region80
    $region79: #{rt1_forward.11} parent=5 // pred_region
      // Predicated region
      $region81: #{rt1_forward.11} parent=79 // pred_check
        %p478 = pneg %p43
      $region82: #{rt1_forward.11} parent=79 // pred_check_branch
        %480 = sbr.rel (%p478) target = $region84
      $region83: #{rt1_forward.11} parent=79 // pred_region
        %p481 = scmp.lt.s32.totalorder %s23, 1
        %s482 = scalar_select %p481, %s23, 1
        %s483 = smul.addr %s482, 8
        %s484 = scalar_lea.vmem %s0, %s483
      $region84: #{rt1_forward.11} parent=79 // pred_fallthru
        _
    $region80: #{rt1_forward.11} parent=5 // pred_fallthru
      _
    %p485 = scmp.le.s32.totalorder 1, %s23
    %p486 = scmp.lt.s32.totalorder %s23, 3
    %p487 = pnand %p485, %p486
    %p488 = pneg %p487
    // Predicated region
    $region85: #{rt1_forward.11} parent=5 // pred_check
      _
    $region86: #{rt1_forward.11} parent=5 // pred_check_branch
      %490 = sbr.rel (%p487) target = $region88
    $region87: #{rt1_forward.11} parent=5 // pred_region
      %s491 = ssub.s32 %s23, 1
      %p492 = scmp.lt.s32.totalorder %s28, 1
      %s493 = scalar_select %p492, %s28, 1
      %s494 = smul.addr %s493, 8
      %s495 = scalar_lea.vmem %s0, %s494
      %p496 = pneg %p49
      %p497 = pneg %p46
      %p498 = pneg %p70
      %p499 = pneg %p67
      %p500 = pneg %p91
      %p501 = pneg %p88
      %p502 = pneg %p112
      %p503 = pneg %p109
      %p504 = pneg %p133
      %p505 = pneg %p130
      %p506 = pneg %p154
      %p507 = pneg %p151
      %p508 = pneg %p175
      %p509 = pneg %p172
      %p510 = pneg %p196
      %p511 = pneg %p193
      %p512 = pneg %p217
      %p513 = pneg %p214
      %p514 = pneg %p238
      %p515 = pneg %p235
      %p516 = pneg %p259
      %p517 = pneg %p256
      %p518 = pneg %p280
      %p519 = pneg %p277
      %p520 = pneg %p301
      %p521 = pneg %p298
      %p522 = pneg %p322
      %p523 = pneg %p319
      %p524 = pneg %p343
      %p525 = pneg %p340
      %p526 = pneg %p364
      %p527 = pneg %p361
      %p528 = pneg %p385
      %p529 = pneg %p382
      %p530 = pneg %p411
      %p531 = pneg %p408
      %p532 = scmp.lt.s32.totalorder %s28, 1
      %s533 = scalar_select %p532, %s28, 1
      %s534 = smul.addr %s533, 8
      %s535 = scalar_lea.vmem %s17, %s534
      %p536 = scmp.lt.s32.totalorder %s28, 1
      %s537 = scalar_select %p536, %s28, 1
      %s538 = smul.addr %s537, 8
      %s539 = scalar_lea.vmem %s0, %s538
      %p540 = scmp.lt.s32.totalorder %s28, 1
      %s541 = scalar_select %p540, %s28, 1
      %s542 = smul.addr %s541, 8
      %s543 = scalar_lea.vmem %s17, %s542
      %v545 = vld [vmem:[%s539] sm:$0xff]
      %v546 = vld [vmem:[%s1] sm:$0x1]
      %v547 = vld [vmem:[%s2] sm:$0x1]
      %vm548 = vcmask 261120
      %v549 = vsel %vm548, %v545, 0.0
      %550 = vadd.xlane.f32.xlu0 %v549
      %v551 = vpop.xlane.xlu0 %550
      %v552 = vrcp.pop 32.0
      %v553 = vmul.f32 32.0, %v552
      %v554 = vsub.f32 1.0, %v553
      %v555 = vmul.f32 %v552, %v554
      %v556 = vadd.f32 %v552, %v555
      %vm557 = vweird.f32 %v552
      %v558 = vsel %vm557, %v552, %v556
      %v559 = vmul.f32 %v551, %v558
      %v560 = vsub.f32 %v545, %v559
      %v561 = vmul.f32 %v560, %v560
      %v562 = vsel %vm548, %v561, 0.0
      %563 = vadd.xlane.f32.xlu0 %v562
      %v564 = vpop.xlane.xlu0 %563
      %v565 = vmul.f32 %v564, %v558
      %v566 = vadd.f32 %v565, 1e-05
      %v567 = vrsqrt.pop %v566
      %v568 = vmul.f32 %v567, %v566
      %v569 = vmul.f32 %v568, %v567
      %v570 = vmul.f32 0.5, %v569
      %v571 = vsub.f32 1.5, %v570
      %v572 = vmul.f32 %v567, %v571
      %vm573 = vweird.f32 %v566
      %vm574 = vweird.f32 %v567
      %vm575 = vmor %vm573, %vm574
      %v576 = vsel %vm575, %v567, %v572
      %v577 = vmul.f32 %v560, %v576
      %v579 = vperm.slane %v546, 0
      %v581 = vmul.f32 %v577, %v579
      %v583 = vperm.slane %v547, 0
      %v585 = vadd.f32 %v581, %v583
      %v586 = vld [vmem:[%s3] sm:$0xff]
      %v587 = vld [vmem:[%s3 + $0x8] sm:$0xff]
      %v588 = vld [vmem:[%s3 + $0x10] sm:$0xff]
      %v589 = vld [vmem:[%s3 + $0x18] sm:$0xff]
      %v590 = vpack.c.bf16 %v585, %v585
      %v591 = vpack.c.bf16 %v587, %v586
      %v592 = vpack.c.bf16 %v589, %v588
      %v593 = vld [vmem:[%s4] sm:$0x1]
      %v595 = vperm.slane %v593, 0
      %v598 = vsel %vm548, %v590, 0
      %600 = vmatpush.bf16.msra.mxu0 0
      %601 = vmatpush.bf16.msra.mxu0 0
      %602 = vmatpush.bf16.msra.mxu0 0
      %603 = vmatpush.bf16.msra.mxu0 0
      %604 = vmatpush.bf16.msra.mxu0 0
      %605 = vmatpush.bf16.msra.mxu0 0
      %606 = vmatpush.bf16.msra.mxu0 %v592
      %607 = vmatpush.bf16.msra.mxu0 %v591
      %608 = vmatmul.bf16.gmra.mxu0 %v598
      %v609 = vpop.f32.mrf.mxu0
      %v610 = vadd.f32 %v595, %v609
      %v611 = vpop.f32.mrf.mxu0
      %612 = vdwg.mxu0
      %v613 = vld [vmem:[%s5] sm:$0xff]
      %v614 = vld [vmem:[%s5 + $0x8] sm:$0xff]
      %v615 = vld [vmem:[%s5 + $0x10] sm:$0xff]
      %v616 = vld [vmem:[%s5 + $0x18] sm:$0xff]
      %v617 = vpack.c.bf16 %v614, %v613
      %v618 = vpack.c.bf16 %v616, %v615
      %v619 = vld [vmem:[%s6] sm:$0x1]
      %v621 = vperm.slane %v619, 0
      %623 = vmatpush.bf16.msra.mxu0 0
      %624 = vmatpush.bf16.msra.mxu0 0
      %625 = vmatpush.bf16.msra.mxu0 0
      %626 = vmatpush.bf16.msra.mxu0 0
      %627 = vmatpush.bf16.msra.mxu0 0
      %628 = vmatpush.bf16.msra.mxu0 0
      %629 = vmatpush.bf16.msra.mxu0 %v618
      %630 = vmatpush.bf16.msra.mxu0 %v617
      %631 = vmatmul.bf16.gmra.mxu0 %v598
      %v632 = vpop.f32.mrf.mxu0
      %v633 = vadd.f32 %v621, %v632
      %v634 = vpop.f32.mrf.mxu0
      %635 = vdwg.mxu0
      %v636 = vld [vmem:[%s7] sm:$0xff]
      %v637 = vld [vmem:[%s7 + $0x8] sm:$0xff]
      %v638 = vld [vmem:[%s7 + $0x10] sm:$0xff]
      %v639 = vld [vmem:[%s7 + $0x18] sm:$0xff]
      %v640 = vpack.c.bf16 %v637, %v636
      %v641 = vpack.c.bf16 %v639, %v638
      %v642 = vld [vmem:[%s8] sm:$0x1]
      %v644 = vperm.slane %v642, 0
      %646 = vmatpush.bf16.msra.mxu0 0
      %647 = vmatpush.bf16.msra.mxu0 0
      %648 = vmatpush.bf16.msra.mxu0 0
      %649 = vmatpush.bf16.msra.mxu0 0
      %650 = vmatpush.bf16.msra.mxu0 0
      %651 = vmatpush.bf16.msra.mxu0 0
      %652 = vmatpush.bf16.msra.mxu0 %v641
      %653 = vmatpush.bf16.msra.mxu0 %v640
      %654 = vmatmul.bf16.gmra.mxu0 %v598
      %v655 = vpop.f32.mrf.mxu0
      %v656 = vadd.f32 %v644, %v655
      %v657 = vpop.f32.mrf.mxu0
      %658 = vdwg.mxu0
      %v659 = vpack.c.bf16 %v610, %v610
      %v660 = vpack.c.bf16 %v633, %v633
      %vm661 = vcmask 130048
      %v663 = vsel %vm661, %v659, 0
      %v666 = vsel %vm661, %v660, 0
      %668 = vmatpush.bf16.xpose.msra.mxu0 0
      %669 = vmatpush.bf16.xpose.msra.mxu0 0
      %670 = vmatpush.bf16.xpose.msra.mxu0 0
      %671 = vmatpush.bf16.xpose.msra.mxu0 0
      %672 = vmatpush.bf16.xpose.msra.mxu0 0
      %673 = vmatpush.bf16.xpose.msra.mxu0 0
      %674 = vmatpush.bf16.xpose.msra.mxu0 0
      %675 = vmatpush.bf16.xpose.msra.mxu0 %v666
      %676 = vmatmul.bf16.gmra.mxu0 %v663
      %v677 = vpop.f32.mrf.mxu0
      %v678 = vadd.f32 0.0, %v677
      %v679 = vpop.f32.mrf.mxu0
      %680 = vdwg.mxu0
      %v681 = vmul.f32 %v678, 0.25
      %vm682 = vcmask 64512
      %v683 = vsel %vm682, %v681, -inf
      %684 = vmax.xlane.f32.xlu0 %v683
      %v685 = vpop.xlane.xlu0 %684
      %v686 = vsub.f32 %v681, %v685
      %v687 = vmul.f32 %v686, 1.442695
      %v688 = vpow.pop %v687
      %v689 = vsel %vm682, %v688, 0.0
      %690 = vadd.xlane.f32.xlu0 %v689
      %v691 = vpop.xlane.xlu0 %690
      %v692 = vrcp.pop %v691
      %v693 = vmul.f32 %v688, %v692
      %v694 = vpack.c.bf16 %v693, %v693
      %v695 = vpack.c.bf16 %v656, %v656
      %v697 = vsel %vm682, %v694, 0
      %vm699 = vcmask 1043456
      %v701 = vsel %vm699, %v695, 0
      %703 = vmatpush.bf16.msra.mxu0 0
      %704 = vmatpush.bf16.msra.mxu0 0
      %705 = vmatpush.bf16.msra.mxu0 0
      %706 = vmatpush.bf16.msra.mxu0 0
      %707 = vmatpush.bf16.msra.mxu0 0
      %708 = vmatpush.bf16.msra.mxu0 0
      %709 = vmatpush.bf16.msra.mxu0 0
      %710 = vmatpush.bf16.msra.mxu0 %v701
      %711 = vmatmul.bf16.gmra.mxu0 %v697
      %v712 = vpop.f32.mrf.mxu0
      %v713 = vadd.f32 0.0, %v712
      %v714 = vpop.f32.mrf.mxu0
      %715 = vdwg.mxu0
      %v716 = vld [vmem:[%s9] sm:$0xff]
      %v717 = vld [vmem:[%s9 + $0x8] sm:$0xff]
      %v718 = vpack.c.bf16 %v713, %v713
      %v719 = vpack.c.bf16 %v717, %v716
      %s720 = scalar_lea.vmem %s3, 32
      %v721 = vld [vmem:[%s720] sm:$0xff]
      %v722 = vld [vmem:[%s720 + $0x8] sm:$0xff]
      %v723 = vld [vmem:[%s720 + $0x10] sm:$0xff]
      %v724 = vld [vmem:[%s720 + $0x18] sm:$0xff]
      %v725 = vpack.c.bf16 %v722, %v721
      %v726 = vpack.c.bf16 %v724, %v723
      %s727 = scalar_lea.vmem %s4, 1
      %v728 = vld [vmem:[%s727] sm:$0x1]
      %v730 = vperm.slane %v728, 0
      %732 = vmatpush.bf16.msra.mxu0 0
      %733 = vmatpush.bf16.msra.mxu0 0
      %734 = vmatpush.bf16.msra.mxu0 0
      %735 = vmatpush.bf16.msra.mxu0 0
      %736 = vmatpush.bf16.msra.mxu0 0
      %737 = vmatpush.bf16.msra.mxu0 0
      %738 = vmatpush.bf16.msra.mxu0 %v726
      %739 = vmatpush.bf16.msra.mxu0 %v725
      %740 = vmatmul.bf16.gmra.mxu0 %v598
      %v741 = vpop.f32.mrf.mxu0
      %v742 = vadd.f32 %v730, %v741
      %v743 = vpop.f32.mrf.mxu0
      %744 = vdwg.mxu0
      %s745 = scalar_lea.vmem %s5, 32
      %v746 = vld [vmem:[%s745] sm:$0xff]
      %v747 = vld [vmem:[%s745 + $0x8] sm:$0xff]
      %v748 = vld [vmem:[%s745 + $0x10] sm:$0xff]
      %v749 = vld [vmem:[%s745 + $0x18] sm:$0xff]
      %v750 = vpack.c.bf16 %v747, %v746
      %v751 = vpack.c.bf16 %v749, %v748
      %s752 = scalar_lea.vmem %s6, 1
      %v753 = vld [vmem:[%s752] sm:$0x1]
      %v755 = vperm.slane %v753, 0
      %757 = vmatpush.bf16.msra.mxu0 0
      %758 = vmatpush.bf16.msra.mxu0 0
      %759 = vmatpush.bf16.msra.mxu0 0
      %760 = vmatpush.bf16.msra.mxu0 0
      %761 = vmatpush.bf16.msra.mxu0 0
      %762 = vmatpush.bf16.msra.mxu0 0
      %763 = vmatpush.bf16.msra.mxu0 %v751
      %764 = vmatpush.bf16.msra.mxu0 %v750
      %765 = vmatmul.bf16.gmra.mxu0 %v598
      %v766 = vpop.f32.mrf.mxu0
      %v767 = vadd.f32 %v755, %v766
      %v768 = vpop.f32.mrf.mxu0
      %769 = vdwg.mxu0
      %s770 = scalar_lea.vmem %s7, 32
      %v771 = vld [vmem:[%s770] sm:$0xff]
      %v772 = vld [vmem:[%s770 + $0x8] sm:$0xff]
      %v773 = vld [vmem:[%s770 + $0x10] sm:$0xff]
      %v774 = vld [vmem:[%s770 + $0x18] sm:$0xff]
      %v775 = vpack.c.bf16 %v772, %v771
      %v776 = vpack.c.bf16 %v774, %v773
      %s777 = scalar_lea.vmem %s8, 1
      %v778 = vld [vmem:[%s777] sm:$0x1]
      %v780 = vperm.slane %v778, 0
      %782 = vmatpush.bf16.msra.mxu0 0
      %783 = vmatpush.bf16.msra.mxu0 0
      %784 = vmatpush.bf16.msra.mxu0 0
      %785 = vmatpush.bf16.msra.mxu0 0
      %786 = vmatpush.bf16.msra.mxu0 0
      %787 = vmatpush.bf16.msra.mxu0 0
      %788 = vmatpush.bf16.msra.mxu0 %v776
      %789 = vmatpush.bf16.msra.mxu0 %v775
      %790 = vmatmul.bf16.gmra.mxu0 %v598
      %v791 = vpop.f32.mrf.mxu0
      %v792 = vadd.f32 %v780, %v791
      %v793 = vpop.f32.mrf.mxu0
      %794 = vdwg.mxu0
      %v795 = vpack.c.bf16 %v742, %v742
      %v796 = vpack.c.bf16 %v767, %v767
      %v798 = vsel %vm661, %v795, 0
      %v801 = vsel %vm661, %v796, 0
      %803 = vmatpush.bf16.xpose.msra.mxu0 0
      %804 = vmatpush.bf16.xpose.msra.mxu0 0
      %805 = vmatpush.bf16.xpose.msra.mxu0 0
      %806 = vmatpush.bf16.xpose.msra.mxu0 0
      %807 = vmatpush.bf16.xpose.msra.mxu0 0
      %808 = vmatpush.bf16.xpose.msra.mxu0 0
      %809 = vmatpush.bf16.xpose.msra.mxu0 0
      %810 = vmatpush.bf16.xpose.msra.mxu0 %v801
      %811 = vmatmul.bf16.gmra.mxu0 %v798
      %v812 = vpop.f32.mrf.mxu0
      %v813 = vadd.f32 0.0, %v812
      %v814 = vpop.f32.mrf.mxu0
      %815 = vdwg.mxu0
      %v816 = vmul.f32 %v813, 0.25
      %v817 = vsel %vm682, %v816, -inf
      %818 = vmax.xlane.f32.xlu0 %v817
      %v819 = vpop.xlane.xlu0 %818
      %v820 = vsub.f32 %v816, %v819
      %v821 = vmul.f32 %v820, 1.442695
      %v822 = vpow.pop %v821
      %v823 = vsel %vm682, %v822, 0.0
      %824 = vadd.xlane.f32.xlu0 %v823
      %v825 = vpop.xlane.xlu0 %824
      %v826 = vrcp.pop %v825
      %v827 = vmul.f32 %v822, %v826
      %v828 = vpack.c.bf16 %v827, %v827
      %v829 = vpack.c.bf16 %v792, %v792
      %v831 = vsel %vm682, %v828, 0
      %v834 = vsel %vm699, %v829, 0
      %836 = vmatpush.bf16.msra.mxu0 0
      %837 = vmatpush.bf16.msra.mxu0 0
      %838 = vmatpush.bf16.msra.mxu0 0
      %839 = vmatpush.bf16.msra.mxu0 0
      %840 = vmatpush.bf16.msra.mxu0 0
      %841 = vmatpush.bf16.msra.mxu0 0
      %842 = vmatpush.bf16.msra.mxu0 0
      %843 = vmatpush.bf16.msra.mxu0 %v834
      %844 = vmatmul.bf16.gmra.mxu0 %v831
      %v845 = vpop.f32.mrf.mxu0
      %v846 = vadd.f32 0.0, %v845
      %v847 = vpop.f32.mrf.mxu0
      %848 = vdwg.mxu0
      %s849 = scalar_lea.vmem %s9, 16
      %v850 = vld [vmem:[%s849] sm:$0xff]
      %v851 = vld [vmem:[%s849 + $0x8] sm:$0xff]
      %v852 = vpack.c.bf16 %v846, %v846
      %v853 = vpack.c.bf16 %v851, %v850
      %v855 = vsel %vm661, %v852, 0
      %857 = vmatpush.bf16.msra.mxu0 0
      %858 = vmatpush.bf16.msra.mxu0 0
      %859 = vmatpush.bf16.msra.mxu0 0
      %860 = vmatpush.bf16.msra.mxu0 0
      %861 = vmatpush.bf16.msra.mxu0 0
      %862 = vmatpush.bf16.msra.mxu0 0
      %863 = vmatpush.bf16.msra.mxu0 0
      %864 = vmatpush.bf16.msra.mxu0 %v853
      %865 = vmatmul.bf16.gmra.mxu0 %v855
      %v866 = vpop.f32.mrf.mxu0
      %v867 = vadd.f32 0.0, %v866
      %v868 = vpop.f32.mrf.mxu0
      %869 = vdwg.mxu0
      %v871 = vsel %vm661, %v718, 0
      %873 = vmatpush.bf16.msra.mxu0 0
      %874 = vmatpush.bf16.msra.mxu0 0
      %875 = vmatpush.bf16.msra.mxu0 0
      %876 = vmatpush.bf16.msra.mxu0 0
      %877 = vmatpush.bf16.msra.mxu0 0
      %878 = vmatpush.bf16.msra.mxu0 0
      %879 = vmatpush.bf16.msra.mxu0 0
      %880 = vmatpush.bf16.msra.mxu0 %v719
      %881 = vmatmul.bf16.gmra.mxu0 %v871
      %v882 = vpop.f32.mrf.mxu0
      %v883 = vadd.f32 %v867, %v882
      %v884 = vpop.f32.mrf.mxu0
      %885 = vdwg.mxu0
      %v886 = vadd.f32 %v545, %v883
      %v887 = vld [vmem:[%s10] sm:$0x1]
      %v889 = vperm.slane %v887, 0
      %v891 = vadd.f32 %v886, %v889
      %v892 = vld [vmem:[%s11] sm:$0x1]
      %v893 = vld [vmem:[%s12] sm:$0x1]
      %v894 = vsel %vm548, %v891, 0.0
      %895 = vadd.xlane.f32.xlu0 %v894
      %v896 = vpop.xlane.xlu0 %895
      %v897 = vmul.f32 %v896, %v558
      %v898 = vsub.f32 %v891, %v897
      %v899 = vmul.f32 %v898, %v898
      %v900 = vsel %vm548, %v899, 0.0
      %901 = vadd.xlane.f32.xlu0 %v900
      %v902 = vpop.xlane.xlu0 %901
      %v903 = vmul.f32 %v902, %v558
      %v904 = vadd.f32 %v903, 1e-05
      %v905 = vrsqrt.pop %v904
      %v906 = vmul.f32 %v905, %v904
      %v907 = vmul.f32 %v906, %v905
      %v908 = vmul.f32 0.5, %v907
      %v909 = vsub.f32 1.5, %v908
      %v910 = vmul.f32 %v905, %v909
      %vm911 = vweird.f32 %v904
      %vm912 = vweird.f32 %v905
      %vm913 = vmor %vm911, %vm912
      %v914 = vsel %vm913, %v905, %v910
      %v915 = vmul.f32 %v898, %v914
      %v917 = vperm.slane %v892, 0
      %v919 = vmul.f32 %v915, %v917
      %v921 = vperm.slane %v893, 0
      %v923 = vadd.f32 %v919, %v921
      %v924 = vld [vmem:[%s13] sm:$0xff]
      %v925 = vld [vmem:[%s13 + $0x8] sm:$0xff]
      %v926 = vld [vmem:[%s13 + $0x10] sm:$0xff]
      %v927 = vld [vmem:[%s13 + $0x18] sm:$0xff]
      %v928 = vpack.c.bf16 %v923, %v923
      %v929 = vpack.c.bf16 %v925, %v924
      %v930 = vpack.c.bf16 %v927, %v926
      %v931 = vld [vmem:[%s14] sm:$0x1]
      %v933 = vperm.slane %v931, 0
      %v936 = vsel %vm548, %v928, 0
      %938 = vmatpush.bf16.msra.mxu0 0
      %939 = vmatpush.bf16.msra.mxu0 0
      %940 = vmatpush.bf16.msra.mxu0 0
      %941 = vmatpush.bf16.msra.mxu0 0
      %942 = vmatpush.bf16.msra.mxu0 0
      %943 = vmatpush.bf16.msra.mxu0 0
      %944 = vmatpush.bf16.msra.mxu0 %v930
      %945 = vmatpush.bf16.msra.mxu0 %v929
      %946 = vmatmul.bf16.gmra.mxu0 %v936
      %v947 = vpop.f32.mrf.mxu0
      %v948 = vadd.f32 %v933, %v947
      %v949 = vpop.f32.mrf.mxu0
      %950 = vdwg.mxu0
      %v951 = vmul.f32 %v948, %v948
      %v952 = vmul.f32 %v948, %v951
      %v953 = vmul.f32 %v952, 0.044715
      %v954 = vadd.f32 %v948, %v953
      %v955 = vmul.f32 %v954, 0.7978846
      %v956 = vtanh.pop %v955
      %v957 = vadd.f32 %v956, 1.0
      %v958 = vmul.f32 %v957, 0.5
      %v959 = vmul.f32 %v948, %v958
      %v960 = vld [vmem:[%s15] sm:$0xff]
      %v961 = vld [vmem:[%s15 + $0x8] sm:$0xff]
      %v962 = vld [vmem:[%s15 + $0x10] sm:$0xff]
      %v963 = vld [vmem:[%s15 + $0x18] sm:$0xff]
      %v964 = vld [vmem:[%s15 + $0x20] sm:$0xff]
      %v965 = vld [vmem:[%s15 + $0x28] sm:$0xff]
      %v966 = vld [vmem:[%s15 + $0x30] sm:$0xff]
      %v967 = vld [vmem:[%s15 + $0x38] sm:$0xff]
      %v968 = vpack.c.bf16 %v959, %v959
      %v969 = vpack.c.bf16 %v961, %v960
      %v970 = vpack.c.bf16 %v963, %v962
      %v971 = vpack.c.bf16 %v965, %v964
      %v972 = vpack.c.bf16 %v967, %v966
      %vm973 = vcmask 523264
      %v975 = vsel %vm973, %v968, 0
      %977 = vmatpush.bf16.msra.mxu0 0
      %978 = vmatpush.bf16.msra.mxu0 0
      %979 = vmatpush.bf16.msra.mxu0 0
      %980 = vmatpush.bf16.msra.mxu0 0
      %981 = vmatpush.bf16.msra.mxu0 %v972
      %982 = vmatpush.bf16.msra.mxu0 %v971
      %983 = vmatpush.bf16.msra.mxu0 %v970
      %984 = vmatpush.bf16.msra.mxu0 %v969
      %985 = vmatmul.bf16.gmra.mxu0 %v975
      %v986 = vpop.f32.mrf.mxu0
      %v987 = vadd.f32 0.0, %v986
      %v988 = vpop.f32.mrf.mxu0
      %989 = vdwg.mxu0
      %v990 = vadd.f32 %v891, %v987
      %v991 = vld [vmem:[%s16] sm:$0x1]
      %v993 = vperm.slane %v991, 0
      %v995 = vadd.f32 %v990, %v993
      %996 = vst.msk [vmem:[%s543] sm:$0xff] %vm548, %v995
      %p997 = scmp.lt.s32.totalorder %s28, 1
      %s998 = scalar_select %p997, %s28, 1
      %s999 = smul.addr %s998, 8
      %s1000 = scalar_lea.vmem %s17, %s999
      // Predicated region
      $region89: #{rt1_forward.11} parent=87 // pred_check
        %p1001 = pneg %p408
      $region90: #{rt1_forward.11} parent=87 // pred_check_branch
        %1003 = sbr.rel (%p1001) target = $region92
      $region91: #{rt1_forward.11} parent=87 // pred_region
        _
      $region92: #{rt1_forward.11} parent=87 // pred_fallthru
        _
    $region88: #{rt1_forward.11} parent=5 // pred_fallthru
      _
    %p1004 = scmp.le.s32.totalorder 2, %s23
    // Predicated region
    $region93: #{rt1_forward.11} parent=5 // pred_check
      %p1005 = pneg %p1004
    $region94: #{rt1_forward.11} parent=5 // pred_check_branch
      %1007 = sbr.rel (%p1005) target = $region96
    $region95: #{rt1_forward.11} parent=5 // pred_region
      %s1008 = ssub.s32 %s23, 2
      // Predicated region
      $region97: #{rt1_forward.11} parent=95 // pred_check
        %p1009 = pneg %p414
      $region98: #{rt1_forward.11} parent=95 // pred_check_branch
        %1011 = sbr.rel (%p1009) target = $region100
      $region99: #{rt1_forward.11} parent=95 // pred_region
        %p1012 = scmp.lt.s32.totalorder %s29, 1
        %s1013 = scalar_select %p1012, %s29, 1
        %s1014 = smul.addr %s1013, 8
        %s1015 = scalar_lea.vmem %s17, %s1014
      $region100: #{rt1_forward.11} parent=95 // pred_fallthru
        _
    $region96: #{rt1_forward.11} parent=5 // pred_fallthru
      _
  $region6: #{rt1_forward.11} parent=0 // loop_footer
    %s27 = sadd.s32 1, %s23
  $region7: #{rt1_forward.11} parent=0 // loop_footer_branch
    %22 = sbr.rel target = $region3
  $region8: #{rt1_forward.11} parent=0 // loop_exit
    _

// kernel: rt1_forward.13
$region0: #{rt1_forward.13}
  #allocation0 [shape = 'u32[]', space=smem, size = 0x4, offset = 0x4, fixed_abs, tag = 'smem constant byte address 0x4 - core index']
  #allocation1 [shape = 'u32[72,128]{1,0:T(1,128)}', space=vmem, size = 0x9000, scoped, tag = 'internal scratch']
  %s0 = inlined_call_operand.vmem [shape: f32[16,32], index: 0, kind: input, shape index: {}]
  %s1 = inlined_call_operand.vmem [shape: f32[1,32], index: 1, kind: input, shape index: {}]
  %s2 = inlined_call_operand.vmem [shape: f32[1,32], index: 2, kind: input, shape index: {}]
  %s3 = inlined_call_operand.vmem [shape: f32[32,128], index: 3, kind: input, shape index: {}]
  %s4 = inlined_call_operand.vmem [shape: f32[1,128], index: 4, kind: input, shape index: {}]
  %s5 = inlined_call_operand.vmem [shape: f32[16,128], index: 5, kind: output, shape index: {}]
  %s6 = sld [smem:[#allocation0]]
  $region30: #{rt1_forward.13} parent=0
    _
  %s8 = ssub.s32 1, %s6
  %s9 = scalar_select 0, %s8, %s6
  // Predicated region
  $region2: #{rt1_forward.13} parent=0 // pred_check
    _
  $region3: #{rt1_forward.13} parent=0 // pred_check_branch
    %11 = sbr.rel (0) target = $region5
  $region4: #{rt1_forward.13} parent=0 // pred_region
    _
  $region5: #{rt1_forward.13} parent=0 // pred_fallthru
    _
  // Predicated region
  $region6: #{rt1_forward.13} parent=0 // pred_check
    _
  $region7: #{rt1_forward.13} parent=0 // pred_check_branch
    %13 = sbr.rel (0) target = $region9
  $region8: #{rt1_forward.13} parent=0 // pred_region
    _
  $region9: #{rt1_forward.13} parent=0 // pred_fallthru
    _
  // Predicated region
  $region10: #{rt1_forward.13} parent=0 // pred_check
    _
  $region11: #{rt1_forward.13} parent=0 // pred_check_branch
    %15 = sbr.rel (0) target = $region13
  $region12: #{rt1_forward.13} parent=0 // pred_region
    _
  $region13: #{rt1_forward.13} parent=0 // pred_fallthru
    _
  // Predicated region
  $region14: #{rt1_forward.13} parent=0 // pred_check
    _
  $region15: #{rt1_forward.13} parent=0 // pred_check_branch
    %17 = sbr.rel (0) target = $region17
  $region16: #{rt1_forward.13} parent=0 // pred_region
    _
  $region17: #{rt1_forward.13} parent=0 // pred_fallthru
    _
  // Predicated region
  $region18: #{rt1_forward.13} parent=0 // pred_check
    _
  $region19: #{rt1_forward.13} parent=0 // pred_check_branch
    %19 = sbr.rel (0) target = $region21
  $region20: #{rt1_forward.13} parent=0 // pred_region
    _
  $region21: #{rt1_forward.13} parent=0 // pred_fallthru
    _
  %v21 = vld [vmem:[%s0] sm:$0xff]
  %v22 = vld [vmem:[%s0 + $0x8] sm:$0xff]
  %v23 = vld [vmem:[%s1] sm:$0x1]
  %v24 = vld [vmem:[%s2] sm:$0x1]
  %vm25 = vcmask 261120
  %v26 = vsel %vm25, %v21, 0.0
  %27 = vadd.xlane.f32.xlu0 %v26
  %v28 = vpop.xlane.xlu0 %27
  %v29 = vsel %vm25, %v22, 0.0
  %30 = vadd.xlane.f32.xlu0 %v29
  %v31 = vpop.xlane.xlu0 %30
  %v32 = vrcp.pop 32.0
  %v33 = vmul.f32 32.0, %v32
  %v34 = vsub.f32 1.0, %v33
  %v35 = vmul.f32 %v32, %v34
  %v36 = vadd.f32 %v32, %v35
  %vm37 = vweird.f32 %v32
  %v38 = vsel %vm37, %v32, %v36
  %v39 = vmul.f32 %v28, %v38
  %v40 = vmul.f32 %v31, %v38
  %v41 = vsub.f32 %v21, %v39
  %v42 = vsub.f32 %v22, %v40
  %v43 = vmul.f32 %v41, %v41
  %v44 = vmul.f32 %v42, %v42
  %v45 = vsel %vm25, %v43, 0.0
  %46 = vadd.xlane.f32.xlu0 %v45
  %v47 = vpop.xlane.xlu0 %46
  %v48 = vsel %vm25, %v44, 0.0
  %49 = vadd.xlane.f32.xlu0 %v48
  %v50 = vpop.xlane.xlu0 %49
  %v51 = vmul.f32 %v47, %v38
  %v52 = vmul.f32 %v50, %v38
  %v53 = vadd.f32 %v51, 1e-05
  %v54 = vadd.f32 %v52, 1e-05
  %v55 = vrsqrt.pop %v53
  %v56 = vmul.f32 %v55, %v53
  %v57 = vmul.f32 %v56, %v55
  %v58 = vmul.f32 0.5, %v57
  %v59 = vsub.f32 1.5, %v58
  %v60 = vmul.f32 %v55, %v59
  %vm61 = vweird.f32 %v53
  %vm62 = vweird.f32 %v55
  %vm63 = vmor %vm61, %vm62
  %v64 = vsel %vm63, %v55, %v60
  %v65 = vrsqrt.pop %v54
  %v66 = vmul.f32 %v65, %v54
  %v67 = vmul.f32 %v66, %v65
  %v68 = vmul.f32 0.5, %v67
  %v69 = vsub.f32 1.5, %v68
  %v70 = vmul.f32 %v65, %v69
  %vm71 = vweird.f32 %v54
  %vm72 = vweird.f32 %v65
  %vm73 = vmor %vm71, %vm72
  %v74 = vsel %vm73, %v65, %v70
  %v75 = vmul.f32 %v41, %v64
  %v76 = vmul.f32 %v42, %v74
  %v78 = vperm.slane %v23, 0
  %v80 = vmul.f32 %v75, %v78
  %v81 = vmul.f32 %v76, %v78
  %v83 = vperm.slane %v24, 0
  %v85 = vadd.f32 %v80, %v83
  %v86 = vadd.f32 %v81, %v83
  %v87 = vld [vmem:[%s3] sm:$0xff]
  %v88 = vld [vmem:[%s3 + $0x8] sm:$0xff]
  %v89 = vld [vmem:[%s3 + $0x10] sm:$0xff]
  %v90 = vld [vmem:[%s3 + $0x18] sm:$0xff]
  %v91 = vpack.c.bf16 %v86, %v85
  %v92 = vpack.c.bf16 %v88, %v87
  %v93 = vpack.c.bf16 %v90, %v89
  %v94 = vld [vmem:[%s4] sm:$0x1]
  %v96 = vperm.slane %v94, 0
  %v99 = vsel %vm25, %v91, 0
  %101 = vmatpush.bf16.msra.mxu0 0
  %102 = vmatpush.bf16.msra.mxu0 0
  %103 = vmatpush.bf16.msra.mxu0 0
  %104 = vmatpush.bf16.msra.mxu0 0
  %105 = vmatpush.bf16.msra.mxu0 0
  %106 = vmatpush.bf16.msra.mxu0 0
  %107 = vmatpush.bf16.msra.mxu0 %v93
  %108 = vmatpush.bf16.msra.mxu0 %v92
  %109 = vmatmul.bf16.gmra.mxu0 %v99
  %v110 = vpop.f32.mrf.mxu0
  %v111 = vadd.f32 %v96, %v110
  %v112 = vpop.f32.mrf.mxu0
  %v113 = vadd.f32 %v96, %v112
  %114 = vdwg.mxu0
  %115 = vst [vmem:[%s5] sm:$0xff] %v111
  %116 = vst [vmem:[%s5 + $0x8] sm:$0xff] %v113
  // Predicated region
  $region22: #{rt1_forward.13} parent=0 // pred_check
    _
  $region23: #{rt1_forward.13} parent=0 // pred_check_branch
    %118 = sbr.rel (0) target = $region25
  $region24: #{rt1_forward.13} parent=0 // pred_region
    _
  $region25: #{rt1_forward.13} parent=0 // pred_fallthru
    _
  // Predicated region
  $region26: #{rt1_forward.13} parent=0 // pred_check
    _
  $region27: #{rt1_forward.13} parent=0 // pred_check_branch
    %120 = sbr.rel (0) target = $region29
  $region28: #{rt1_forward.13} parent=0 // pred_region
    _
  $region29: #{rt1_forward.13} parent=0 // pred_fallthru
    _

</llo_original>
